<compile_context>
chip_gen: v7x
topology: tpu7x:2x2x1
jax: 0.10.0
libtpu: 0.0.40
codegen_flags: <defaults>
</compile_context>

<pallas_src>
import functools

import jax
import jax.numpy as jnp
import numpy as np
from jax.experimental import pallas as pl
from jax.experimental.pallas import tpu as pltpu

EPS = 1e-5


# ----------------------------- in-kernel helpers -----------------------------
def _layer_norm(x, weight=None, bias=None, eps=EPS):
    mu = jnp.mean(x, axis=-1, keepdims=True)
    xc = x - mu
    var = jnp.mean(xc * xc, axis=-1, keepdims=True)
    y = xc * jax.lax.rsqrt(var + eps)
    if weight is not None:
        y = y * weight
    if bias is not None:
        y = y + bias
    return y


def _dot(x, w):
    return jnp.dot(x, w, preferred_element_type=jnp.float32)


def _adaln_fused(a, s, norm_w, fused_w, scale_b, dim):
    # AdaLN with fused [s_scale | s_bias] projection (one MXU matmul).
    a_n = _layer_norm(a)                              # no affine
    s_n = _layer_norm(s, weight=norm_w)               # weight only
    proj = _dot(s_n.astype(jnp.bfloat16), fused_w)    # (N, 2D) f32
    s_scale = jax.nn.sigmoid(proj[:, :dim] + scale_b)
    s_bias = proj[:, dim:]
    return a_n * s_scale + s_bias


# --------------------------- pair-bias pre-kernel -----------------------------
def pair_bias_kernel(z_ref, zn_w_ref, zn_b_ref, zw_ref, out_ref):
    # z block: (1, tq, tk, Dp)  ->  bias block: (1, tq, tk, H)
    z = z_ref[0].astype(jnp.float32)                          # (tq, tk, Dp)
    z = _layer_norm(z, weight=zn_w_ref[...], bias=zn_b_ref[...])
    tq, tk, dp = z.shape
    z_flat = z.reshape(tq * tk, dp).astype(jnp.bfloat16)      # safe reshape
    res = _dot(z_flat, zw_ref[...])                           # (tq*tk, H) f32
    out_ref[0] = res.reshape(tq, tk, -1).astype(out_ref.dtype)


# ------------------------------- layer kernel ---------------------------------
def diffusion_layer_kernel(
    a_ref, s_ref, bias_ref,
    # AdaLN (layer level)
    ad_nw, ad_w, ad_sb,
    # AttentionPairBias (fused qkvg) + output projection
    qkvg_w, q_b, o_w,
    # fused sigmoid gates on raw s: [attn residual gate | transition gate]
    sgate_w, sgate_b,
    # ConditionedTransitionBlock
    t_ad_nw, t_ad_w, t_ad_sb, t_w, b2a_w,
    out_ref, o_scratch,
    *, n_heads, head_dim, dim, hidden):
    a = a_ref[0].astype(jnp.float32)        # (N, D)
    s = s_ref[0].astype(jnp.float32)        # (N, D)

    # fused s gates (raw s)
    sg = jax.nn.sigmoid(_dot(s.astype(jnp.bfloat16), sgate_w[...]) + sgate_b[...])
    s_o = sg[:, :dim]
    s_t = sg[:, dim:]

    # ---------------- AdaLN ----------------
    b = _adaln_fused(a, s, ad_nw[...], ad_w[...], ad_sb[...], dim)

    # ---------------- AttentionPairBias (diffusion branch) ----------------
    qkvg = _dot(b.astype(jnp.bfloat16), qkvg_w[...])          # (N, 4D) f32
    q = qkvg[:, :dim] + q_b[...]
    k = qkvg[:, dim:2 * dim]
    v = qkvg[:, 2 * dim:3 * dim]
    g = jax.nn.sigmoid(qkvg[:, 3 * dim:])

    scale = head_dim ** -0.5
    q_bf = (q * scale).astype(jnp.bfloat16)
    k_bf = k.astype(jnp.bfloat16)
    v_bf = v.astype(jnp.bfloat16)

    for h in range(n_heads):
        sl = slice(h * head_dim, (h + 1) * head_dim)
        sc = jax.lax.dot_general(
            q_bf[:, sl], k_bf[:, sl], (((1,), (1,)), ((), ())),
            preferred_element_type=jnp.float32)               # (N, N) f32
        sc = sc + bias_ref[0, h].astype(jnp.float32)          # precomputed bias
        sc = sc - jnp.max(sc, axis=-1, keepdims=True)
        p = jnp.exp(sc)
        p = p * pl.reciprocal(jnp.sum(p, axis=-1, keepdims=True), approx=True)
        # direct scratch write at a static lane offset (no concatenate)
        o_scratch[:, sl] = jnp.dot(p.astype(jnp.bfloat16), v_bf[:, sl],
                                   preferred_element_type=jnp.float32)

    o = o_scratch[...] * g
    attn = _dot(o.astype(jnp.bfloat16), o_w[...])             # (N, D)
    a = a + s_o * attn

    # ---------------- ConditionedTransitionBlock ----------------
    at = _adaln_fused(a, s, t_ad_nw[...], t_ad_w[...], t_ad_sb[...], dim)
    tt = _dot(at.astype(jnp.bfloat16), t_w[...])              # (N, 3*hidden)
    x1 = tt[:, :hidden]
    gates = tt[:, hidden:2 * hidden]
    ab = tt[:, 2 * hidden:]
    bb = jax.nn.silu(gates) * x1 * ab
    a = a + s_t * _dot(bb.astype(jnp.bfloat16), b2a_w[...])

    out_ref[0] = a.astype(out_ref.dtype)


# --------------------------------- wrapper -----------------------------------
def _pick_tile(n):
    for c in (256, 128, 64, 32, 16, 8):
        if n % c == 0:
            return c
    return n


def _full_spec(shape):
    zeros = (0,) * len(shape)
    return pl.BlockSpec(tuple(shape), lambda *_, z=zeros: z)


def _pair_bias(z_bf, zn_w, zn_b, zw_t, n_heads):
    """bias[b, h, q, k] = sum_d LN(z)[b,q,k,d] * W_z[h,d]  (bf16 in HBM)."""
    B, N, _, Dp = z_bf.shape
    H = n_heads
    tq = _pick_tile(N)
    tk = _pick_tile(N)
    bias = pl.pallas_call(
        pair_bias_kernel,
        out_shape=jax.ShapeDtypeStruct((B, N, N, H), jnp.bfloat16),
        grid_spec=pltpu.PrefetchScalarGridSpec(
            num_scalar_prefetch=0,
            grid=(B, N // tq, N // tk),
            in_specs=[
                pl.BlockSpec((1, tq, tk, Dp), lambda b, i, j: (b, i, j, 0)),
                _full_spec(zn_w.shape),
                _full_spec(zn_b.shape),
                _full_spec(zw_t.shape),
            ],
            out_specs=pl.BlockSpec((1, tq, tk, H), lambda b, i, j: (b, i, j, 0)),
        ),
        compiler_params=pltpu.CompilerParams(
            dimension_semantics=("parallel", "parallel", "parallel"),
            vmem_limit_bytes=64 * 1024 * 1024),
        cost_estimate=pl.CostEstimate(
            flops=int(2 * B * N * N * Dp * H + 6 * B * N * N * Dp),
            transcendentals=int(B * N * N),
            bytes_accessed=int(z_bf.size * 2 + B * N * N * H * 2)),
    )(z_bf, zn_w, zn_b, zw_t)
    # layout for the attention kernel: (B, H, N, N) so per-head slices are
    # leading-dim indexed (lane-dense N on lanes).  Plain XLA transpose.
    return jnp.transpose(bias, (0, 3, 1, 2))


def _layer_call(a, s, bias, layer_w, n_heads, head_dim, dim, hidden):
    B, N, D = a.shape
    H = n_heads
    kernel = functools.partial(diffusion_layer_kernel, n_heads=n_heads,
                               head_dim=head_dim, dim=dim, hidden=hidden)
    a_spec = pl.BlockSpec((1, N, D), lambda b: (b, 0, 0))
    bias_spec = pl.BlockSpec((1, H, N, N), lambda b: (b, 0, 0, 0))
    weight_specs = [_full_spec(w.shape) for w in layer_w]
    flops = int(B * (46 * N * D * D + 4 * N * N * D))
    return pl.pallas_call(
        kernel,
        out_shape=jax.ShapeDtypeStruct((B, N, D), jnp.float32),
        grid_spec=pltpu.PrefetchScalarGridSpec(
            num_scalar_prefetch=0,
            grid=(B,),
            in_specs=[a_spec, a_spec, bias_spec] + weight_specs,
            out_specs=a_spec,
            scratch_shapes=[pltpu.VMEM((N, D), jnp.float32)],
        ),
        compiler_params=pltpu.CompilerParams(
            dimension_semantics=("parallel",),
            vmem_limit_bytes=64 * 1024 * 1024),
        cost_estimate=pl.CostEstimate(
            flops=flops,
            transcendentals=int(B * (H * N * N + 8 * N * D)),
            bytes_accessed=int(3 * B * N * D * 4 + B * H * N * N * 2)),
        input_output_aliases={0: 0},   # `a` residual stream updated in place
    )(a, s, bias, *layer_w)


def _prepare_layer_params(params):
    """Fuse + cast raw per-layer params into kernel-ready (mostly bf16) form."""
    (ad_nw, ad_sw, ad_sb, ad_bw, q_w, q_b, k_w, v_w, g_w, zn_w, zn_b, z_w,
     o_w, op_w, op_b, t_ad_nw, t_ad_sw, t_ad_sb, t_ad_bw, sw_w, a2b_w, b2a_w,
     t_op_w, t_op_b) = params
    bf = lambda x: x.astype(jnp.bfloat16)
    layer_w = [
        ad_nw,                                             # f32 LN weight
        bf(jnp.concatenate([ad_sw, ad_bw], axis=1)),       # (D, 2D)
        ad_sb,                                             # f32
        bf(jnp.concatenate([q_w, k_w, v_w, g_w], axis=1)), # (D, 4D)
        q_b,                                               # f32
        bf(o_w),                                           # (D, D)
        bf(jnp.concatenate([op_w, t_op_w], axis=1)),       # (D, 2D)
        jnp.concatenate([op_b, t_op_b], axis=1),           # f32 (1, 2D)
        t_ad_nw,                                           # f32 LN weight
        bf(jnp.concatenate([t_ad_sw, t_ad_bw], axis=1)),   # (D, 2D)
        t_ad_sb,                                           # f32
        bf(jnp.concatenate([sw_w, a2b_w], axis=1)),        # (D, 3*hidden)
        bf(b2a_w),                                         # (hidden, D)
    ]
    bias_w = (zn_w, zn_b, bf(z_w.T))                       # LN f32, W_z^T bf16
    return layer_w, bias_w


def diffusion_transformer_forward(a, s, z, layer_params, n_heads):
    """Applies n_layers DiffusionTransformerLayers; returns updated `a`."""
    B, N, D = a.shape
    head_dim = D // n_heads
    a = a.astype(jnp.float32)
    s = s.astype(jnp.float32)
    z_bf = z.astype(jnp.bfloat16)

    for params in layer_params:
        hidden = params[20].shape[1]                 # a_to_b is (D, hidden)
        layer_w, bias_w = _prepare_layer_params(params)
        bias = _pair_bias(z_bf, bias_w[0], bias_w[1], bias_w[2], n_heads)
        a = _layer_call(a, s, bias, layer_w, n_heads, head_dim, D, hidden)
    return a


# --------------------------- deterministic params ----------------------------
def init_layer_params(key, D, H, Dp, hidden):
    """Weights in raw order. Linear weights are stored pre-transposed
    (in_dim, out_dim) so x @ W matches ttnn's .t() transform, except the
    pair-bias projection which keeps the (H, Dp) torch layout."""
    keys = iter(jax.random.split(key, 32))
    nx = lambda: next(keys)

    def mat(shape, fan_in):
        return (jax.random.normal(nx(), shape, jnp.float32) / np.sqrt(fan_in))

    def vec(n):
        return 0.1 * jax.random.normal(nx(), (1, n), jnp.float32)

    def norm_w(n):
        return 1.0 + 0.1 * jax.random.normal(nx(), (1, n), jnp.float32)

    params = [
        # AdaLN
        norm_w(D), mat((D, D), D), vec(D), mat((D, D), D),
        # AttentionPairBias
        mat((D, D), D), vec(D),    # proj_q weight / bias
        mat((D, D), D),            # proj_k
        mat((D, D), D),            # proj_v
        mat((D, D), D),            # proj_g
        norm_w(Dp), vec(Dp),       # proj_z.0 LayerNorm weight / bias
        mat((H, Dp), Dp),          # proj_z.1 weight (torch layout)
        mat((D, D), D),            # proj_o
        # output_projection_linear
        mat((D, D), D), vec(D),
        # ConditionedTransitionBlock AdaLN
        norm_w(D), mat((D, D), D), vec(D), mat((D, D), D),
        # swish_gate.0 / a_to_b / b_to_a
        mat((D, 2 * hidden), D), mat((D, hidden), D), mat((hidden, D), hidden),
        # transition output_projection.0
        mat((D, D), D), vec(D),
    ]
    return [p.astype(jnp.float32) for p in params]


# ------------------------------ pure-JAX reference ----------------------------
def reference_layer(a, s, z, params, n_heads):
    (ad_nw, ad_sw, ad_sb, ad_bw, q_w, q_b, k_w, v_w, g_w, zn_w, zn_b, z_w, o_w,
     op_w, op_b, t_ad_nw, t_ad_sw, t_ad_sb, t_ad_bw, sw_w, a2b_w, b2a_w,
     t_op_w, t_op_b) = params
    B, N, D = a.shape
    hd = D // n_heads

    def ln(x, w=None, bias=None):
        mu = x.mean(-1, keepdims=True)
        var = ((x - mu) ** 2).mean(-1, keepdims=True)
        y = (x - mu) / jnp.sqrt(var + EPS)
        if w is not None:
            y = y * w
        if bias is not None:
            y = y + bias
        return y

    def adaln(a_, s_, nw, sw, sb, bw):
        a_ = ln(a_)
        s_ = ln(s_, nw)
        return a_ * jax.nn.sigmoid(s_ @ sw + sb) + s_ @ bw

    b = adaln(a, s, ad_nw, ad_sw, ad_sb, ad_bw)
    q = (b @ q_w + q_b).reshape(B, N, n_heads, hd)
    k = (b @ k_w).reshape(B, N, n_heads, hd)
    v = (b @ v_w).reshape(B, N, n_heads, hd)
    sc = jnp.einsum('bihd,bjhd->bhij', q, k) * hd ** -0.5
    sc = sc + jnp.einsum('bijd,hd->bhij', ln(z, zn_w, zn_b), z_w)
    p = jax.nn.softmax(sc, axis=-1)
    o = jnp.einsum('bhij,bjhd->bihd', p, v).reshape(B, N, D)
    o = o * jax.nn.sigmoid(b @ g_w)
    b = o @ o_w
    a = a + jax.nn.sigmoid(s @ op_w + op_b) * b

    at = adaln(a, s, t_ad_nw, t_ad_sw, t_ad_sb, t_ad_bw)
    asw = at @ sw_w
    hid = asw.shape[-1] // 2
    x1, gates = asw[..., :hid], asw[..., hid:]
    bb = (jax.nn.silu(gates) * x1) * (at @ a2b_w)
    a = a + jax.nn.sigmoid(s @ t_op_w + t_op_b) * (bb @ b2a_w)
    return a


# ----------------------------------- main -------------------------------------
if __name__ == "__main__":
    B, N, D, H, Dp = 2, 8, 32, 4, 16          # batch, tokens, dim, heads, pair dim
    hidden = 2 * D                            # transition expansion factor 2
    n_layers = 2

    key = jax.random.PRNGKey(0)
    ka, ks, kz, kp = jax.random.split(key, 4)
    a = jax.random.normal(ka, (B, N, D), jnp.float32)
    s = jax.random.normal(ks, (B, N, D), jnp.float32)
    z = jax.random.normal(kz, (B, N, N, Dp), jnp.float32)

    layer_params = [init_layer_params(k, D, H, Dp, hidden)
                    for k in jax.random.split(kp, n_layers)]

    fwd = jax.jit(functools.partial(diffusion_transformer_forward, n_heads=H))
    out = jax.block_until_ready(fwd(a, s, z, layer_params))

    # sanity check vs pure-f32 JAX reference (kernel uses bf16 matmul operands
    # with f32 accumulation, so tolerance is loosened accordingly)
    ref = a
    for p in layer_params:
        ref = reference_layer(ref, s, z, p, H)
    np.testing.assert_allclose(np.asarray(out), np.asarray(ref),
                               rtol=6e-2, atol=6e-2)

    print("KERNEL_OK")
</pallas_src>

<mosaic_0001>
module attributes {stable_mosaic.version = 11 : i64} {
  func.func @pair_bias_kernel(%arg0: i32, %arg1: i32, %arg2: i32, %arg3: memref<1x8x8x16xbf16, #tpu.memory_space<vmem>>, %arg4: memref<1x16xf32, #tpu.memory_space<vmem>>, %arg5: memref<1x16xf32, #tpu.memory_space<vmem>>, %arg6: memref<16x4xbf16, #tpu.memory_space<vmem>>, %arg7: memref<1x8x8x4xbf16, #tpu.memory_space<vmem>>) attributes {dimension_semantics = [#tpu.dimension_semantics<parallel>, #tpu.dimension_semantics<parallel>, #tpu.dimension_semantics<parallel>], iteration_bounds = array<i64: 2, 1, 1>, scalar_prefetch = 0 : i64, scratch_operands = 0 : i64, tpu.core_type = #tpu.core_type<tc>, window_params = [{transform_indices = @transform_0, window_bounds = array<i64: 1, 8, 8, 16>}, {pipeline_mode = #tpu.pipeline_mode<synchronous>, transform_indices = @transform_1, window_bounds = array<i64: 1, 16>}, {pipeline_mode = #tpu.pipeline_mode<synchronous>, transform_indices = @transform_2, window_bounds = array<i64: 1, 16>}, {pipeline_mode = #tpu.pipeline_mode<synchronous>, transform_indices = @transform_3, window_bounds = array<i64: 16, 4>}, {transform_indices = @transform_4, window_bounds = array<i64: 1, 8, 8, 4>}]} {
    %c0 = arith.constant 0 : index
    %c0_0 = arith.constant 0 : index
    %c0_1 = arith.constant 0 : index
    %c0_2 = arith.constant 0 : index
    %0 = vector.load %arg3[%c0, %c0_0, %c0_1, %c0_2] : memref<1x8x8x16xbf16, #tpu.memory_space<vmem>>, vector<1x8x8x16xbf16>
    %1 = vector.shape_cast %0 : vector<1x8x8x16xbf16> to vector<8x8x16xbf16>
    %2 = arith.extf %1 : vector<8x8x16xbf16> to vector<8x8x16xf32>
    %c0_3 = arith.constant 0 : index
    %c0_4 = arith.constant 0 : index
    %3 = vector.load %arg4[%c0_3, %c0_4] : memref<1x16xf32, #tpu.memory_space<vmem>>, vector<1x16xf32>
    %c0_5 = arith.constant 0 : index
    %c0_6 = arith.constant 0 : index
    %4 = vector.load %arg5[%c0_5, %c0_6] : memref<1x16xf32, #tpu.memory_space<vmem>>, vector<1x16xf32>
    %cst = arith.constant dense<0.000000e+00> : vector<8x8xf32>
    %5 = vector.multi_reduction <add>, %2, %cst [2] : vector<8x8x16xf32> to vector<8x8xf32>
    %6 = vector.shape_cast %5 : vector<8x8xf32> to vector<8x8x1xf32>
    %cst_7 = arith.constant 1.600000e+01 : f32
    %7 = vector.broadcast %cst_7 : f32 to vector<8x8x1xf32>
    %8 = arith.divf %6, %7 : vector<8x8x1xf32>
    %9 = vector.broadcast %8 : vector<8x8x1xf32> to vector<8x8x16xf32>
    %10 = arith.subf %2, %9 : vector<8x8x16xf32>
    %11 = arith.mulf %10, %10 : vector<8x8x16xf32>
    %cst_8 = arith.constant dense<0.000000e+00> : vector<8x8xf32>
    %12 = vector.multi_reduction <add>, %11, %cst_8 [2] : vector<8x8x16xf32> to vector<8x8xf32>
    %13 = vector.shape_cast %12 : vector<8x8xf32> to vector<8x8x1xf32>
    %cst_9 = arith.constant 1.600000e+01 : f32
    %14 = vector.broadcast %cst_9 : f32 to vector<8x8x1xf32>
    %15 = arith.divf %13, %14 : vector<8x8x1xf32>
    %cst_10 = arith.constant 9.99999974E-6 : f32
    %16 = vector.broadcast %cst_10 : f32 to vector<8x8x1xf32>
    %17 = arith.addf %15, %16 : vector<8x8x1xf32>
    %18 = math.rsqrt %17 : vector<8x8x1xf32>
    %19 = vector.broadcast %18 : vector<8x8x1xf32> to vector<8x8x16xf32>
    %20 = arith.mulf %10, %19 : vector<8x8x16xf32>
    %21 = vector.shape_cast %3 : vector<1x16xf32> to vector<1x1x16xf32>
    %22 = vector.broadcast %21 : vector<1x1x16xf32> to vector<8x8x16xf32>
    %23 = arith.mulf %20, %22 : vector<8x8x16xf32>
    %24 = vector.shape_cast %4 : vector<1x16xf32> to vector<1x1x16xf32>
    %25 = vector.broadcast %24 : vector<1x1x16xf32> to vector<8x8x16xf32>
    %26 = arith.addf %23, %25 : vector<8x8x16xf32>
    %27 = vector.shape_cast %26 : vector<8x8x16xf32> to vector<64x16xf32>
    %28 = arith.truncf %27 : vector<64x16xf32> to vector<64x16xbf16>
    %c0_11 = arith.constant 0 : index
    %c0_12 = arith.constant 0 : index
    %29 = vector.load %arg6[%c0_11, %c0_12] : memref<16x4xbf16, #tpu.memory_space<vmem>>, vector<16x4xbf16>
    %cst_13 = arith.constant dense<0.000000e+00> : vector<64x4xf32>
    %30 = tpu.matmul %28, %29, %cst_13 {dimension_numbers = #tpu.dot_dimension_numbers<[1], [0], [0], [1], [0, 0, 1, 1], [], []>} : vector<64x16xbf16>, vector<16x4xbf16>, vector<64x4xf32> -> vector<64x4xf32>
    %31 = vector.shape_cast %30 : vector<64x4xf32> to vector<8x8x4xf32>
    %32 = arith.truncf %31 : vector<8x8x4xf32> to vector<8x8x4xbf16>
    %c0_14 = arith.constant 0 : index
    %c0_15 = arith.constant 0 : index
    %c0_16 = arith.constant 0 : index
    %c0_17 = arith.constant 0 : index
    %33 = vector.load %arg7[%c0_14, %c0_15, %c0_16, %c0_17] : memref<1x8x8x4xbf16, #tpu.memory_space<vmem>>, vector<1x8x8x4xbf16>
    %34 = vector.shape_cast %33 : vector<1x8x8x4xbf16> to vector<8x8x4xbf16>
    %35 = vector.shape_cast %32 : vector<8x8x4xbf16> to vector<1x8x8x4xbf16>
    tpu.vector_store %arg7[%c0_14, %c0_15, %c0_16, %c0_17], %35 {strides = array<i32>} : memref<1x8x8x4xbf16, #tpu.memory_space<vmem>>, vector<1x8x8x4xbf16>,
    return
  }
  func.func @transform_0(%arg0: i32, %arg1: i32, %arg2: i32) -> (i32, i32, i32, i32) {
    %c0_i32 = arith.constant 0 : i32
    %c0_i32_0 = arith.constant 0 : i32
    return %arg0, %arg1, %arg2, %c0_i32 : i32, i32, i32, i32
  }
  func.func @transform_1(%arg0: i32, %arg1: i32, %arg2: i32) -> (i32, i32) {
    %c0_i32 = arith.constant 0 : i32
    %c0_i32_0 = arith.constant 0 : i32
    %c0_i32_1 = arith.constant 0 : i32
    return %c0_i32, %c0_i32_0 : i32, i32
  }
  func.func @transform_2(%arg0: i32, %arg1: i32, %arg2: i32) -> (i32, i32) {
    %c0_i32 = arith.constant 0 : i32
    %c0_i32_0 = arith.constant 0 : i32
    %c0_i32_1 = arith.constant 0 : i32
    return %c0_i32, %c0_i32_0 : i32, i32
  }
  func.func @transform_3(%arg0: i32, %arg1: i32, %arg2: i32) -> (i32, i32) {
    %c0_i32 = arith.constant 0 : i32
    %c0_i32_0 = arith.constant 0 : i32
    %c0_i32_1 = arith.constant 0 : i32
    return %c0_i32, %c0_i32_0 : i32, i32
  }
  func.func @transform_4(%arg0: i32, %arg1: i32, %arg2: i32) -> (i32, i32, i32, i32) {
    %c0_i32 = arith.constant 0 : i32
    %c0_i32_0 = arith.constant 0 : i32
    return %arg0, %arg1, %arg2, %c0_i32 : i32, i32, i32, i32
  }
}

module attributes {stable_mosaic.version = 11 : i64} {
  func.func @diffusion_layer_kernel(%arg0: i32, %arg1: memref<1x8x32xf32, #tpu.memory_space<vmem>>, %arg2: memref<1x8x32xf32, #tpu.memory_space<vmem>>, %arg3: memref<1x4x8x8xbf16, #tpu.memory_space<vmem>>, %arg4: memref<1x32xf32, #tpu.memory_space<vmem>>, %arg5: memref<32x64xbf16, #tpu.memory_space<vmem>>, %arg6: memref<1x32xf32, #tpu.memory_space<vmem>>, %arg7: memref<32x128xbf16, #tpu.memory_space<vmem>>, %arg8: memref<1x32xf32, #tpu.memory_space<vmem>>, %arg9: memref<32x32xbf16, #tpu.memory_space<vmem>>, %arg10: memref<32x64xbf16, #tpu.memory_space<vmem>>, %arg11: memref<1x64xf32, #tpu.memory_space<vmem>>, %arg12: memref<1x32xf32, #tpu.memory_space<vmem>>, %arg13: memref<32x64xbf16, #tpu.memory_space<vmem>>, %arg14: memref<1x32xf32, #tpu.memory_space<vmem>>, %arg15: memref<32x192xbf16, #tpu.memory_space<vmem>>, %arg16: memref<64x32xbf16, #tpu.memory_space<vmem>>, %arg17: memref<1x8x32xf32, #tpu.memory_space<vmem>>, %arg18: memref<8x32xf32, #tpu.memory_space<vmem>>) attributes {dimension_semantics = [#tpu.dimension_semantics<parallel>], iteration_bounds = array<i64: 2>, scalar_prefetch = 0 : i64, scratch_operands = 1 : i64, tpu.core_type = #tpu.core_type<tc>, window_params = [{transform_indices = @transform_0, window_bounds = array<i64: 1, 8, 32>}, {transform_indices = @transform_1, window_bounds = array<i64: 1, 8, 32>}, {transform_indices = @transform_2, window_bounds = array<i64: 1, 4, 8, 8>}, {pipeline_mode = #tpu.pipeline_mode<synchronous>, transform_indices = @transform_3, window_bounds = array<i64: 1, 32>}, {pipeline_mode = #tpu.pipeline_mode<synchronous>, transform_indices = @transform_4, window_bounds = array<i64: 32, 64>}, {pipeline_mode = #tpu.pipeline_mode<synchronous>, transform_indices = @transform_5, window_bounds = array<i64: 1, 32>}, {pipeline_mode = #tpu.pipeline_mode<synchronous>, transform_indices = @transform_6, window_bounds = array<i64: 32, 128>}, {pipeline_mode = #tpu.pipeline_mode<synchronous>, transform_indices = @transform_7, window_bounds = array<i64: 1, 32>}, {pipeline_mode = #tpu.pipeline_mode<synchronous>, transform_indices = @transform_8, window_bounds = array<i64: 32, 32>}, {pipeline_mode = #tpu.pipeline_mode<synchronous>, transform_indices = @transform_9, window_bounds = array<i64: 32, 64>}, {pipeline_mode = #tpu.pipeline_mode<synchronous>, transform_indices = @transform_10, window_bounds = array<i64: 1, 64>}, {pipeline_mode = #tpu.pipeline_mode<synchronous>, transform_indices = @transform_11, window_bounds = array<i64: 1, 32>}, {pipeline_mode = #tpu.pipeline_mode<synchronous>, transform_indices = @transform_12, window_bounds = array<i64: 32, 64>}, {pipeline_mode = #tpu.pipeline_mode<synchronous>, transform_indices = @transform_13, window_bounds = array<i64: 1, 32>}, {pipeline_mode = #tpu.pipeline_mode<synchronous>, transform_indices = @transform_14, window_bounds = array<i64: 32, 192>}, {pipeline_mode = #tpu.pipeline_mode<synchronous>, transform_indices = @transform_15, window_bounds = array<i64: 64, 32>}, {transform_indices = @transform_16, window_bounds = array<i64: 1, 8, 32>}]} {
    %c0 = arith.constant 0 : index
    %c0_0 = arith.constant 0 : index
    %c0_1 = arith.constant 0 : index
    %0 = vector.load %arg1[%c0, %c0_0, %c0_1] : memref<1x8x32xf32, #tpu.memory_space<vmem>>, vector<1x8x32xf32>
    %1 = vector.shape_cast %0 : vector<1x8x32xf32> to vector<8x32xf32>
    %c0_2 = arith.constant 0 : index
    %c0_3 = arith.constant 0 : index
    %c0_4 = arith.constant 0 : index
    %2 = vector.load %arg2[%c0_2, %c0_3, %c0_4] : memref<1x8x32xf32, #tpu.memory_space<vmem>>, vector<1x8x32xf32>
    %3 = vector.shape_cast %2 : vector<1x8x32xf32> to vector<8x32xf32>
    %4 = arith.truncf %3 : vector<8x32xf32> to vector<8x32xbf16>
    %c0_5 = arith.constant 0 : index
    %c0_6 = arith.constant 0 : index
    %5 = vector.load %arg10[%c0_5, %c0_6] : memref<32x64xbf16, #tpu.memory_space<vmem>>, vector<32x64xbf16>
    %cst = arith.constant dense<0.000000e+00> : vector<8x64xf32>
    %6 = tpu.matmul %4, %5, %cst {dimension_numbers = #tpu.dot_dimension_numbers<[1], [0], [0], [1], [0, 0, 1, 1], [], []>} : vector<8x32xbf16>, vector<32x64xbf16>, vector<8x64xf32> -> vector<8x64xf32>
    %c0_7 = arith.constant 0 : index
    %c0_8 = arith.constant 0 : index
    %7 = vector.load %arg11[%c0_7, %c0_8] : memref<1x64xf32, #tpu.memory_space<vmem>>, vector<1x64xf32>
    %8 = vector.broadcast %7 : vector<1x64xf32> to vector<8x64xf32>
    %9 = arith.addf %6, %8 : vector<8x64xf32>
    %10 = arith.negf %9 : vector<8x64xf32>
    %11 = math.exp %10 : vector<8x64xf32>
    %cst_9 = arith.constant 1.000000e+00 : f32
    %12 = vector.broadcast %cst_9 : f32 to vector<8x64xf32>
    %13 = arith.addf %12, %11 : vector<8x64xf32>
    %14 = arith.divf %12, %13 : vector<8x64xf32>
    %15 = vector.extract_strided_slice %14 {offsets = [0, 0], sizes = [8, 32], strides = [1, 1]} : vector<8x64xf32> to vector<8x32xf32>
    %16 = vector.extract_strided_slice %14 {offsets = [0, 32], sizes = [8, 32], strides = [1, 1]} : vector<8x64xf32> to vector<8x32xf32>
    %c0_10 = arith.constant 0 : index
    %c0_11 = arith.constant 0 : index
    %17 = vector.load %arg4[%c0_10, %c0_11] : memref<1x32xf32, #tpu.memory_space<vmem>>, vector<1x32xf32>
    %c0_12 = arith.constant 0 : index
    %c0_13 = arith.constant 0 : index
    %18 = vector.load %arg5[%c0_12, %c0_13] : memref<32x64xbf16, #tpu.memory_space<vmem>>, vector<32x64xbf16>
    %c0_14 = arith.constant 0 : index
    %c0_15 = arith.constant 0 : index
    %19 = vector.load %arg6[%c0_14, %c0_15] : memref<1x32xf32, #tpu.memory_space<vmem>>, vector<1x32xf32>
    %cst_16 = arith.constant dense<0.000000e+00> : vector<8xf32>
    %20 = vector.multi_reduction <add>, %1, %cst_16 [1] : vector<8x32xf32> to vector<8xf32>
    %21 = vector.shape_cast %20 : vector<8xf32> to vector<8x1xf32>
    %cst_17 = arith.constant 3.200000e+01 : f32
    %22 = vector.broadcast %cst_17 : f32 to vector<8x1xf32>
    %23 = arith.divf %21, %22 : vector<8x1xf32>
    %24 = vector.broadcast %23 : vector<8x1xf32> to vector<8x32xf32>
    %25 = arith.subf %1, %24 : vector<8x32xf32>
    %26 = arith.mulf %25, %25 : vector<8x32xf32>
    %cst_18 = arith.constant dense<0.000000e+00> : vector<8xf32>
    %27 = vector.multi_reduction <add>, %26, %cst_18 [1] : vector<8x32xf32> to vector<8xf32>
    %28 = vector.shape_cast %27 : vector<8xf32> to vector<8x1xf32>
    %cst_19 = arith.constant 3.200000e+01 : f32
    %29 = vector.broadcast %cst_19 : f32 to vector<8x1xf32>
    %30 = arith.divf %28, %29 : vector<8x1xf32>
    %cst_20 = arith.constant 9.99999974E-6 : f32
    %31 = vector.broadcast %cst_20 : f32 to vector<8x1xf32>
    %32 = arith.addf %30, %31 : vector<8x1xf32>
    %33 = math.rsqrt %32 : vector<8x1xf32>
    %34 = vector.broadcast %33 : vector<8x1xf32> to vector<8x32xf32>
    %35 = arith.mulf %25, %34 : vector<8x32xf32>
    %cst_21 = arith.constant dense<0.000000e+00> : vector<8xf32>
    %36 = vector.multi_reduction <add>, %3, %cst_21 [1] : vector<8x32xf32> to vector<8xf32>
    %37 = vector.shape_cast %36 : vector<8xf32> to vector<8x1xf32>
    %cst_22 = arith.constant 3.200000e+01 : f32
    %38 = vector.broadcast %cst_22 : f32 to vector<8x1xf32>
    %39 = arith.divf %37, %38 : vector<8x1xf32>
    %40 = vector.broadcast %39 : vector<8x1xf32> to vector<8x32xf32>
    %41 = arith.subf %3, %40 : vector<8x32xf32>
    %42 = arith.mulf %41, %41 : vector<8x32xf32>
    %cst_23 = arith.constant dense<0.000000e+00> : vector<8xf32>
    %43 = vector.multi_reduction <add>, %42, %cst_23 [1] : vector<8x32xf32> to vector<8xf32>
    %44 = vector.shape_cast %43 : vector<8xf32> to vector<8x1xf32>
    %cst_24 = arith.constant 3.200000e+01 : f32
    %45 = vector.broadcast %cst_24 : f32 to vector<8x1xf32>
    %46 = arith.divf %44, %45 : vector<8x1xf32>
    %cst_25 = arith.constant 9.99999974E-6 : f32
    %47 = vector.broadcast %cst_25 : f32 to vector<8x1xf32>
    %48 = arith.addf %46, %47 : vector<8x1xf32>
    %49 = math.rsqrt %48 : vector<8x1xf32>
    %50 = vector.broadcast %49 : vector<8x1xf32> to vector<8x32xf32>
    %51 = arith.mulf %41, %50 : vector<8x32xf32>
    %52 = vector.broadcast %17 : vector<1x32xf32> to vector<8x32xf32>
    %53 = arith.mulf %51, %52 : vector<8x32xf32>
    %54 = arith.truncf %53 : vector<8x32xf32> to vector<8x32xbf16>
    %cst_26 = arith.constant dense<0.000000e+00> : vector<8x64xf32>
    %55 = tpu.matmul %54, %18, %cst_26 {dimension_numbers = #tpu.dot_dimension_numbers<[1], [0], [0], [1], [0, 0, 1, 1], [], []>} : vector<8x32xbf16>, vector<32x64xbf16>, vector<8x64xf32> -> vector<8x64xf32>
    %56 = vector.extract_strided_slice %55 {offsets = [0, 0], sizes = [8, 32], strides = [1, 1]} : vector<8x64xf32> to vector<8x32xf32>
    %57 = vector.broadcast %19 : vector<1x32xf32> to vector<8x32xf32>
    %58 = arith.addf %56, %57 : vector<8x32xf32>
    %59 = arith.negf %58 : vector<8x32xf32>
    %60 = math.exp %59 : vector<8x32xf32>
    %cst_27 = arith.constant 1.000000e+00 : f32
    %61 = vector.broadcast %cst_27 : f32 to vector<8x32xf32>
    %62 = arith.addf %61, %60 : vector<8x32xf32>
    %63 = arith.divf %61, %62 : vector<8x32xf32>
    %64 = vector.extract_strided_slice %55 {offsets = [0, 32], sizes = [8, 32], strides = [1, 1]} : vector<8x64xf32> to vector<8x32xf32>
    %65 = arith.mulf %35, %63 : vector<8x32xf32>
    %66 = arith.addf %65, %64 : vector<8x32xf32>
    %67 = arith.truncf %66 : vector<8x32xf32> to vector<8x32xbf16>
    %c0_28 = arith.constant 0 : index
    %c0_29 = arith.constant 0 : index
    %68 = vector.load %arg7[%c0_28, %c0_29] : memref<32x128xbf16, #tpu.memory_space<vmem>>, vector<32x128xbf16>
    %cst_30 = arith.constant dense<0.000000e+00> : vector<8x128xf32>
    %69 = tpu.matmul %67, %68, %cst_30 {dimension_numbers = #tpu.dot_dimension_numbers<[1], [0], [0], [1], [0, 0, 1, 1], [], []>} : vector<8x32xbf16>, vector<32x128xbf16>, vector<8x128xf32> -> vector<8x128xf32>
    %70 = vector.extract_strided_slice %69 {offsets = [0, 0], sizes = [8, 32], strides = [1, 1]} : vector<8x128xf32> to vector<8x32xf32>
    %c0_31 = arith.constant 0 : index
    %c0_32 = arith.constant 0 : index
    %71 = vector.load %arg8[%c0_31, %c0_32] : memref<1x32xf32, #tpu.memory_space<vmem>>, vector<1x32xf32>
    %72 = vector.broadcast %71 : vector<1x32xf32> to vector<8x32xf32>
    %73 = arith.addf %70, %72 : vector<8x32xf32>
    %74 = vector.extract_strided_slice %69 {offsets = [0, 32], sizes = [8, 32], strides = [1, 1]} : vector<8x128xf32> to vector<8x32xf32>
    %75 = vector.extract_strided_slice %69 {offsets = [0, 64], sizes = [8, 32], strides = [1, 1]} : vector<8x128xf32> to vector<8x32xf32>
    %76 = vector.extract_strided_slice %69 {offsets = [0, 96], sizes = [8, 32], strides = [1, 1]} : vector<8x128xf32> to vector<8x32xf32>
    %77 = arith.negf %76 : vector<8x32xf32>
    %78 = math.exp %77 : vector<8x32xf32>
    %cst_33 = arith.constant 1.000000e+00 : f32
    %79 = vector.broadcast %cst_33 : f32 to vector<8x32xf32>
    %80 = arith.addf %79, %78 : vector<8x32xf32>
    %81 = arith.divf %79, %80 : vector<8x32xf32>
    %cst_34 = arith.constant 0.353553385 : f32
    %82 = vector.broadcast %cst_34 : f32 to vector<8x32xf32>
    %83 = arith.mulf %73, %82 : vector<8x32xf32>
    %84 = arith.truncf %83 : vector<8x32xf32> to vector<8x32xbf16>
    %85 = arith.truncf %74 : vector<8x32xf32> to vector<8x32xbf16>
    %86 = arith.truncf %75 : vector<8x32xf32> to vector<8x32xbf16>
    %87 = vector.extract_strided_slice %84 {offsets = [0, 0], sizes = [8, 8], strides = [1, 1]} : vector<8x32xbf16> to vector<8x8xbf16>
    %88 = vector.extract_strided_slice %85 {offsets = [0, 0], sizes = [8, 8], strides = [1, 1]} : vector<8x32xbf16> to vector<8x8xbf16>
    %cst_35 = arith.constant dense<0.000000e+00> : vector<8x8xf32>
    %89 = tpu.matmul %87, %88, %cst_35 {dimension_numbers = #tpu.dot_dimension_numbers<[1], [1], [0], [0], [0, 0, 1, 0], [], []>} : vector<8x8xbf16>, vector<8x8xbf16>, vector<8x8xf32> -> vector<8x8xf32>
    %c0_36 = arith.constant 0 : index
    %c0_37 = arith.constant 0 : index
    %c0_38 = arith.constant 0 : index
    %c0_39 = arith.constant 0 : index
    %90 = vector.load %arg3[%c0_36, %c0_37, %c0_38, %c0_39] : memref<1x4x8x8xbf16, #tpu.memory_space<vmem>>, vector<1x1x8x8xbf16>
    %91 = vector.shape_cast %90 : vector<1x1x8x8xbf16> to vector<8x8xbf16>
    %92 = arith.extf %91 : vector<8x8xbf16> to vector<8x8xf32>
    %93 = arith.addf %89, %92 : vector<8x8xf32>
    %cst_40 = arith.constant dense<0xFF800000> : vector<8xf32>
    %94 = vector.multi_reduction <maximumf>, %93, %cst_40 [1] : vector<8x8xf32> to vector<8xf32>
    %95 = vector.shape_cast %94 : vector<8xf32> to vector<8x1xf32>
    %96 = vector.broadcast %95 : vector<8x1xf32> to vector<8x8xf32>
    %97 = arith.subf %93, %96 : vector<8x8xf32>
    %98 = math.exp %97 : vector<8x8xf32>
    %cst_41 = arith.constant dense<0.000000e+00> : vector<8xf32>
    %99 = vector.multi_reduction <add>, %98, %cst_41 [1] : vector<8x8xf32> to vector<8xf32>
    %100 = vector.shape_cast %99 : vector<8xf32> to vector<8x1xf32>
    %101 = tpu.reciprocal %100 {approx = true} : vector<8x1xf32> -> vector<8x1xf32>
    %102 = vector.broadcast %101 : vector<8x1xf32> to vector<8x8xf32>
    %103 = arith.mulf %98, %102 : vector<8x8xf32>
    %104 = arith.truncf %103 : vector<8x8xf32> to vector<8x8xbf16>
    %105 = vector.extract_strided_slice %86 {offsets = [0, 0], sizes = [8, 8], strides = [1, 1]} : vector<8x32xbf16> to vector<8x8xbf16>
    %cst_42 = arith.constant dense<0.000000e+00> : vector<8x8xf32>
    %106 = tpu.matmul %104, %105, %cst_42 {dimension_numbers = #tpu.dot_dimension_numbers<[1], [0], [0], [1], [0, 0, 1, 1], [], []>} : vector<8x8xbf16>, vector<8x8xbf16>, vector<8x8xf32> -> vector<8x8xf32>
    %c0_43 = arith.constant 0 : index
    %c0_44 = arith.constant 0 : index
    %107 = vector.load %arg18[%c0_43, %c0_44] : memref<8x32xf32, #tpu.memory_space<vmem>>, vector<8x8xf32>
    tpu.vector_store %arg18[%c0_43, %c0_44], %106 {strides = array<i32>} : memref<8x32xf32, #tpu.memory_space<vmem>>, vector<8x8xf32>,
    %108 = vector.extract_strided_slice %84 {offsets = [0, 8], sizes = [8, 8], strides = [1, 1]} : vector<8x32xbf16> to vector<8x8xbf16>
    %109 = vector.extract_strided_slice %85 {offsets = [0, 8], sizes = [8, 8], strides = [1, 1]} : vector<8x32xbf16> to vector<8x8xbf16>
    %cst_45 = arith.constant dense<0.000000e+00> : vector<8x8xf32>
    %110 = tpu.matmul %108, %109, %cst_45 {dimension_numbers = #tpu.dot_dimension_numbers<[1], [1], [0], [0], [0, 0, 1, 0], [], []>} : vector<8x8xbf16>, vector<8x8xbf16>, vector<8x8xf32> -> vector<8x8xf32>
    %c0_46 = arith.constant 0 : index
    %c1 = arith.constant 1 : index
    %c0_47 = arith.constant 0 : index
    %c0_48 = arith.constant 0 : index
    %111 = vector.load %arg3[%c0_46, %c1, %c0_47, %c0_48] : memref<1x4x8x8xbf16, #tpu.memory_space<vmem>>, vector<1x1x8x8xbf16>
    %112 = vector.shape_cast %111 : vector<1x1x8x8xbf16> to vector<8x8xbf16>
    %113 = arith.extf %112 : vector<8x8xbf16> to vector<8x8xf32>
    %114 = arith.addf %110, %113 : vector<8x8xf32>
    %cst_49 = arith.constant dense<0xFF800000> : vector<8xf32>
    %115 = vector.multi_reduction <maximumf>, %114, %cst_49 [1] : vector<8x8xf32> to vector<8xf32>
    %116 = vector.shape_cast %115 : vector<8xf32> to vector<8x1xf32>
    %117 = vector.broadcast %116 : vector<8x1xf32> to vector<8x8xf32>
    %118 = arith.subf %114, %117 : vector<8x8xf32>
    %119 = math.exp %118 : vector<8x8xf32>
    %cst_50 = arith.constant dense<0.000000e+00> : vector<8xf32>
    %120 = vector.multi_reduction <add>, %119, %cst_50 [1] : vector<8x8xf32> to vector<8xf32>
    %121 = vector.shape_cast %120 : vector<8xf32> to vector<8x1xf32>
    %122 = tpu.reciprocal %121 {approx = true} : vector<8x1xf32> -> vector<8x1xf32>
    %123 = vector.broadcast %122 : vector<8x1xf32> to vector<8x8xf32>
    %124 = arith.mulf %119, %123 : vector<8x8xf32>
    %125 = arith.truncf %124 : vector<8x8xf32> to vector<8x8xbf16>
    %126 = vector.extract_strided_slice %86 {offsets = [0, 8], sizes = [8, 8], strides = [1, 1]} : vector<8x32xbf16> to vector<8x8xbf16>
    %cst_51 = arith.constant dense<0.000000e+00> : vector<8x8xf32>
    %127 = tpu.matmul %125, %126, %cst_51 {dimension_numbers = #tpu.dot_dimension_numbers<[1], [0], [0], [1], [0, 0, 1, 1], [], []>} : vector<8x8xbf16>, vector<8x8xbf16>, vector<8x8xf32> -> vector<8x8xf32>
    %c0_52 = arith.constant 0 : index
    %c8 = arith.constant 8 : index
    %128 = vector.load %arg18[%c0_52, %c8] : memref<8x32xf32, #tpu.memory_space<vmem>>, vector<8x8xf32>
    tpu.vector_store %arg18[%c0_52, %c8], %127 {strides = array<i32>} : memref<8x32xf32, #tpu.memory_space<vmem>>, vector<8x8xf32>,
    %129 = vector.extract_strided_slice %84 {offsets = [0, 16], sizes = [8, 8], strides = [1, 1]} : vector<8x32xbf16> to vector<8x8xbf16>
    %130 = vector.extract_strided_slice %85 {offsets = [0, 16], sizes = [8, 8], strides = [1, 1]} : vector<8x32xbf16> to vector<8x8xbf16>
    %cst_53 = arith.constant dense<0.000000e+00> : vector<8x8xf32>
    %131 = tpu.matmul %129, %130, %cst_53 {dimension_numbers = #tpu.dot_dimension_numbers<[1], [1], [0], [0], [0, 0, 1, 0], [], []>} : vector<8x8xbf16>, vector<8x8xbf16>, vector<8x8xf32> -> vector<8x8xf32>
    %c0_54 = arith.constant 0 : index
    %c2 = arith.constant 2 : index
    %c0_55 = arith.constant 0 : index
    %c0_56 = arith.constant 0 : index
    %132 = vector.load %arg3[%c0_54, %c2, %c0_55, %c0_56] : memref<1x4x8x8xbf16, #tpu.memory_space<vmem>>, vector<1x1x8x8xbf16>
    %133 = vector.shape_cast %132 : vector<1x1x8x8xbf16> to vector<8x8xbf16>
    %134 = arith.extf %133 : vector<8x8xbf16> to vector<8x8xf32>
    %135 = arith.addf %131, %134 : vector<8x8xf32>
    %cst_57 = arith.constant dense<0xFF800000> : vector<8xf32>
    %136 = vector.multi_reduction <maximumf>, %135, %cst_57 [1] : vector<8x8xf32> to vector<8xf32>
    %137 = vector.shape_cast %136 : vector<8xf32> to vector<8x1xf32>
    %138 = vector.broadcast %137 : vector<8x1xf32> to vector<8x8xf32>
    %139 = arith.subf %135, %138 : vector<8x8xf32>
    %140 = math.exp %139 : vector<8x8xf32>
    %cst_58 = arith.constant dense<0.000000e+00> : vector<8xf32>
    %141 = vector.multi_reduction <add>, %140, %cst_58 [1] : vector<8x8xf32> to vector<8xf32>
    %142 = vector.shape_cast %141 : vector<8xf32> to vector<8x1xf32>
    %143 = tpu.reciprocal %142 {approx = true} : vector<8x1xf32> -> vector<8x1xf32>
    %144 = vector.broadcast %143 : vector<8x1xf32> to vector<8x8xf32>
    %145 = arith.mulf %140, %144 : vector<8x8xf32>
    %146 = arith.truncf %145 : vector<8x8xf32> to vector<8x8xbf16>
    %147 = vector.extract_strided_slice %86 {offsets = [0, 16], sizes = [8, 8], strides = [1, 1]} : vector<8x32xbf16> to vector<8x8xbf16>
    %cst_59 = arith.constant dense<0.000000e+00> : vector<8x8xf32>
    %148 = tpu.matmul %146, %147, %cst_59 {dimension_numbers = #tpu.dot_dimension_numbers<[1], [0], [0], [1], [0, 0, 1, 1], [], []>} : vector<8x8xbf16>, vector<8x8xbf16>, vector<8x8xf32> -> vector<8x8xf32>
    %c0_60 = arith.constant 0 : index
    %c16 = arith.constant 16 : index
    %149 = vector.load %arg18[%c0_60, %c16] : memref<8x32xf32, #tpu.memory_space<vmem>>, vector<8x8xf32>
    tpu.vector_store %arg18[%c0_60, %c16], %148 {strides = array<i32>} : memref<8x32xf32, #tpu.memory_space<vmem>>, vector<8x8xf32>,
    %150 = vector.extract_strided_slice %84 {offsets = [0, 24], sizes = [8, 8], strides = [1, 1]} : vector<8x32xbf16> to vector<8x8xbf16>
    %151 = vector.extract_strided_slice %85 {offsets = [0, 24], sizes = [8, 8], strides = [1, 1]} : vector<8x32xbf16> to vector<8x8xbf16>
    %cst_61 = arith.constant dense<0.000000e+00> : vector<8x8xf32>
    %152 = tpu.matmul %150, %151, %cst_61 {dimension_numbers = #tpu.dot_dimension_numbers<[1], [1], [0], [0], [0, 0, 1, 0], [], []>} : vector<8x8xbf16>, vector<8x8xbf16>, vector<8x8xf32> -> vector<8x8xf32>
    %c0_62 = arith.constant 0 : index
    %c3 = arith.constant 3 : index
    %c0_63 = arith.constant 0 : index
    %c0_64 = arith.constant 0 : index
    %153 = vector.load %arg3[%c0_62, %c3, %c0_63, %c0_64] : memref<1x4x8x8xbf16, #tpu.memory_space<vmem>>, vector<1x1x8x8xbf16>
    %154 = vector.shape_cast %153 : vector<1x1x8x8xbf16> to vector<8x8xbf16>
    %155 = arith.extf %154 : vector<8x8xbf16> to vector<8x8xf32>
    %156 = arith.addf %152, %155 : vector<8x8xf32>
    %cst_65 = arith.constant dense<0xFF800000> : vector<8xf32>
    %157 = vector.multi_reduction <maximumf>, %156, %cst_65 [1] : vector<8x8xf32> to vector<8xf32>
    %158 = vector.shape_cast %157 : vector<8xf32> to vector<8x1xf32>
    %159 = vector.broadcast %158 : vector<8x1xf32> to vector<8x8xf32>
    %160 = arith.subf %156, %159 : vector<8x8xf32>
    %161 = math.exp %160 : vector<8x8xf32>
    %cst_66 = arith.constant dense<0.000000e+00> : vector<8xf32>
    %162 = vector.multi_reduction <add>, %161, %cst_66 [1] : vector<8x8xf32> to vector<8xf32>
    %163 = vector.shape_cast %162 : vector<8xf32> to vector<8x1xf32>
    %164 = tpu.reciprocal %163 {approx = true} : vector<8x1xf32> -> vector<8x1xf32>
    %165 = vector.broadcast %164 : vector<8x1xf32> to vector<8x8xf32>
    %166 = arith.mulf %161, %165 : vector<8x8xf32>
    %167 = arith.truncf %166 : vector<8x8xf32> to vector<8x8xbf16>
    %168 = vector.extract_strided_slice %86 {offsets = [0, 24], sizes = [8, 8], strides = [1, 1]} : vector<8x32xbf16> to vector<8x8xbf16>
    %cst_67 = arith.constant dense<0.000000e+00> : vector<8x8xf32>
    %169 = tpu.matmul %167, %168, %cst_67 {dimension_numbers = #tpu.dot_dimension_numbers<[1], [0], [0], [1], [0, 0, 1, 1], [], []>} : vector<8x8xbf16>, vector<8x8xbf16>, vector<8x8xf32> -> vector<8x8xf32>
    %c0_68 = arith.constant 0 : index
    %c24 = arith.constant 24 : index
    %170 = vector.load %arg18[%c0_68, %c24] : memref<8x32xf32, #tpu.memory_space<vmem>>, vector<8x8xf32>
    tpu.vector_store %arg18[%c0_68, %c24], %169 {strides = array<i32>} : memref<8x32xf32, #tpu.memory_space<vmem>>, vector<8x8xf32>,
    %c0_69 = arith.constant 0 : index
    %c0_70 = arith.constant 0 : index
    %171 = vector.load %arg18[%c0_69, %c0_70] : memref<8x32xf32, #tpu.memory_space<vmem>>, vector<8x32xf32>
    %172 = arith.mulf %171, %81 : vector<8x32xf32>
    %173 = arith.truncf %172 : vector<8x32xf32> to vector<8x32xbf16>
    %c0_71 = arith.constant 0 : index
    %c0_72 = arith.constant 0 : index
    %174 = vector.load %arg9[%c0_71, %c0_72] : memref<32x32xbf16, #tpu.memory_space<vmem>>, vector<32x32xbf16>
    %cst_73 = arith.constant dense<0.000000e+00> : vector<8x32xf32>
    %175 = tpu.matmul %173, %174, %cst_73 {dimension_numbers = #tpu.dot_dimension_numbers<[1], [0], [0], [1], [0, 0, 1, 1], [], []>} : vector<8x32xbf16>, vector<32x32xbf16>, vector<8x32xf32> -> vector<8x32xf32>
    %176 = arith.mulf %15, %175 : vector<8x32xf32>
    %177 = arith.addf %1, %176 : vector<8x32xf32>
    %c0_74 = arith.constant 0 : index
    %c0_75 = arith.constant 0 : index
    %178 = vector.load %arg12[%c0_74, %c0_75] : memref<1x32xf32, #tpu.memory_space<vmem>>, vector<1x32xf32>
    %c0_76 = arith.constant 0 : index
    %c0_77 = arith.constant 0 : index
    %179 = vector.load %arg13[%c0_76, %c0_77] : memref<32x64xbf16, #tpu.memory_space<vmem>>, vector<32x64xbf16>
    %c0_78 = arith.constant 0 : index
    %c0_79 = arith.constant 0 : index
    %180 = vector.load %arg14[%c0_78, %c0_79] : memref<1x32xf32, #tpu.memory_space<vmem>>, vector<1x32xf32>
    %cst_80 = arith.constant dense<0.000000e+00> : vector<8xf32>
    %181 = vector.multi_reduction <add>, %177, %cst_80 [1] : vector<8x32xf32> to vector<8xf32>
    %182 = vector.shape_cast %181 : vector<8xf32> to vector<8x1xf32>
    %cst_81 = arith.constant 3.200000e+01 : f32
    %183 = vector.broadcast %cst_81 : f32 to vector<8x1xf32>
    %184 = arith.divf %182, %183 : vector<8x1xf32>
    %185 = vector.broadcast %184 : vector<8x1xf32> to vector<8x32xf32>
    %186 = arith.subf %177, %185 : vector<8x32xf32>
    %187 = arith.mulf %186, %186 : vector<8x32xf32>
    %cst_82 = arith.constant dense<0.000000e+00> : vector<8xf32>
    %188 = vector.multi_reduction <add>, %187, %cst_82 [1] : vector<8x32xf32> to vector<8xf32>
    %189 = vector.shape_cast %188 : vector<8xf32> to vector<8x1xf32>
    %cst_83 = arith.constant 3.200000e+01 : f32
    %190 = vector.broadcast %cst_83 : f32 to vector<8x1xf32>
    %191 = arith.divf %189, %190 : vector<8x1xf32>
    %cst_84 = arith.constant 9.99999974E-6 : f32
    %192 = vector.broadcast %cst_84 : f32 to vector<8x1xf32>
    %193 = arith.addf %191, %192 : vector<8x1xf32>
    %194 = math.rsqrt %193 : vector<8x1xf32>
    %195 = vector.broadcast %194 : vector<8x1xf32> to vector<8x32xf32>
    %196 = arith.mulf %186, %195 : vector<8x32xf32>
    %cst_85 = arith.constant dense<0.000000e+00> : vector<8xf32>
    %197 = vector.multi_reduction <add>, %3, %cst_85 [1] : vector<8x32xf32> to vector<8xf32>
    %198 = vector.shape_cast %197 : vector<8xf32> to vector<8x1xf32>
    %cst_86 = arith.constant 3.200000e+01 : f32
    %199 = vector.broadcast %cst_86 : f32 to vector<8x1xf32>
    %200 = arith.divf %198, %199 : vector<8x1xf32>
    %201 = vector.broadcast %200 : vector<8x1xf32> to vector<8x32xf32>
    %202 = arith.subf %3, %201 : vector<8x32xf32>
    %203 = arith.mulf %202, %202 : vector<8x32xf32>
    %cst_87 = arith.constant dense<0.000000e+00> : vector<8xf32>
    %204 = vector.multi_reduction <add>, %203, %cst_87 [1] : vector<8x32xf32> to vector<8xf32>
    %205 = vector.shape_cast %204 : vector<8xf32> to vector<8x1xf32>
    %cst_88 = arith.constant 3.200000e+01 : f32
    %206 = vector.broadcast %cst_88 : f32 to vector<8x1xf32>
    %207 = arith.divf %205, %206 : vector<8x1xf32>
    %cst_89 = arith.constant 9.99999974E-6 : f32
    %208 = vector.broadcast %cst_89 : f32 to vector<8x1xf32>
    %209 = arith.addf %207, %208 : vector<8x1xf32>
    %210 = math.rsqrt %209 : vector<8x1xf32>
    %211 = vector.broadcast %210 : vector<8x1xf32> to vector<8x32xf32>
    %212 = arith.mulf %202, %211 : vector<8x32xf32>
    %213 = vector.broadcast %178 : vector<1x32xf32> to vector<8x32xf32>
    %214 = arith.mulf %212, %213 : vector<8x32xf32>
    %215 = arith.truncf %214 : vector<8x32xf32> to vector<8x32xbf16>
    %cst_90 = arith.constant dense<0.000000e+00> : vector<8x64xf32>
    %216 = tpu.matmul %215, %179, %cst_90 {dimension_numbers = #tpu.dot_dimension_numbers<[1], [0], [0], [1], [0, 0, 1, 1], [], []>} : vector<8x32xbf16>, vector<32x64xbf16>, vector<8x64xf32> -> vector<8x64xf32>
    %217 = vector.extract_strided_slice %216 {offsets = [0, 0], sizes = [8, 32], strides = [1, 1]} : vector<8x64xf32> to vector<8x32xf32>
    %218 = vector.broadcast %180 : vector<1x32xf32> to vector<8x32xf32>
    %219 = arith.addf %217, %218 : vector<8x32xf32>
    %220 = arith.negf %219 : vector<8x32xf32>
    %221 = math.exp %220 : vector<8x32xf32>
    %cst_91 = arith.constant 1.000000e+00 : f32
    %222 = vector.broadcast %cst_91 : f32 to vector<8x32xf32>
    %223 = arith.addf %222, %221 : vector<8x32xf32>
    %224 = arith.divf %222, %223 : vector<8x32xf32>
    %225 = vector.extract_strided_slice %216 {offsets = [0, 32], sizes = [8, 32], strides = [1, 1]} : vector<8x64xf32> to vector<8x32xf32>
    %226 = arith.mulf %196, %224 : vector<8x32xf32>
    %227 = arith.addf %226, %225 : vector<8x32xf32>
    %228 = arith.truncf %227 : vector<8x32xf32> to vector<8x32xbf16>
    %c0_92 = arith.constant 0 : index
    %c0_93 = arith.constant 0 : index
    %229 = vector.load %arg15[%c0_92, %c0_93] : memref<32x192xbf16, #tpu.memory_space<vmem>>, vector<32x192xbf16>
    %cst_94 = arith.constant dense<0.000000e+00> : vector<8x192xf32>
    %230 = tpu.matmul %228, %229, %cst_94 {dimension_numbers = #tpu.dot_dimension_numbers<[1], [0], [0], [1], [0, 0, 1, 1], [], []>} : vector<8x32xbf16>, vector<32x192xbf16>, vector<8x192xf32> -> vector<8x192xf32>
    %231 = vector.extract_strided_slice %230 {offsets = [0, 0], sizes = [8, 64], strides = [1, 1]} : vector<8x192xf32> to vector<8x64xf32>
    %232 = vector.extract_strided_slice %230 {offsets = [0, 64], sizes = [8, 64], strides = [1, 1]} : vector<8x192xf32> to vector<8x64xf32>
    %233 = vector.extract_strided_slice %230 {offsets = [0, 128], sizes = [8, 64], strides = [1, 1]} : vector<8x192xf32> to vector<8x64xf32>
    %234 = arith.negf %232 : vector<8x64xf32>
    %235 = math.exp %234 : vector<8x64xf32>
    %cst_95 = arith.constant 1.000000e+00 : f32
    %236 = vector.broadcast %cst_95 : f32 to vector<8x64xf32>
    %237 = arith.addf %236, %235 : vector<8x64xf32>
    %238 = arith.divf %236, %237 : vector<8x64xf32>
    %239 = arith.mulf %232, %238 : vector<8x64xf32>
    %240 = arith.mulf %239, %231 : vector<8x64xf32>
    %241 = arith.mulf %240, %233 : vector<8x64xf32>
    %242 = arith.truncf %241 : vector<8x64xf32> to vector<8x64xbf16>
    %c0_96 = arith.constant 0 : index
    %c0_97 = arith.constant 0 : index
    %243 = vector.load %arg16[%c0_96, %c0_97] : memref<64x32xbf16, #tpu.memory_space<vmem>>, vector<64x32xbf16>
    %cst_98 = arith.constant dense<0.000000e+00> : vector<8x32xf32>
    %244 = tpu.matmul %242, %243, %cst_98 {dimension_numbers = #tpu.dot_dimension_numbers<[1], [0], [0], [1], [0, 0, 1, 1], [], []>} : vector<8x64xbf16>, vector<64x32xbf16>, vector<8x32xf32> -> vector<8x32xf32>
    %245 = arith.mulf %16, %244 : vector<8x32xf32>
    %246 = arith.addf %177, %245 : vector<8x32xf32>
    %c0_99 = arith.constant 0 : index
    %c0_100 = arith.constant 0 : index
    %c0_101 = arith.constant 0 : index
    %247 = vector.load %arg17[%c0_99, %c0_100, %c0_101] : memref<1x8x32xf32, #tpu.memory_space<vmem>>, vector<1x8x32xf32>
    %248 = vector.shape_cast %247 : vector<1x8x32xf32> to vector<8x32xf32>
    %249 = vector.shape_cast %246 : vector<8x32xf32> to vector<1x8x32xf32>
    tpu.vector_store %arg17[%c0_99, %c0_100, %c0_101], %249 {strides = array<i32>} : memref<1x8x32xf32, #tpu.memory_space<vmem>>, vector<1x8x32xf32>,
    return
  }
  func.func @transform_0(%arg0: i32) -> (i32, i32, i32) {
    %c0_i32 = arith.constant 0 : i32
    %c0_i32_0 = arith.constant 0 : i32
    %c0_i32_1 = arith.constant 0 : i32
    return %arg0, %c0_i32, %c0_i32_0 : i32, i32, i32
  }
  func.func @transform_1(%arg0: i32) -> (i32, i32, i32) {
    %c0_i32 = arith.constant 0 : i32
    %c0_i32_0 = arith.constant 0 : i32
    %c0_i32_1 = arith.constant 0 : i32
    return %arg0, %c0_i32, %c0_i32_0 : i32, i32, i32
  }
  func.func @transform_2(%arg0: i32) -> (i32, i32, i32, i32) {
    %c0_i32 = arith.constant 0 : i32
    %c0_i32_0 = arith.constant 0 : i32
    %c0_i32_1 = arith.constant 0 : i32
    %c0_i32_2 = arith.constant 0 : i32
    return %arg0, %c0_i32, %c0_i32_0, %c0_i32_1 : i32, i32, i32, i32
  }
  func.func @transform_3(%arg0: i32) -> (i32, i32) {
    %c0_i32 = arith.constant 0 : i32
    %c0_i32_0 = arith.constant 0 : i32
    %c0_i32_1 = arith.constant 0 : i32
    return %c0_i32, %c0_i32_0 : i32, i32
  }
  func.func @transform_4(%arg0: i32) -> (i32, i32) {
    %c0_i32 = arith.constant 0 : i32
    %c0_i32_0 = arith.constant 0 : i32
    %c0_i32_1 = arith.constant 0 : i32
    return %c0_i32, %c0_i32_0 : i32, i32
  }
  func.func @transform_5(%arg0: i32) -> (i32, i32) {
    %c0_i32 = arith.constant 0 : i32
    %c0_i32_0 = arith.constant 0 : i32
    %c0_i32_1 = arith.constant 0 : i32
    return %c0_i32, %c0_i32_0 : i32, i32
  }
  func.func @transform_6(%arg0: i32) -> (i32, i32) {
    %c0_i32 = arith.constant 0 : i32
    %c0_i32_0 = arith.constant 0 : i32
    %c0_i32_1 = arith.constant 0 : i32
    return %c0_i32, %c0_i32_0 : i32, i32
  }
  func.func @transform_7(%arg0: i32) -> (i32, i32) {
    %c0_i32 = arith.constant 0 : i32
    %c0_i32_0 = arith.constant 0 : i32
    %c0_i32_1 = arith.constant 0 : i32
    return %c0_i32, %c0_i32_0 : i32, i32
  }
  func.func @transform_8(%arg0: i32) -> (i32, i32) {
    %c0_i32 = arith.constant 0 : i32
    %c0_i32_0 = arith.constant 0 : i32
    %c0_i32_1 = arith.constant 0 : i32
    return %c0_i32, %c0_i32_0 : i32, i32
  }
  func.func @transform_9(%arg0: i32) -> (i32, i32) {
    %c0_i32 = arith.constant 0 : i32
    %c0_i32_0 = arith.constant 0 : i32
    %c0_i32_1 = arith.constant 0 : i32
    return %c0_i32, %c0_i32_0 : i32, i32
  }
  func.func @transform_10(%arg0: i32) -> (i32, i32) {
    %c0_i32 = arith.constant 0 : i32
    %c0_i32_0 = arith.constant 0 : i32
    %c0_i32_1 = arith.constant 0 : i32
    return %c0_i32, %c0_i32_0 : i32, i32
  }
  func.func @transform_11(%arg0: i32) -> (i32, i32) {
    %c0_i32 = arith.constant 0 : i32
    %c0_i32_0 = arith.constant 0 : i32
    %c0_i32_1 = arith.constant 0 : i32
    return %c0_i32, %c0_i32_0 : i32, i32
  }
  func.func @transform_12(%arg0: i32) -> (i32, i32) {
    %c0_i32 = arith.constant 0 : i32
    %c0_i32_0 = arith.constant 0 : i32
    %c0_i32_1 = arith.constant 0 : i32
    return %c0_i32, %c0_i32_0 : i32, i32
  }
  func.func @transform_13(%arg0: i32) -> (i32, i32) {
    %c0_i32 = arith.constant 0 : i32
    %c0_i32_0 = arith.constant 0 : i32
    %c0_i32_1 = arith.constant 0 : i32
    return %c0_i32, %c0_i32_0 : i32, i32
  }
  func.func @transform_14(%arg0: i32) -> (i32, i32) {
    %c0_i32 = arith.constant 0 : i32
    %c0_i32_0 = arith.constant 0 : i32
    %c0_i32_1 = arith.constant 0 : i32
    return %c0_i32, %c0_i32_0 : i32, i32
  }
  func.func @transform_15(%arg0: i32) -> (i32, i32) {
    %c0_i32 = arith.constant 0 : i32
    %c0_i32_0 = arith.constant 0 : i32
    %c0_i32_1 = arith.constant 0 : i32
    return %c0_i32, %c0_i32_0 : i32, i32
  }
  func.func @transform_16(%arg0: i32) -> (i32, i32, i32) {
    %c0_i32 = arith.constant 0 : i32
    %c0_i32_0 = arith.constant 0 : i32
    %c0_i32_1 = arith.constant 0 : i32
    return %arg0, %c0_i32, %c0_i32_0 : i32, i32, i32
  }
}

</mosaic_0001>

<llo_original>
// kernel: diffusion_transformer_forward.4
$region0: #{diffusion_transformer_forward.4}
  #allocation0 [shape = 'u32[]', space=smem, size = 0x4, offset = 0x4, fixed_abs, tag = 'smem constant byte address 0x4 - core index']
  #allocation1 [shape = 'u32[144,128]{1,0:T(1,128)}', space=vmem, size = 0x12000, scoped, tag = 'internal scratch']
  %s0 = inlined_call_operand.hbm [shape: bf16[2,8,8,16], index: 0, kind: input, shape index: {}]
  %s1 = inlined_call_operand.hbm [shape: f32[1,16], index: 1, kind: input, shape index: {}]
  %s2 = inlined_call_operand.hbm [shape: f32[1,16], index: 2, kind: input, shape index: {}]
  %s3 = inlined_call_operand.hbm [shape: bf16[16,4], index: 3, kind: input, shape index: {}]
  %s4 = inlined_call_operand.hbm [shape: bf16[2,8,8,4], index: 4, kind: output, shape index: {}]
  %s5 = sld [smem:[#allocation0]]
  $region65: #{diffusion_transformer_forward.4} parent=0
    _
  %s7 = ssub.s32 1, %s5
  %s8 = scalar_select 0, %s7, %s5
  $region1: #{diffusion_transformer_forward.4} parent=0
    #allocation2 [shape = 'u8[32768]{0}', space=vmem, size = 0x8000, scoped, tag = 'input window, operand 0']
    #allocation3 [shape = 's32[2]{0}', space=sflag, size = 0x8, scoped, tag = 'scoped memory for diffusion_transformer_forward.4']
    #allocation4 [shape = 's32[2]{0}', space=sflag, size = 0x8, scoped, tag = 'scoped memory for diffusion_transformer_forward.4']
    #allocation5 [shape = 'u8[512]{0}', space=vmem, size = 0x400, scoped, tag = 'input window, operand 1, single buffered']
    #allocation6 [shape = 's32[1]{0}', space=sflag, size = 0x4, scoped, tag = 'scoped memory for diffusion_transformer_forward.4']
    #allocation7 [shape = 'u8[512]{0}', space=vmem, size = 0x400, scoped, tag = 'input window, operand 2, single buffered']
    #allocation8 [shape = 'u8[4096]{0}', space=vmem, size = 0x1000, scoped, tag = 'input window, operand 3, single buffered']
    #allocation9 [shape = 's32[1]{0}', space=sflag, size = 0x4, scoped, tag = 'scoped memory for diffusion_transformer_forward.4']
    #allocation10 [shape = 'u8[32768]{0}', space=vmem, size = 0x8000, scoped, tag = 'output window, operand 0']
    %9 = vsyncpa [#allocation3], 0
    %s10 = scalar_lea.sflag [#allocation3], 1
    %11 = vsyncpa %s10, 0
    %12 = vsyncpa [#allocation6], 0
    %13 = vsyncpa [#allocation9], 0
    %14 = vsyncpa [#allocation4], 0
    %s15 = scalar_lea.sflag [#allocation4], 1
    %16 = vsyncpa %s15, 0
    loop: start=0, step=1, limit=4
    $region2: #{diffusion_transformer_forward.4} parent=1 // loop_pre_header
      _
    $region3: #{diffusion_transformer_forward.4} parent=1 // loop_header
      %s18 = sphi 0, %s22
      %p19 = scmp.ge.s32.totalorder %s18, 4
      %s25 = sphi 0, %s44
      %s26 = sphi 0, %s40
      %s27 = sphi 0, %s36
      %s28 = sphi 0, %s25
      %s29 = sphi 0, %s26
      %s30 = sphi 0, %s27
      %s31 = sphi 0, %s28
      %s32 = sphi 0, %s29
      %s33 = sphi 0, %s30
      %s51 = sphi 0, %s53
      %s54 = sphi 0, %s51
      %s55 = sphi 0, %s54
      %s71 = sphi 0, %s55
      %s75 = sphi 0, %s75
      %s77 = sphi 0, %s75
      %s78 = sphi 0, %s77
      %s92 = sphi 0, %s78
      %s96 = sphi 0, %s96
      %s98 = sphi 0, %s96
      %s99 = sphi 0, %s98
      %s113 = sphi 0, %s99
      %s117 = sphi 0, %s117
      %s119 = sphi 0, %s117
      %s120 = sphi 0, %s119
      %s134 = sphi 0, %s120
      %s144 = sphi 0, %s146
      %s147 = sphi 0, %s144
      %s148 = sphi 0, %s147
      %s164 = sphi 0, %s148
    $region4: #{diffusion_transformer_forward.4} parent=1 // loop_header_branch
      %21 = sbr.rel (%p19) target = $region8
    $region5: #{diffusion_transformer_forward.4} parent=1 // loop_body
      %s23 = ssub.s32 %s18, 1
      %s24 = ssub.s32 %s18, 2
      %s34 = sadd.s32 1, %s27
      %p35 = scmp.ge.s32.totalorder %s34, 1
      %s36 = scalar_select %p35, 0, %s34
      %s37 = sadd.s32 1, %s26
      %s38 = scalar_select %p35, %s37, %s26
      %p39 = scmp.ge.s32.totalorder %s38, 1
      %s40 = scalar_select %p39, 0, %s38
      %s41 = sadd.s32 1, %s25
      %s42 = scalar_select %p39, %s41, %s25
      %p43 = scmp.ge.s32.totalorder %s42, 2
      %s44 = scalar_select %p43, 0, %s42
      %s45 = ssub.s32 %s25, %s44
      %s46 = ssub.s32 %s26, %s40
      %s47 = sor.u32 %s45, %s46
      %s48 = ssub.s32 %s27, %s36
      %s49 = sor.u32 %s47, %s48
      %p50 = scmp.eq.s32.totalorder %s49, 0
      %s52 = sadd.s32 %s51, 1
      %s53 = scalar_select %p50, %s51, %s52
      %p56 = pneg %p50
      %p57 = scmp.eq.s32.totalorder %s18, 1
      %p58 = por %p56, %p57
      %p59 = scmp.ne.s32.totalorder %s51, %s54
      %p60 = scmp.eq.s32.totalorder %s18, 0
      %p61 = por %p59, %p60
      %p62 = scmp.ne.s32.totalorder %s51, %s54
      %p63 = scmp.eq.s32.totalorder %s23, 1
      %p64 = por %p62, %p63
      %p65 = scmp.ne.s32.totalorder %s54, %s55
      %p66 = scmp.eq.s32.totalorder %s23, 0
      %p67 = por %p65, %p66
      %p68 = scmp.ne.s32.totalorder %s54, %s55
      %p69 = scmp.eq.s32.totalorder %s24, 1
      %p70 = por %p68, %p69
      %p72 = scmp.ne.s32.totalorder %s55, %s71
      %p73 = scmp.eq.s32.totalorder %s24, 0
      %p74 = por %p72, %p73
      %s76 = sadd.s32 %s75, 1
      %p79 = scmp.eq.s32.totalorder %s18, 1
      %p80 = scmp.ne.s32.totalorder %s75, %s77
      %p81 = scmp.eq.s32.totalorder %s18, 0
      %p82 = por %p80, %p81
      %p83 = scmp.ne.s32.totalorder %s75, %s77
      %p84 = scmp.eq.s32.totalorder %s23, 1
      %p85 = por %p83, %p84
      %p86 = scmp.ne.s32.totalorder %s77, %s78
      %p87 = scmp.eq.s32.totalorder %s23, 0
      %p88 = por %p86, %p87
      %p89 = scmp.ne.s32.totalorder %s77, %s78
      %p90 = scmp.eq.s32.totalorder %s24, 1
      %p91 = por %p89, %p90
      %p93 = scmp.ne.s32.totalorder %s78, %s92
      %p94 = scmp.eq.s32.totalorder %s24, 0
      %p95 = por %p93, %p94
      %s97 = sadd.s32 %s96, 1
      %p100 = scmp.eq.s32.totalorder %s18, 1
      %p101 = scmp.ne.s32.totalorder %s96, %s98
      %p102 = scmp.eq.s32.totalorder %s18, 0
      %p103 = por %p101, %p102
      %p104 = scmp.ne.s32.totalorder %s96, %s98
      %p105 = scmp.eq.s32.totalorder %s23, 1
      %p106 = por %p104, %p105
      %p107 = scmp.ne.s32.totalorder %s98, %s99
      %p108 = scmp.eq.s32.totalorder %s23, 0
      %p109 = por %p107, %p108
      %p110 = scmp.ne.s32.totalorder %s98, %s99
      %p111 = scmp.eq.s32.totalorder %s24, 1
      %p112 = por %p110, %p111
      %p114 = scmp.ne.s32.totalorder %s99, %s113
      %p115 = scmp.eq.s32.totalorder %s24, 0
      %p116 = por %p114, %p115
      %s118 = sadd.s32 %s117, 1
      %p121 = scmp.eq.s32.totalorder %s18, 1
      %p122 = scmp.ne.s32.totalorder %s117, %s119
      %p123 = scmp.eq.s32.totalorder %s18, 0
      %p124 = por %p122, %p123
      %p125 = scmp.ne.s32.totalorder %s117, %s119
      %p126 = scmp.eq.s32.totalorder %s23, 1
      %p127 = por %p125, %p126
      %p128 = scmp.ne.s32.totalorder %s119, %s120
      %p129 = scmp.eq.s32.totalorder %s23, 0
      %p130 = por %p128, %p129
      %p131 = scmp.ne.s32.totalorder %s119, %s120
      %p132 = scmp.eq.s32.totalorder %s24, 1
      %p133 = por %p131, %p132
      %p135 = scmp.ne.s32.totalorder %s120, %s134
      %p136 = scmp.eq.s32.totalorder %s24, 0
      %p137 = por %p135, %p136
      %s138 = ssub.s32 %s25, %s44
      %s139 = ssub.s32 %s26, %s40
      %s140 = sor.u32 %s138, %s139
      %s141 = ssub.s32 %s27, %s36
      %s142 = sor.u32 %s140, %s141
      %p143 = scmp.eq.s32.totalorder %s142, 0
      %s145 = sadd.s32 %s144, 1
      %s146 = scalar_select %p143, %s144, %s145
      %p149 = pneg %p143
      %p150 = scmp.eq.s32.totalorder %s18, 1
      %p151 = por %p149, %p150
      %p152 = scmp.ne.s32.totalorder %s144, %s147
      %p153 = scmp.eq.s32.totalorder %s18, 0
      %p154 = por %p152, %p153
      %p155 = scmp.ne.s32.totalorder %s144, %s147
      %p156 = scmp.eq.s32.totalorder %s23, 1
      %p157 = por %p155, %p156
      %p158 = scmp.ne.s32.totalorder %s147, %s148
      %p159 = scmp.eq.s32.totalorder %s23, 0
      %p160 = por %p158, %p159
      %p161 = scmp.ne.s32.totalorder %s147, %s148
      %p162 = scmp.eq.s32.totalorder %s24, 1
      %p163 = por %p161, %p162
      %p165 = scmp.ne.s32.totalorder %s148, %s164
      %p166 = scmp.eq.s32.totalorder %s24, 0
      %p167 = por %p165, %p166
      %p168 = scmp.le.s32.totalorder 1, %s18
      %p169 = scmp.lt.s32.totalorder %s18, 3
      %p170 = pnand %p168, %p169
      %p171 = pneg %p170
      // Predicated region
      $region9: #{diffusion_transformer_forward.4} parent=5 // pred_check
        _
      $region10: #{diffusion_transformer_forward.4} parent=5 // pred_check_branch
        %173 = sbr.rel (%p170) target = $region12
      $region11: #{diffusion_transformer_forward.4} parent=5 // pred_region
        %s174 = ssub.s32 %s18, 1
        // Predicated region
        $region13: #{diffusion_transformer_forward.4} parent=11 // pred_check
          %p175 = pneg %p88
        $region14: #{diffusion_transformer_forward.4} parent=11 // pred_check_branch
          %177 = sbr.rel (%p175) target = $region16
        $region15: #{diffusion_transformer_forward.4} parent=11 // pred_region
          %s179 = ssub.s32 16, 16
          %180 = vsyncadd [#allocation6], %s179
          %s182 = sshll.u32 [#allocation5], 4
          %s183 = int_to_ptr.vmem [resolvable:$true] %s182
          %185 = dma.hbm_to_vmem [thread:$0]  %s1, 16, %s183, [#allocation6]
        $region16: #{diffusion_transformer_forward.4} parent=11 // pred_fallthru
          _
        // Predicated region
        $region17: #{diffusion_transformer_forward.4} parent=11 // pred_check
          %p186 = pneg %p109
        $region18: #{diffusion_transformer_forward.4} parent=11 // pred_check_branch
          %188 = sbr.rel (%p186) target = $region20
        $region19: #{diffusion_transformer_forward.4} parent=11 // pred_region
          %s190 = ssub.s32 16, 16
          %191 = vsyncadd [#allocation6], %s190
          %s193 = sshll.u32 [#allocation7], 4
          %s194 = int_to_ptr.vmem [resolvable:$true] %s193
          %196 = dma.hbm_to_vmem [thread:$0]  %s2, 16, %s194, [#allocation6]
        $region20: #{diffusion_transformer_forward.4} parent=11 // pred_fallthru
          _
        // Predicated region
        $region21: #{diffusion_transformer_forward.4} parent=11 // pred_check
          %p197 = pneg %p130
        $region22: #{diffusion_transformer_forward.4} parent=11 // pred_check_branch
          %199 = sbr.rel (%p197) target = $region24
        $region23: #{diffusion_transformer_forward.4} parent=11 // pred_region
          %s201 = ssub.s32 128, 128
          %202 = vsyncadd [#allocation9], %s201
          %s203 = sshll.u32 [#allocation8], 4
          %s204 = int_to_ptr.vmem [resolvable:$true] %s203
          %209 = dma.hbm_to_vmem [thread:$0]  %s3, 128, %s204, [#allocation9], 64, 64, 4
        $region24: #{diffusion_transformer_forward.4} parent=11 // pred_fallthru
          _
      $region12: #{diffusion_transformer_forward.4} parent=5 // pred_fallthru
        _
      %p210 = scmp.lt.s32.totalorder %s18, 2
      // Predicated region
      $region25: #{diffusion_transformer_forward.4} parent=5 // pred_check
        %p211 = pneg %p210
      $region26: #{diffusion_transformer_forward.4} parent=5 // pred_check_branch
        %213 = sbr.rel (%p211) target = $region28
      $region27: #{diffusion_transformer_forward.4} parent=5 // pred_region
        // Predicated region
        $region29: #{diffusion_transformer_forward.4} parent=27 // pred_check
          %p214 = pneg %p61
        $region30: #{diffusion_transformer_forward.4} parent=27 // pred_check_branch
          %216 = sbr.rel (%p214) target = $region32
        $region31: #{diffusion_transformer_forward.4} parent=27 // pred_region
          %s217 = sand.u32 %s51, 1
          %s218 = scalar_lea.sflag [#allocation3], %s217
          %s219 = sand.u32 %s51, 1
          %s220 = smul.addr %s219, 32
          %s221 = scalar_lea.vmem [#allocation2], %s220
          %s222 = smul.u32 8, %s26
          %s224 = ssub.s32 512, 512
          %225 = vsyncadd %s218, %s224
          %s226 = sadd.s32 %s27, %s222
          %s227 = smul.addr %s25, 8
          %s228 = sadd.s32 %s226, %s227
          %s229 = smul.addr %s228, 64
          %s230 = scalar_lea.hbm %s0, %s229
          %s231 = sshll.u32 %s221, 4
          %s232 = int_to_ptr.vmem [resolvable:$true] %s231
          %237 = dma.hbm_to_vmem [thread:$0]  %s230, 512, %s232, %s218, 64, 64, 4
        $region32: #{diffusion_transformer_forward.4} parent=27 // pred_fallthru
          _
      $region28: #{diffusion_transformer_forward.4} parent=5 // pred_fallthru
        _
      %p238 = scmp.le.s32.totalorder 1, %s18
      %p239 = scmp.lt.s32.totalorder %s18, 3
      %p240 = pnand %p238, %p239
      %p241 = pneg %p240
      // Predicated region
      $region33: #{diffusion_transformer_forward.4} parent=5 // pred_check
        _
      $region34: #{diffusion_transformer_forward.4} parent=5 // pred_check_branch
        %243 = sbr.rel (%p240) target = $region36
      $region35: #{diffusion_transformer_forward.4} parent=5 // pred_region
        %s244 = ssub.s32 %s18, 1
        %s245 = sand.u32 %s54, 1
        %s246 = scalar_lea.sflag [#allocation3], %s245
        %s247 = sand.u32 %s54, 1
        %s248 = smul.addr %s247, 32
        %s249 = scalar_lea.vmem [#allocation2], %s248
        // Predicated region
        $region37: #{diffusion_transformer_forward.4} parent=35 // pred_check
          %p250 = pneg %p67
        $region38: #{diffusion_transformer_forward.4} parent=35 // pred_check_branch
          %252 = sbr.rel (%p250) target = $region40
        $region39: #{diffusion_transformer_forward.4} parent=35 // pred_region
          %253 = dma.done %s246, 512
        $region40: #{diffusion_transformer_forward.4} parent=35 // pred_fallthru
          _
        // Predicated region
        $region41: #{diffusion_transformer_forward.4} parent=35 // pred_check
          %p254 = pneg %p88
        $region42: #{diffusion_transformer_forward.4} parent=35 // pred_check_branch
          %256 = sbr.rel (%p254) target = $region44
        $region43: #{diffusion_transformer_forward.4} parent=35 // pred_region
          %257 = dma.done [#allocation6], 16
        $region44: #{diffusion_transformer_forward.4} parent=35 // pred_fallthru
          _
        // Predicated region
        $region45: #{diffusion_transformer_forward.4} parent=35 // pred_check
          %p258 = pneg %p109
        $region46: #{diffusion_transformer_forward.4} parent=35 // pred_check_branch
          %260 = sbr.rel (%p258) target = $region48
        $region47: #{diffusion_transformer_forward.4} parent=35 // pred_region
          %261 = dma.done [#allocation6], 16
        $region48: #{diffusion_transformer_forward.4} parent=35 // pred_fallthru
          _
        // Predicated region
        $region49: #{diffusion_transformer_forward.4} parent=35 // pred_check
          %p262 = pneg %p130
        $region50: #{diffusion_transformer_forward.4} parent=35 // pred_check_branch
          %264 = sbr.rel (%p262) target = $region52
        $region51: #{diffusion_transformer_forward.4} parent=35 // pred_region
          %265 = dma.done [#allocation9], 128
        $region52: #{diffusion_transformer_forward.4} parent=35 // pred_fallthru
          _
        %s266 = sand.u32 %s54, 1
        %s267 = scalar_lea.sflag [#allocation3], %s266
        %s268 = sand.u32 %s54, 1
        %s269 = smul.addr %s268, 32
        %s270 = scalar_lea.vmem [#allocation2], %s269
        %p271 = pneg %p67
        %p272 = pneg %p64
        %p273 = pneg %p88
        %p274 = pneg %p85
        %p275 = pneg %p109
        %p276 = pneg %p106
        %p277 = pneg %p130
        %p278 = pneg %p127
        %p279 = pneg %p160
        %p280 = pneg %p157
        %s281 = sand.u32 %s147, 1
        %s282 = scalar_lea.sflag [#allocation4], %s281
        %s283 = sand.u32 %s147, 1
        %s284 = smul.addr %s283, 32
        %s285 = scalar_lea.vmem [#allocation10], %s284
        %s286 = smul.u32 8, %s29
        %s287 = smul.u32 8, %s29
        %v289 = vld [vmem:[%s249] sm:$0xf]
        %v290 = vld [vmem:[%s249 + $0x4] sm:$0xf]
        %v291 = vld [vmem:[%s249 + $0x8] sm:$0xf]
        %v292 = vld [vmem:[%s249 + $0xc] sm:$0xf]
        %v293 = vld [vmem:[%s249 + $0x10] sm:$0xf]
        %v294 = vld [vmem:[%s249 + $0x14] sm:$0xf]
        %v295 = vld [vmem:[%s249 + $0x18] sm:$0xf]
        %v296 = vld [vmem:[%s249 + $0x1c] sm:$0xf]
        %v297 = vunpack.c.l.bf16 %v289
        %v298 = vunpack.c.l.bf16 %v290
        %v299 = vunpack.c.l.bf16 %v291
        %v300 = vunpack.c.l.bf16 %v292
        %v301 = vunpack.c.l.bf16 %v293
        %v302 = vunpack.c.l.bf16 %v294
        %v303 = vunpack.c.l.bf16 %v295
        %v304 = vunpack.c.l.bf16 %v296
        %v305 = vld [vmem:[#allocation5] sm:$0x1]
        %v306 = vld [vmem:[#allocation7] sm:$0x1]
        %vm307 = vcmask 130048
        %v308 = vsel %vm307, %v297, 0.0
        %309 = vadd.xlane.f32.xlu0 %v308
        %v310 = vpop.xlane.xlu0 %309
        %v311 = vsel %vm307, %v298, 0.0
        %312 = vadd.xlane.f32.xlu0 %v311
        %v313 = vpop.xlane.xlu0 %312
        %v314 = vsel %vm307, %v299, 0.0
        %315 = vadd.xlane.f32.xlu0 %v314
        %v316 = vpop.xlane.xlu0 %315
        %v317 = vsel %vm307, %v300, 0.0
        %318 = vadd.xlane.f32.xlu0 %v317
        %v319 = vpop.xlane.xlu0 %318
        %v320 = vsel %vm307, %v301, 0.0
        %321 = vadd.xlane.f32.xlu0 %v320
        %v322 = vpop.xlane.xlu0 %321
        %v323 = vsel %vm307, %v302, 0.0
        %324 = vadd.xlane.f32.xlu0 %v323
        %v325 = vpop.xlane.xlu0 %324
        %v326 = vsel %vm307, %v303, 0.0
        %327 = vadd.xlane.f32.xlu0 %v326
        %v328 = vpop.xlane.xlu0 %327
        %v329 = vsel %vm307, %v304, 0.0
        %330 = vadd.xlane.f32.xlu0 %v329
        %v331 = vpop.xlane.xlu0 %330
        %v332 = vrcp.pop 16.0
        %v333 = vmul.f32 %v310, %v332
        %v334 = vmul.f32 %v313, %v332
        %v335 = vmul.f32 %v316, %v332
        %v336 = vmul.f32 %v319, %v332
        %v337 = vmul.f32 %v322, %v332
        %v338 = vmul.f32 %v325, %v332
        %v339 = vmul.f32 %v328, %v332
        %v340 = vmul.f32 %v331, %v332
        %v341 = vsub.f32 %v297, %v333
        %v342 = vsub.f32 %v298, %v334
        %v343 = vsub.f32 %v299, %v335
        %v344 = vsub.f32 %v300, %v336
        %v345 = vsub.f32 %v301, %v337
        %v346 = vsub.f32 %v302, %v338
        %v347 = vsub.f32 %v303, %v339
        %v348 = vsub.f32 %v304, %v340
        %v349 = vmul.f32 %v341, %v341
        %v350 = vmul.f32 %v342, %v342
        %v351 = vmul.f32 %v343, %v343
        %v352 = vmul.f32 %v344, %v344
        %v353 = vmul.f32 %v345, %v345
        %v354 = vmul.f32 %v346, %v346
        %v355 = vmul.f32 %v347, %v347
        %v356 = vmul.f32 %v348, %v348
        %v357 = vsel %vm307, %v349, 0.0
        %358 = vadd.xlane.f32.xlu0 %v357
        %v359 = vpop.xlane.xlu0 %358
        %v360 = vsel %vm307, %v350, 0.0
        %361 = vadd.xlane.f32.xlu0 %v360
        %v362 = vpop.xlane.xlu0 %361
        %v363 = vsel %vm307, %v351, 0.0
        %364 = vadd.xlane.f32.xlu0 %v363
        %v365 = vpop.xlane.xlu0 %364
        %v366 = vsel %vm307, %v352, 0.0
        %367 = vadd.xlane.f32.xlu0 %v366
        %v368 = vpop.xlane.xlu0 %367
        %v369 = vsel %vm307, %v353, 0.0
        %370 = vadd.xlane.f32.xlu0 %v369
        %v371 = vpop.xlane.xlu0 %370
        %v372 = vsel %vm307, %v354, 0.0
        %373 = vadd.xlane.f32.xlu0 %v372
        %v374 = vpop.xlane.xlu0 %373
        %v375 = vsel %vm307, %v355, 0.0
        %376 = vadd.xlane.f32.xlu0 %v375
        %v377 = vpop.xlane.xlu0 %376
        %v378 = vsel %vm307, %v356, 0.0
        %379 = vadd.xlane.f32.xlu0 %v378
        %v380 = vpop.xlane.xlu0 %379
        %v381 = vmul.f32 %v359, %v332
        %v382 = vmul.f32 %v362, %v332
        %v383 = vmul.f32 %v365, %v332
        %v384 = vmul.f32 %v368, %v332
        %v385 = vmul.f32 %v371, %v332
        %v386 = vmul.f32 %v374, %v332
        %v387 = vmul.f32 %v377, %v332
        %v388 = vmul.f32 %v380, %v332
        %v389 = vadd.f32 %v381, 1e-05
        %v390 = vadd.f32 %v382, 1e-05
        %v391 = vadd.f32 %v383, 1e-05
        %v392 = vadd.f32 %v384, 1e-05
        %v393 = vadd.f32 %v385, 1e-05
        %v394 = vadd.f32 %v386, 1e-05
        %v395 = vadd.f32 %v387, 1e-05
        %v396 = vadd.f32 %v388, 1e-05
        %v397 = vrsqrt.pop %v389
        %v398 = vrsqrt.pop %v390
        %v399 = vrsqrt.pop %v391
        %v400 = vrsqrt.pop %v392
        %v401 = vrsqrt.pop %v393
        %v402 = vrsqrt.pop %v394
        %v403 = vrsqrt.pop %v395
        %v404 = vrsqrt.pop %v396
        %v405 = vmul.f32 %v341, %v397
        %v406 = vmul.f32 %v342, %v398
        %v407 = vmul.f32 %v343, %v399
        %v408 = vmul.f32 %v344, %v400
        %v409 = vmul.f32 %v345, %v401
        %v410 = vmul.f32 %v346, %v402
        %v411 = vmul.f32 %v347, %v403
        %v412 = vmul.f32 %v348, %v404
        %v414 = vlaneseq
        %v415 = vshrl.u32 %v414, 7
        %v416 = vsub.s32 0, %v415
        %v417 = vrot.slane %v305, %v416
        %v419 = vmul.f32 %v405, %v417
        %v420 = vmul.f32 %v406, %v417
        %v421 = vmul.f32 %v407, %v417
        %v422 = vmul.f32 %v408, %v417
        %v423 = vmul.f32 %v409, %v417
        %v424 = vmul.f32 %v410, %v417
        %v425 = vmul.f32 %v411, %v417
        %v426 = vmul.f32 %v412, %v417
        %v428 = vlaneseq
        %v429 = vshrl.u32 %v428, 7
        %v430 = vsub.s32 0, %v429
        %v431 = vrot.slane %v306, %v430
        %v433 = vadd.f32 %v419, %v431
        %v434 = vadd.f32 %v420, %v431
        %v435 = vadd.f32 %v421, %v431
        %v436 = vadd.f32 %v422, %v431
        %v437 = vadd.f32 %v423, %v431
        %v438 = vadd.f32 %v424, %v431
        %v439 = vadd.f32 %v425, %v431
        %v440 = vadd.f32 %v426, %v431
        %v441 = vpack.c.bf16 %v434, %v433
        %v442 = vpack.c.bf16 %v436, %v435
        %v443 = vpack.c.bf16 %v438, %v437
        %v444 = vpack.c.bf16 %v440, %v439
        %v445 = vld [vmem:[#allocation8] sm:$0xf]
        %v446 = vld [vmem:[#allocation8 + $0x4] sm:$0xf]
        %v449 = vunpack.c.l.b16 %v445
        %v450 = vunpack.c.l.b16 %v446
        %v451 = vpack.c.b16 %v450, %v449
        %v454 = vsel %vm307, %v441, 0
        %v457 = vsel %vm307, %v442, 0
        %v460 = vsel %vm307, %v443, 0
        %v463 = vsel %vm307, %v444, 0
        %465 = vmatprep.subr.bf16.mxu0 0
        %466 = vmatpush1.bf16.msra.mxu0 %v451
        %467 = vmatprep.subr.bf16.mxu0 0
        %468 = vmatpush1.bf16.msra.mxu0 0
        %469 = vmatprep.subr.bf16.mxu0 0
        %470 = vmatpush1.bf16.msra.mxu0 0
        %471 = vmatprep.subr.bf16.mxu0 0
        %472 = vmatpush1.bf16.msra.mxu0 0
        %473 = vmatprep.subr.bf16.mxu0 0
        %474 = vmatpush1.bf16.msra.mxu0 0
        %475 = vmatprep.subr.bf16.mxu0 0
        %476 = vmatpush1.bf16.msra.mxu0 0
        %477 = vmatprep.subr.bf16.mxu0 0
        %478 = vmatpush1.bf16.msra.mxu0 0
        %479 = vmatprep.subr.bf16.mxu0 0
        %480 = vmatpush1.bf16.msra.mxu0 0
        %481 = vmatprep.subr.bf16.mxu0 0
        %482 = vmatpush1.bf16.msra.mxu0 0
        %483 = vmatprep.subr.bf16.mxu0 0
        %484 = vmatpush1.bf16.msra.mxu0 0
        %485 = vmatprep.subr.bf16.mxu0 0
        %486 = vmatpush1.bf16.msra.mxu0 0
        %487 = vmatprep.subr.bf16.mxu0 0
        %488 = vmatpush1.bf16.msra.mxu0 0
        %489 = vmatprep.subr.bf16.mxu0 0
        %490 = vmatpush1.bf16.msra.mxu0 0
        %491 = vmatprep.subr.bf16.mxu0 0
        %492 = vmatpush1.bf16.msra.mxu0 0
        %493 = vmatprep.subr.bf16.mxu0 0
        %494 = vmatpush1.bf16.msra.mxu0 0
        %495 = vmatprep.subr.bf16.mxu0 0
        %496 = vmatpush1.bf16.msra.mxu0 0
        %497 = vmatprep.mubr.bf16.mxu0 0
        %498 = vmatmul.mubr.bf16.gmra.mrb[0].mxu0 %v454
        %v499 = vpop.f32.mrb[0].mxu0
        %v500 = vadd.f32 0.0, %v499
        %v501 = vpop.f32.mrb[0].mxu0
        %v502 = vpop.f32.mrb[0].mxu0
        %v503 = vadd.f32 0.0, %v502
        %v504 = vpop.f32.mrb[0].mxu0
        %505 = vmatprep.mubr.bf16.mxu0 0
        %506 = vmatmul.mubr.bf16.gmra.mrb[0].mxu0 %v457
        %v507 = vpop.f32.mrb[0].mxu0
        %v508 = vadd.f32 0.0, %v507
        %v509 = vpop.f32.mrb[0].mxu0
        %v510 = vpop.f32.mrb[0].mxu0
        %v511 = vadd.f32 0.0, %v510
        %v512 = vpop.f32.mrb[0].mxu0
        %513 = vmatprep.mubr.bf16.mxu0 0
        %514 = vmatmul.mubr.bf16.gmra.mrb[0].mxu0 %v460
        %v515 = vpop.f32.mrb[0].mxu0
        %v516 = vadd.f32 0.0, %v515
        %v517 = vpop.f32.mrb[0].mxu0
        %v518 = vpop.f32.mrb[0].mxu0
        %v519 = vadd.f32 0.0, %v518
        %v520 = vpop.f32.mrb[0].mxu0
        %521 = vmatprep.mubr.bf16.mxu0 0
        %522 = vmatmul.mubr.bf16.gmra.mrb[0].mxu0 %v463
        %v523 = vpop.f32.mrb[0].mxu0
        %v524 = vadd.f32 0.0, %v523
        %v525 = vpop.f32.mrb[0].mxu0
        %v526 = vpop.f32.mrb[0].mxu0
        %v527 = vadd.f32 0.0, %v526
        %v528 = vpop.f32.mrb[0].mxu0
        %529 = vdwg.mxu0
        %v530 = vpack.c.bf16 %v500, %v500
        %v531 = vpack.c.bf16 %v503, %v503
        %v532 = vpack.c.bf16 %v508, %v508
        %v533 = vpack.c.bf16 %v511, %v511
        %v534 = vpack.c.bf16 %v516, %v516
        %v535 = vpack.c.bf16 %v519, %v519
        %v536 = vpack.c.bf16 %v524, %v524
        %v537 = vpack.c.bf16 %v527, %v527
        %vm538 = vcmask 27648
        %539 = vst.msk [vmem:[%s285] sm:$0xf] %vm538, %v530
        %540 = vst.msk [vmem:[%s285 + $0x4] sm:$0xf] %vm538, %v531
        %541 = vst.msk [vmem:[%s285 + $0x8] sm:$0xf] %vm538, %v532
        %542 = vst.msk [vmem:[%s285 + $0xc] sm:$0xf] %vm538, %v533
        %543 = vst.msk [vmem:[%s285 + $0x10] sm:$0xf] %vm538, %v534
        %544 = vst.msk [vmem:[%s285 + $0x14] sm:$0xf] %vm538, %v535
        %545 = vst.msk [vmem:[%s285 + $0x18] sm:$0xf] %vm538, %v536
        %546 = vst.msk [vmem:[%s285 + $0x1c] sm:$0xf] %vm538, %v537
        %s547 = sand.u32 %s147, 1
        %s548 = scalar_lea.sflag [#allocation4], %s547
        %s549 = sand.u32 %s147, 1
        %s550 = smul.addr %s549, 32
        %s551 = scalar_lea.vmem [#allocation10], %s550
        // Predicated region
        $region53: #{diffusion_transformer_forward.4} parent=35 // pred_check
          %p552 = pneg %p157
        $region54: #{diffusion_transformer_forward.4} parent=35 // pred_check_branch
          %554 = sbr.rel (%p552) target = $region56
        $region55: #{diffusion_transformer_forward.4} parent=35 // pred_region
          %s555 = smul.u32 8, %s29
          %s557 = ssub.s32 512, 512
          %558 = vsyncadd %s548, %s557
          %s559 = sadd.s32 %s30, %s555
          %s560 = smul.addr %s28, 8
          %s561 = sadd.s32 %s559, %s560
          %s562 = smul.addr %s561, 64
          %s563 = scalar_lea.hbm %s4, %s562
          %s564 = sshll.u32 %s551, 4
          %s565 = int_to_ptr.vmem [resolvable:$true] %s564
          %570 = dma.vmem_to_hbm [thread:$0]  %s565, 512, %s563, %s548, 64, 64, 4
        $region56: #{diffusion_transformer_forward.4} parent=35 // pred_fallthru
          _
      $region36: #{diffusion_transformer_forward.4} parent=5 // pred_fallthru
        _
      %p571 = scmp.le.s32.totalorder 2, %s18
      // Predicated region
      $region57: #{diffusion_transformer_forward.4} parent=5 // pred_check
        %p572 = pneg %p571
      $region58: #{diffusion_transformer_forward.4} parent=5 // pred_check_branch
        %574 = sbr.rel (%p572) target = $region60
      $region59: #{diffusion_transformer_forward.4} parent=5 // pred_region
        %s575 = ssub.s32 %s18, 2
        // Predicated region
        $region61: #{diffusion_transformer_forward.4} parent=59 // pred_check
          %p576 = pneg %p163
        $region62: #{diffusion_transformer_forward.4} parent=59 // pred_check_branch
          %578 = sbr.rel (%p576) target = $region64
        $region63: #{diffusion_transformer_forward.4} parent=59 // pred_region
          %s579 = sand.u32 %s148, 1
          %s580 = scalar_lea.sflag [#allocation4], %s579
          %s581 = sand.u32 %s148, 1
          %s582 = smul.addr %s581, 32
          %s583 = scalar_lea.vmem [#allocation10], %s582
          %584 = dma.done %s580, 512
        $region64: #{diffusion_transformer_forward.4} parent=59 // pred_fallthru
          _
      $region60: #{diffusion_transformer_forward.4} parent=5 // pred_fallthru
        _
    $region6: #{diffusion_transformer_forward.4} parent=1 // loop_footer
      %s22 = sadd.s32 1, %s18
    $region7: #{diffusion_transformer_forward.4} parent=1 // loop_footer_branch
      %17 = sbr.rel target = $region3
    $region8: #{diffusion_transformer_forward.4} parent=1 // loop_exit
      _
    %585 = vsyncpa [#allocation3], 1
    %s586 = scalar_lea.sflag [#allocation3], 1
    %587 = vsyncpa %s586, 1
    %588 = vsyncpa [#allocation6], 1
    %589 = vsyncpa [#allocation9], 1
    %590 = vsyncpa [#allocation4], 1
    %s591 = scalar_lea.sflag [#allocation4], 1
    %592 = vsyncpa %s591, 1

// kernel: diffusion_transformer_forward.5
$region0: #{diffusion_transformer_forward.5}
  #allocation0 [shape = 'u32[]', space=smem, size = 0x4, offset = 0x4, fixed_abs, tag = 'smem constant byte address 0x4 - core index']
  #allocation1 [shape = 'u32[144,128]{1,0:T(1,128)}', space=vmem, size = 0x12000, scoped, tag = 'internal scratch']
  #allocation2 [shape = 'f32[8,32]{1,0:T(8,128)}', space=vmem, size = 0x1000, scoped, tag = 'scratch operand']
  %s0 = inlined_call_operand.hbm [shape: f32[2,8,32], index: 0, kind: input, shape index: {}, may-alias: {0,16}]
  %s1 = inlined_call_operand.hbm [shape: f32[2,8,32], index: 1, kind: input, shape index: {}]
  %s2 = inlined_call_operand.hbm [shape: bf16[2,4,8,8], index: 2, kind: input, shape index: {}]
  %s3 = inlined_call_operand.hbm [shape: f32[1,32], index: 3, kind: input, shape index: {}]
  %s4 = inlined_call_operand.hbm [shape: bf16[32,64], index: 4, kind: input, shape index: {}]
  %s5 = inlined_call_operand.hbm [shape: f32[1,32], index: 5, kind: input, shape index: {}]
  %s6 = inlined_call_operand.hbm [shape: bf16[32,128], index: 6, kind: input, shape index: {}]
  %s7 = inlined_call_operand.hbm [shape: f32[1,32], index: 7, kind: input, shape index: {}]
  %s8 = inlined_call_operand.hbm [shape: bf16[32,32], index: 8, kind: input, shape index: {}]
  %s9 = inlined_call_operand.hbm [shape: bf16[32,64], index: 9, kind: input, shape index: {}]
  %s10 = inlined_call_operand.hbm [shape: f32[1,64], index: 10, kind: input, shape index: {}]
  %s11 = inlined_call_operand.hbm [shape: f32[1,32], index: 11, kind: input, shape index: {}]
  %s12 = inlined_call_operand.hbm [shape: bf16[32,64], index: 12, kind: input, shape index: {}]
  %s13 = inlined_call_operand.hbm [shape: f32[1,32], index: 13, kind: input, shape index: {}]
  %s14 = inlined_call_operand.hbm [shape: bf16[32,192], index: 14, kind: input, shape index: {}]
  %s15 = inlined_call_operand.hbm [shape: bf16[64,32], index: 15, kind: input, shape index: {}]
  %s16 = inlined_call_operand.hbm [shape: f32[2,8,32], index: 16, kind: output, shape index: {}, may-alias: {0,16}]
  %s17 = sld [smem:[#allocation0]]
  $region161: #{diffusion_transformer_forward.5} parent=0
    _
  %s19 = ssub.s32 1, %s17
  %s20 = scalar_select 0, %s19, %s17
  $region1: #{diffusion_transformer_forward.5} parent=0
    #allocation3 [shape = 'u8[8192]{0}', space=vmem, size = 0x2000, scoped, tag = 'input window, operand 0']
    #allocation4 [shape = 's32[2]{0}', space=sflag, size = 0x8, scoped, tag = 'scoped memory for diffusion_transformer_forward.5']
    #allocation5 [shape = 's32[2]{0}', space=sflag, size = 0x8, scoped, tag = 'scoped memory for diffusion_transformer_forward.5']
    #allocation6 [shape = 'u8[8192]{0}', space=vmem, size = 0x2000, scoped, tag = 'input window, operand 1']
    #allocation7 [shape = 's32[2]{0}', space=sflag, size = 0x8, scoped, tag = 'scoped memory for diffusion_transformer_forward.5']
    #allocation8 [shape = 'u8[16384]{0}', space=vmem, size = 0x4000, scoped, tag = 'input window, operand 2']
    #allocation9 [shape = 'u8[512]{0}', space=vmem, size = 0x400, scoped, tag = 'input window, operand 3, single buffered']
    #allocation10 [shape = 's32[1]{0}', space=sflag, size = 0x4, scoped, tag = 'scoped memory for diffusion_transformer_forward.5']
    #allocation11 [shape = 'u8[8192]{0}', space=vmem, size = 0x2000, scoped, tag = 'input window, operand 4, single buffered']
    #allocation12 [shape = 'u8[512]{0}', space=vmem, size = 0x400, scoped, tag = 'input window, operand 5, single buffered']
    #allocation13 [shape = 's32[1]{0}', space=sflag, size = 0x4, scoped, tag = 'scoped memory for diffusion_transformer_forward.5']
    #allocation14 [shape = 'u8[8192]{0}', space=vmem, size = 0x2000, scoped, tag = 'input window, operand 6, single buffered']
    #allocation15 [shape = 'u8[512]{0}', space=vmem, size = 0x400, scoped, tag = 'input window, operand 7, single buffered']
    #allocation16 [shape = 's32[1]{0}', space=sflag, size = 0x4, scoped, tag = 'scoped memory for diffusion_transformer_forward.5']
    #allocation17 [shape = 'u8[8192]{0}', space=vmem, size = 0x2000, scoped, tag = 'input window, operand 8, single buffered']
    #allocation18 [shape = 'u8[8192]{0}', space=vmem, size = 0x2000, scoped, tag = 'input window, operand 9, single buffered']
    #allocation19 [shape = 's32[1]{0}', space=sflag, size = 0x4, scoped, tag = 'scoped memory for diffusion_transformer_forward.5']
    #allocation20 [shape = 'u8[512]{0}', space=vmem, size = 0x400, scoped, tag = 'input window, operand 10, single buffered']
    #allocation21 [shape = 'u8[512]{0}', space=vmem, size = 0x400, scoped, tag = 'input window, operand 11, single buffered']
    #allocation22 [shape = 's32[1]{0}', space=sflag, size = 0x4, scoped, tag = 'scoped memory for diffusion_transformer_forward.5']
    #allocation23 [shape = 'u8[8192]{0}', space=vmem, size = 0x2000, scoped, tag = 'input window, operand 12, single buffered']
    #allocation24 [shape = 'u8[512]{0}', space=vmem, size = 0x400, scoped, tag = 'input window, operand 13, single buffered']
    #allocation25 [shape = 's32[1]{0}', space=sflag, size = 0x4, scoped, tag = 'scoped memory for diffusion_transformer_forward.5']
    #allocation26 [shape = 'u8[16384]{0}', space=vmem, size = 0x4000, scoped, tag = 'input window, operand 14, single buffered']
    #allocation27 [shape = 'u8[16384]{0}', space=vmem, size = 0x4000, scoped, tag = 'input window, operand 15, single buffered']
    #allocation28 [shape = 's32[1]{0}', space=sflag, size = 0x4, scoped, tag = 'scoped memory for diffusion_transformer_forward.5']
    #allocation29 [shape = 'u8[8192]{0}', space=vmem, size = 0x2000, scoped, tag = 'output window, operand 0']
    %21 = vsyncpa [#allocation4], 0
    %s22 = scalar_lea.sflag [#allocation4], 1
    %23 = vsyncpa %s22, 0
    %24 = vsyncpa [#allocation7], 0
    %s25 = scalar_lea.sflag [#allocation7], 1
    %26 = vsyncpa %s25, 0
    %27 = vsyncpa [#allocation10], 0
    %28 = vsyncpa [#allocation13], 0
    %29 = vsyncpa [#allocation16], 0
    %30 = vsyncpa [#allocation19], 0
    %31 = vsyncpa [#allocation22], 0
    %32 = vsyncpa [#allocation25], 0
    %33 = vsyncpa [#allocation28], 0
    %34 = vsyncpa [#allocation5], 0
    %s35 = scalar_lea.sflag [#allocation5], 1
    %36 = vsyncpa %s35, 0
    loop: start=0, step=1, limit=4
    $region2: #{diffusion_transformer_forward.5} parent=1 // loop_pre_header
      _
    $region3: #{diffusion_transformer_forward.5} parent=1 // loop_header
      %s38 = sphi 0, %s42
      %p39 = scmp.ge.s32.totalorder %s38, 4
      %s48 = sphi 0, %s50
      %s51 = sphi 0, %s48
      %s52 = sphi 0, %s51
      %s68 = sphi 0, %s52
      %s74 = sphi 0, %s76
      %s77 = sphi 0, %s74
      %s78 = sphi 0, %s77
      %s94 = sphi 0, %s78
      %s100 = sphi 0, %s102
      %s103 = sphi 0, %s100
      %s104 = sphi 0, %s103
      %s120 = sphi 0, %s104
      %s124 = sphi 0, %s124
      %s126 = sphi 0, %s124
      %s127 = sphi 0, %s126
      %s141 = sphi 0, %s127
      %s145 = sphi 0, %s145
      %s147 = sphi 0, %s145
      %s148 = sphi 0, %s147
      %s162 = sphi 0, %s148
      %s166 = sphi 0, %s166
      %s168 = sphi 0, %s166
      %s169 = sphi 0, %s168
      %s183 = sphi 0, %s169
      %s187 = sphi 0, %s187
      %s189 = sphi 0, %s187
      %s190 = sphi 0, %s189
      %s204 = sphi 0, %s190
      %s208 = sphi 0, %s208
      %s210 = sphi 0, %s208
      %s211 = sphi 0, %s210
      %s225 = sphi 0, %s211
      %s229 = sphi 0, %s229
      %s231 = sphi 0, %s229
      %s232 = sphi 0, %s231
      %s246 = sphi 0, %s232
      %s250 = sphi 0, %s250
      %s252 = sphi 0, %s250
      %s253 = sphi 0, %s252
      %s267 = sphi 0, %s253
      %s271 = sphi 0, %s271
      %s273 = sphi 0, %s271
      %s274 = sphi 0, %s273
      %s288 = sphi 0, %s274
      %s292 = sphi 0, %s292
      %s294 = sphi 0, %s292
      %s295 = sphi 0, %s294
      %s309 = sphi 0, %s295
      %s313 = sphi 0, %s313
      %s315 = sphi 0, %s313
      %s316 = sphi 0, %s315
      %s330 = sphi 0, %s316
      %s334 = sphi 0, %s334
      %s336 = sphi 0, %s334
      %s337 = sphi 0, %s336
      %s351 = sphi 0, %s337
      %s355 = sphi 0, %s355
      %s357 = sphi 0, %s355
      %s358 = sphi 0, %s357
      %s372 = sphi 0, %s358
      %s376 = sphi 0, %s376
      %s378 = sphi 0, %s376
      %s379 = sphi 0, %s378
      %s393 = sphi 0, %s379
      %s399 = sphi 0, %s401
      %s402 = sphi 0, %s399
      %s403 = sphi 0, %s402
      %s419 = sphi 0, %s403
    $region4: #{diffusion_transformer_forward.5} parent=1 // loop_header_branch
      %41 = sbr.rel (%p39) target = $region8
    $region5: #{diffusion_transformer_forward.5} parent=1 // loop_body
      %s43 = ssub.s32 %s38, 1
      %s44 = ssub.s32 %s38, 2
      %s45 = sadd.s32 %s38, 1
      %s46 = ssub.s32 %s38, %s45
      %p47 = scmp.eq.s32.totalorder %s46, 0
      %s49 = sadd.s32 %s48, 1
      %s50 = scalar_select %p47, %s48, %s49
      %p53 = pneg %p47
      %p54 = scmp.eq.s32.totalorder %s38, 1
      %p55 = por %p53, %p54
      %p56 = scmp.ne.s32.totalorder %s48, %s51
      %p57 = scmp.eq.s32.totalorder %s38, 0
      %p58 = por %p56, %p57
      %p59 = scmp.ne.s32.totalorder %s48, %s51
      %p60 = scmp.eq.s32.totalorder %s43, 1
      %p61 = por %p59, %p60
      %p62 = scmp.ne.s32.totalorder %s51, %s52
      %p63 = scmp.eq.s32.totalorder %s43, 0
      %p64 = por %p62, %p63
      %p65 = scmp.ne.s32.totalorder %s51, %s52
      %p66 = scmp.eq.s32.totalorder %s44, 1
      %p67 = por %p65, %p66
      %p69 = scmp.ne.s32.totalorder %s52, %s68
      %p70 = scmp.eq.s32.totalorder %s44, 0
      %p71 = por %p69, %p70
      %s72 = ssub.s32 %s38, %s45
      %p73 = scmp.eq.s32.totalorder %s72, 0
      %s75 = sadd.s32 %s74, 1
      %s76 = scalar_select %p73, %s74, %s75
      %p79 = pneg %p73
      %p80 = scmp.eq.s32.totalorder %s38, 1
      %p81 = por %p79, %p80
      %p82 = scmp.ne.s32.totalorder %s74, %s77
      %p83 = scmp.eq.s32.totalorder %s38, 0
      %p84 = por %p82, %p83
      %p85 = scmp.ne.s32.totalorder %s74, %s77
      %p86 = scmp.eq.s32.totalorder %s43, 1
      %p87 = por %p85, %p86
      %p88 = scmp.ne.s32.totalorder %s77, %s78
      %p89 = scmp.eq.s32.totalorder %s43, 0
      %p90 = por %p88, %p89
      %p91 = scmp.ne.s32.totalorder %s77, %s78
      %p92 = scmp.eq.s32.totalorder %s44, 1
      %p93 = por %p91, %p92
      %p95 = scmp.ne.s32.totalorder %s78, %s94
      %p96 = scmp.eq.s32.totalorder %s44, 0
      %p97 = por %p95, %p96
      %s98 = ssub.s32 %s38, %s45
      %p99 = scmp.eq.s32.totalorder %s98, 0
      %s101 = sadd.s32 %s100, 1
      %s102 = scalar_select %p99, %s100, %s101
      %p105 = pneg %p99
      %p106 = scmp.eq.s32.totalorder %s38, 1
      %p107 = por %p105, %p106
      %p108 = scmp.ne.s32.totalorder %s100, %s103
      %p109 = scmp.eq.s32.totalorder %s38, 0
      %p110 = por %p108, %p109
      %p111 = scmp.ne.s32.totalorder %s100, %s103
      %p112 = scmp.eq.s32.totalorder %s43, 1
      %p113 = por %p111, %p112
      %p114 = scmp.ne.s32.totalorder %s103, %s104
      %p115 = scmp.eq.s32.totalorder %s43, 0
      %p116 = por %p114, %p115
      %p117 = scmp.ne.s32.totalorder %s103, %s104
      %p118 = scmp.eq.s32.totalorder %s44, 1
      %p119 = por %p117, %p118
      %p121 = scmp.ne.s32.totalorder %s104, %s120
      %p122 = scmp.eq.s32.totalorder %s44, 0
      %p123 = por %p121, %p122
      %s125 = sadd.s32 %s124, 1
      %p128 = scmp.eq.s32.totalorder %s38, 1
      %p129 = scmp.ne.s32.totalorder %s124, %s126
      %p130 = scmp.eq.s32.totalorder %s38, 0
      %p131 = por %p129, %p130
      %p132 = scmp.ne.s32.totalorder %s124, %s126
      %p133 = scmp.eq.s32.totalorder %s43, 1
      %p134 = por %p132, %p133
      %p135 = scmp.ne.s32.totalorder %s126, %s127
      %p136 = scmp.eq.s32.totalorder %s43, 0
      %p137 = por %p135, %p136
      %p138 = scmp.ne.s32.totalorder %s126, %s127
      %p139 = scmp.eq.s32.totalorder %s44, 1
      %p140 = por %p138, %p139
      %p142 = scmp.ne.s32.totalorder %s127, %s141
      %p143 = scmp.eq.s32.totalorder %s44, 0
      %p144 = por %p142, %p143
      %s146 = sadd.s32 %s145, 1
      %p149 = scmp.eq.s32.totalorder %s38, 1
      %p150 = scmp.ne.s32.totalorder %s145, %s147
      %p151 = scmp.eq.s32.totalorder %s38, 0
      %p152 = por %p150, %p151
      %p153 = scmp.ne.s32.totalorder %s145, %s147
      %p154 = scmp.eq.s32.totalorder %s43, 1
      %p155 = por %p153, %p154
      %p156 = scmp.ne.s32.totalorder %s147, %s148
      %p157 = scmp.eq.s32.totalorder %s43, 0
      %p158 = por %p156, %p157
      %p159 = scmp.ne.s32.totalorder %s147, %s148
      %p160 = scmp.eq.s32.totalorder %s44, 1
      %p161 = por %p159, %p160
      %p163 = scmp.ne.s32.totalorder %s148, %s162
      %p164 = scmp.eq.s32.totalorder %s44, 0
      %p165 = por %p163, %p164
      %s167 = sadd.s32 %s166, 1
      %p170 = scmp.eq.s32.totalorder %s38, 1
      %p171 = scmp.ne.s32.totalorder %s166, %s168
      %p172 = scmp.eq.s32.totalorder %s38, 0
      %p173 = por %p171, %p172
      %p174 = scmp.ne.s32.totalorder %s166, %s168
      %p175 = scmp.eq.s32.totalorder %s43, 1
      %p176 = por %p174, %p175
      %p177 = scmp.ne.s32.totalorder %s168, %s169
      %p178 = scmp.eq.s32.totalorder %s43, 0
      %p179 = por %p177, %p178
      %p180 = scmp.ne.s32.totalorder %s168, %s169
      %p181 = scmp.eq.s32.totalorder %s44, 1
      %p182 = por %p180, %p181
      %p184 = scmp.ne.s32.totalorder %s169, %s183
      %p185 = scmp.eq.s32.totalorder %s44, 0
      %p186 = por %p184, %p185
      %s188 = sadd.s32 %s187, 1
      %p191 = scmp.eq.s32.totalorder %s38, 1
      %p192 = scmp.ne.s32.totalorder %s187, %s189
      %p193 = scmp.eq.s32.totalorder %s38, 0
      %p194 = por %p192, %p193
      %p195 = scmp.ne.s32.totalorder %s187, %s189
      %p196 = scmp.eq.s32.totalorder %s43, 1
      %p197 = por %p195, %p196
      %p198 = scmp.ne.s32.totalorder %s189, %s190
      %p199 = scmp.eq.s32.totalorder %s43, 0
      %p200 = por %p198, %p199
      %p201 = scmp.ne.s32.totalorder %s189, %s190
      %p202 = scmp.eq.s32.totalorder %s44, 1
      %p203 = por %p201, %p202
      %p205 = scmp.ne.s32.totalorder %s190, %s204
      %p206 = scmp.eq.s32.totalorder %s44, 0
      %p207 = por %p205, %p206
      %s209 = sadd.s32 %s208, 1
      %p212 = scmp.eq.s32.totalorder %s38, 1
      %p213 = scmp.ne.s32.totalorder %s208, %s210
      %p214 = scmp.eq.s32.totalorder %s38, 0
      %p215 = por %p213, %p214
      %p216 = scmp.ne.s32.totalorder %s208, %s210
      %p217 = scmp.eq.s32.totalorder %s43, 1
      %p218 = por %p216, %p217
      %p219 = scmp.ne.s32.totalorder %s210, %s211
      %p220 = scmp.eq.s32.totalorder %s43, 0
      %p221 = por %p219, %p220
      %p222 = scmp.ne.s32.totalorder %s210, %s211
      %p223 = scmp.eq.s32.totalorder %s44, 1
      %p224 = por %p222, %p223
      %p226 = scmp.ne.s32.totalorder %s211, %s225
      %p227 = scmp.eq.s32.totalorder %s44, 0
      %p228 = por %p226, %p227
      %s230 = sadd.s32 %s229, 1
      %p233 = scmp.eq.s32.totalorder %s38, 1
      %p234 = scmp.ne.s32.totalorder %s229, %s231
      %p235 = scmp.eq.s32.totalorder %s38, 0
      %p236 = por %p234, %p235
      %p237 = scmp.ne.s32.totalorder %s229, %s231
      %p238 = scmp.eq.s32.totalorder %s43, 1
      %p239 = por %p237, %p238
      %p240 = scmp.ne.s32.totalorder %s231, %s232
      %p241 = scmp.eq.s32.totalorder %s43, 0
      %p242 = por %p240, %p241
      %p243 = scmp.ne.s32.totalorder %s231, %s232
      %p244 = scmp.eq.s32.totalorder %s44, 1
      %p245 = por %p243, %p244
      %p247 = scmp.ne.s32.totalorder %s232, %s246
      %p248 = scmp.eq.s32.totalorder %s44, 0
      %p249 = por %p247, %p248
      %s251 = sadd.s32 %s250, 1
      %p254 = scmp.eq.s32.totalorder %s38, 1
      %p255 = scmp.ne.s32.totalorder %s250, %s252
      %p256 = scmp.eq.s32.totalorder %s38, 0
      %p257 = por %p255, %p256
      %p258 = scmp.ne.s32.totalorder %s250, %s252
      %p259 = scmp.eq.s32.totalorder %s43, 1
      %p260 = por %p258, %p259
      %p261 = scmp.ne.s32.totalorder %s252, %s253
      %p262 = scmp.eq.s32.totalorder %s43, 0
      %p263 = por %p261, %p262
      %p264 = scmp.ne.s32.totalorder %s252, %s253
      %p265 = scmp.eq.s32.totalorder %s44, 1
      %p266 = por %p264, %p265
      %p268 = scmp.ne.s32.totalorder %s253, %s267
      %p269 = scmp.eq.s32.totalorder %s44, 0
      %p270 = por %p268, %p269
      %s272 = sadd.s32 %s271, 1
      %p275 = scmp.eq.s32.totalorder %s38, 1
      %p276 = scmp.ne.s32.totalorder %s271, %s273
      %p277 = scmp.eq.s32.totalorder %s38, 0
      %p278 = por %p276, %p277
      %p279 = scmp.ne.s32.totalorder %s271, %s273
      %p280 = scmp.eq.s32.totalorder %s43, 1
      %p281 = por %p279, %p280
      %p282 = scmp.ne.s32.totalorder %s273, %s274
      %p283 = scmp.eq.s32.totalorder %s43, 0
      %p284 = por %p282, %p283
      %p285 = scmp.ne.s32.totalorder %s273, %s274
      %p286 = scmp.eq.s32.totalorder %s44, 1
      %p287 = por %p285, %p286
      %p289 = scmp.ne.s32.totalorder %s274, %s288
      %p290 = scmp.eq.s32.totalorder %s44, 0
      %p291 = por %p289, %p290
      %s293 = sadd.s32 %s292, 1
      %p296 = scmp.eq.s32.totalorder %s38, 1
      %p297 = scmp.ne.s32.totalorder %s292, %s294
      %p298 = scmp.eq.s32.totalorder %s38, 0
      %p299 = por %p297, %p298
      %p300 = scmp.ne.s32.totalorder %s292, %s294
      %p301 = scmp.eq.s32.totalorder %s43, 1
      %p302 = por %p300, %p301
      %p303 = scmp.ne.s32.totalorder %s294, %s295
      %p304 = scmp.eq.s32.totalorder %s43, 0
      %p305 = por %p303, %p304
      %p306 = scmp.ne.s32.totalorder %s294, %s295
      %p307 = scmp.eq.s32.totalorder %s44, 1
      %p308 = por %p306, %p307
      %p310 = scmp.ne.s32.totalorder %s295, %s309
      %p311 = scmp.eq.s32.totalorder %s44, 0
      %p312 = por %p310, %p311
      %s314 = sadd.s32 %s313, 1
      %p317 = scmp.eq.s32.totalorder %s38, 1
      %p318 = scmp.ne.s32.totalorder %s313, %s315
      %p319 = scmp.eq.s32.totalorder %s38, 0
      %p320 = por %p318, %p319
      %p321 = scmp.ne.s32.totalorder %s313, %s315
      %p322 = scmp.eq.s32.totalorder %s43, 1
      %p323 = por %p321, %p322
      %p324 = scmp.ne.s32.totalorder %s315, %s316
      %p325 = scmp.eq.s32.totalorder %s43, 0
      %p326 = por %p324, %p325
      %p327 = scmp.ne.s32.totalorder %s315, %s316
      %p328 = scmp.eq.s32.totalorder %s44, 1
      %p329 = por %p327, %p328
      %p331 = scmp.ne.s32.totalorder %s316, %s330
      %p332 = scmp.eq.s32.totalorder %s44, 0
      %p333 = por %p331, %p332
      %s335 = sadd.s32 %s334, 1
      %p338 = scmp.eq.s32.totalorder %s38, 1
      %p339 = scmp.ne.s32.totalorder %s334, %s336
      %p340 = scmp.eq.s32.totalorder %s38, 0
      %p341 = por %p339, %p340
      %p342 = scmp.ne.s32.totalorder %s334, %s336
      %p343 = scmp.eq.s32.totalorder %s43, 1
      %p344 = por %p342, %p343
      %p345 = scmp.ne.s32.totalorder %s336, %s337
      %p346 = scmp.eq.s32.totalorder %s43, 0
      %p347 = por %p345, %p346
      %p348 = scmp.ne.s32.totalorder %s336, %s337
      %p349 = scmp.eq.s32.totalorder %s44, 1
      %p350 = por %p348, %p349
      %p352 = scmp.ne.s32.totalorder %s337, %s351
      %p353 = scmp.eq.s32.totalorder %s44, 0
      %p354 = por %p352, %p353
      %s356 = sadd.s32 %s355, 1
      %p359 = scmp.eq.s32.totalorder %s38, 1
      %p360 = scmp.ne.s32.totalorder %s355, %s357
      %p361 = scmp.eq.s32.totalorder %s38, 0
      %p362 = por %p360, %p361
      %p363 = scmp.ne.s32.totalorder %s355, %s357
      %p364 = scmp.eq.s32.totalorder %s43, 1
      %p365 = por %p363, %p364
      %p366 = scmp.ne.s32.totalorder %s357, %s358
      %p367 = scmp.eq.s32.totalorder %s43, 0
      %p368 = por %p366, %p367
      %p369 = scmp.ne.s32.totalorder %s357, %s358
      %p370 = scmp.eq.s32.totalorder %s44, 1
      %p371 = por %p369, %p370
      %p373 = scmp.ne.s32.totalorder %s358, %s372
      %p374 = scmp.eq.s32.totalorder %s44, 0
      %p375 = por %p373, %p374
      %s377 = sadd.s32 %s376, 1
      %p380 = scmp.eq.s32.totalorder %s38, 1
      %p381 = scmp.ne.s32.totalorder %s376, %s378
      %p382 = scmp.eq.s32.totalorder %s38, 0
      %p383 = por %p381, %p382
      %p384 = scmp.ne.s32.totalorder %s376, %s378
      %p385 = scmp.eq.s32.totalorder %s43, 1
      %p386 = por %p384, %p385
      %p387 = scmp.ne.s32.totalorder %s378, %s379
      %p388 = scmp.eq.s32.totalorder %s43, 0
      %p389 = por %p387, %p388
      %p390 = scmp.ne.s32.totalorder %s378, %s379
      %p391 = scmp.eq.s32.totalorder %s44, 1
      %p392 = por %p390, %p391
      %p394 = scmp.ne.s32.totalorder %s379, %s393
      %p395 = scmp.eq.s32.totalorder %s44, 0
      %p396 = por %p394, %p395
      %s397 = ssub.s32 %s38, %s45
      %p398 = scmp.eq.s32.totalorder %s397, 0
      %s400 = sadd.s32 %s399, 1
      %s401 = scalar_select %p398, %s399, %s400
      %p404 = pneg %p398
      %p405 = scmp.eq.s32.totalorder %s38, 1
      %p406 = por %p404, %p405
      %p407 = scmp.ne.s32.totalorder %s399, %s402
      %p408 = scmp.eq.s32.totalorder %s38, 0
      %p409 = por %p407, %p408
      %p410 = scmp.ne.s32.totalorder %s399, %s402
      %p411 = scmp.eq.s32.totalorder %s43, 1
      %p412 = por %p410, %p411
      %p413 = scmp.ne.s32.totalorder %s402, %s403
      %p414 = scmp.eq.s32.totalorder %s43, 0
      %p415 = por %p413, %p414
      %p416 = scmp.ne.s32.totalorder %s402, %s403
      %p417 = scmp.eq.s32.totalorder %s44, 1
      %p418 = por %p416, %p417
      %p420 = scmp.ne.s32.totalorder %s403, %s419
      %p421 = scmp.eq.s32.totalorder %s44, 0
      %p422 = por %p420, %p421
      %p423 = scmp.le.s32.totalorder 1, %s38
      %p424 = scmp.lt.s32.totalorder %s38, 3
      %p425 = pnand %p423, %p424
      %p426 = pneg %p425
      // Predicated region
      $region9: #{diffusion_transformer_forward.5} parent=5 // pred_check
        _
      $region10: #{diffusion_transformer_forward.5} parent=5 // pred_check_branch
        %428 = sbr.rel (%p425) target = $region12
      $region11: #{diffusion_transformer_forward.5} parent=5 // pred_region
        %s429 = ssub.s32 %s38, 1
        // Predicated region
        $region13: #{diffusion_transformer_forward.5} parent=11 // pred_check
          %p430 = pneg %p137
        $region14: #{diffusion_transformer_forward.5} parent=11 // pred_check_branch
          %432 = sbr.rel (%p430) target = $region16
        $region15: #{diffusion_transformer_forward.5} parent=11 // pred_region
          %s434 = ssub.s32 16, 16
          %435 = vsyncadd [#allocation10], %s434
          %s437 = sshll.u32 [#allocation9], 4
          %s438 = int_to_ptr.vmem [resolvable:$true] %s437
          %440 = dma.hbm_to_vmem [thread:$0]  %s3, 16, %s438, [#allocation10]
        $region16: #{diffusion_transformer_forward.5} parent=11 // pred_fallthru
          _
        // Predicated region
        $region17: #{diffusion_transformer_forward.5} parent=11 // pred_check
          %p441 = pneg %p158
        $region18: #{diffusion_transformer_forward.5} parent=11 // pred_check_branch
          %443 = sbr.rel (%p441) target = $region20
        $region19: #{diffusion_transformer_forward.5} parent=11 // pred_region
          %s445 = ssub.s32 256, 256
          %446 = vsyncadd [#allocation10], %s445
          %s447 = sshll.u32 [#allocation11], 4
          %s448 = int_to_ptr.vmem [resolvable:$true] %s447
          %453 = dma.hbm_to_vmem [thread:$0]  %s4, 256, %s448, [#allocation10], 64, 64, 4
        $region20: #{diffusion_transformer_forward.5} parent=11 // pred_fallthru
          _
        // Predicated region
        $region21: #{diffusion_transformer_forward.5} parent=11 // pred_check
          %p454 = pneg %p179
        $region22: #{diffusion_transformer_forward.5} parent=11 // pred_check_branch
          %456 = sbr.rel (%p454) target = $region24
        $region23: #{diffusion_transformer_forward.5} parent=11 // pred_region
          %s458 = ssub.s32 16, 16
          %459 = vsyncadd [#allocation13], %s458
          %s461 = sshll.u32 [#allocation12], 4
          %s462 = int_to_ptr.vmem [resolvable:$true] %s461
          %464 = dma.hbm_to_vmem [thread:$0]  %s5, 16, %s462, [#allocation13]
        $region24: #{diffusion_transformer_forward.5} parent=11 // pred_fallthru
          _
        // Predicated region
        $region25: #{diffusion_transformer_forward.5} parent=11 // pred_check
          %p465 = pneg %p200
        $region26: #{diffusion_transformer_forward.5} parent=11 // pred_check_branch
          %467 = sbr.rel (%p465) target = $region28
        $region27: #{diffusion_transformer_forward.5} parent=11 // pred_region
          %s469 = ssub.s32 256, 256
          %470 = vsyncadd [#allocation13], %s469
          %s471 = sshll.u32 [#allocation14], 4
          %s472 = int_to_ptr.vmem [resolvable:$true] %s471
          %477 = dma.hbm_to_vmem [thread:$0]  %s6, 256, %s472, [#allocation13], 64, 64, 4
        $region28: #{diffusion_transformer_forward.5} parent=11 // pred_fallthru
          _
        // Predicated region
        $region29: #{diffusion_transformer_forward.5} parent=11 // pred_check
          %p478 = pneg %p221
        $region30: #{diffusion_transformer_forward.5} parent=11 // pred_check_branch
          %480 = sbr.rel (%p478) target = $region32
        $region31: #{diffusion_transformer_forward.5} parent=11 // pred_region
          %s482 = ssub.s32 16, 16
          %483 = vsyncadd [#allocation16], %s482
          %s485 = sshll.u32 [#allocation15], 4
          %s486 = int_to_ptr.vmem [resolvable:$true] %s485
          %488 = dma.hbm_to_vmem [thread:$0]  %s7, 16, %s486, [#allocation16]
        $region32: #{diffusion_transformer_forward.5} parent=11 // pred_fallthru
          _
        // Predicated region
        $region33: #{diffusion_transformer_forward.5} parent=11 // pred_check
          %p489 = pneg %p242
        $region34: #{diffusion_transformer_forward.5} parent=11 // pred_check_branch
          %491 = sbr.rel (%p489) target = $region36
        $region35: #{diffusion_transformer_forward.5} parent=11 // pred_region
          %s493 = ssub.s32 256, 256
          %494 = vsyncadd [#allocation16], %s493
          %s495 = sshll.u32 [#allocation17], 4
          %s496 = int_to_ptr.vmem [resolvable:$true] %s495
          %501 = dma.hbm_to_vmem [thread:$0]  %s8, 256, %s496, [#allocation16], 64, 64, 4
        $region36: #{diffusion_transformer_forward.5} parent=11 // pred_fallthru
          _
        // Predicated region
        $region37: #{diffusion_transformer_forward.5} parent=11 // pred_check
          %p502 = pneg %p263
        $region38: #{diffusion_transformer_forward.5} parent=11 // pred_check_branch
          %504 = sbr.rel (%p502) target = $region40
        $region39: #{diffusion_transformer_forward.5} parent=11 // pred_region
          %s506 = ssub.s32 256, 256
          %507 = vsyncadd [#allocation19], %s506
          %s508 = sshll.u32 [#allocation18], 4
          %s509 = int_to_ptr.vmem [resolvable:$true] %s508
          %514 = dma.hbm_to_vmem [thread:$0]  %s9, 256, %s509, [#allocation19], 64, 64, 4
        $region40: #{diffusion_transformer_forward.5} parent=11 // pred_fallthru
          _
        // Predicated region
        $region41: #{diffusion_transformer_forward.5} parent=11 // pred_check
          %p515 = pneg %p284
        $region42: #{diffusion_transformer_forward.5} parent=11 // pred_check_branch
          %517 = sbr.rel (%p515) target = $region44
        $region43: #{diffusion_transformer_forward.5} parent=11 // pred_region
          %s519 = ssub.s32 16, 16
          %520 = vsyncadd [#allocation19], %s519
          %s522 = sshll.u32 [#allocation20], 4
          %s523 = int_to_ptr.vmem [resolvable:$true] %s522
          %525 = dma.hbm_to_vmem [thread:$0]  %s10, 16, %s523, [#allocation19]
        $region44: #{diffusion_transformer_forward.5} parent=11 // pred_fallthru
          _
        // Predicated region
        $region45: #{diffusion_transformer_forward.5} parent=11 // pred_check
          %p526 = pneg %p305
        $region46: #{diffusion_transformer_forward.5} parent=11 // pred_check_branch
          %528 = sbr.rel (%p526) target = $region48
        $region47: #{diffusion_transformer_forward.5} parent=11 // pred_region
          %s530 = ssub.s32 16, 16
          %531 = vsyncadd [#allocation22], %s530
          %s533 = sshll.u32 [#allocation21], 4
          %s534 = int_to_ptr.vmem [resolvable:$true] %s533
          %536 = dma.hbm_to_vmem [thread:$0]  %s11, 16, %s534, [#allocation22]
        $region48: #{diffusion_transformer_forward.5} parent=11 // pred_fallthru
          _
        // Predicated region
        $region49: #{diffusion_transformer_forward.5} parent=11 // pred_check
          %p537 = pneg %p326
        $region50: #{diffusion_transformer_forward.5} parent=11 // pred_check_branch
          %539 = sbr.rel (%p537) target = $region52
        $region51: #{diffusion_transformer_forward.5} parent=11 // pred_region
          %s541 = ssub.s32 256, 256
          %542 = vsyncadd [#allocation22], %s541
          %s543 = sshll.u32 [#allocation23], 4
          %s544 = int_to_ptr.vmem [resolvable:$true] %s543
          %549 = dma.hbm_to_vmem [thread:$0]  %s12, 256, %s544, [#allocation22], 64, 64, 4
        $region52: #{diffusion_transformer_forward.5} parent=11 // pred_fallthru
          _
        // Predicated region
        $region53: #{diffusion_transformer_forward.5} parent=11 // pred_check
          %p550 = pneg %p347
        $region54: #{diffusion_transformer_forward.5} parent=11 // pred_check_branch
          %552 = sbr.rel (%p550) target = $region56
        $region55: #{diffusion_transformer_forward.5} parent=11 // pred_region
          %s554 = ssub.s32 16, 16
          %555 = vsyncadd [#allocation25], %s554
          %s557 = sshll.u32 [#allocation24], 4
          %s558 = int_to_ptr.vmem [resolvable:$true] %s557
          %560 = dma.hbm_to_vmem [thread:$0]  %s13, 16, %s558, [#allocation25]
        $region56: #{diffusion_transformer_forward.5} parent=11 // pred_fallthru
          _
        // Predicated region
        $region57: #{diffusion_transformer_forward.5} parent=11 // pred_check
          %p561 = pneg %p368
        $region58: #{diffusion_transformer_forward.5} parent=11 // pred_check_branch
          %563 = sbr.rel (%p561) target = $region60
        $region59: #{diffusion_transformer_forward.5} parent=11 // pred_region
          %s565 = ssub.s32 512, 512
          %566 = vsyncadd [#allocation25], %s565
          %s567 = sshll.u32 [#allocation26], 4
          %s568 = int_to_ptr.vmem [resolvable:$true] %s567
          %573 = dma.hbm_to_vmem [thread:$0]  %s14, 512, %s568, [#allocation25], 128, 128, 8
        $region60: #{diffusion_transformer_forward.5} parent=11 // pred_fallthru
          _
        // Predicated region
        $region61: #{diffusion_transformer_forward.5} parent=11 // pred_check
          %p574 = pneg %p389
        $region62: #{diffusion_transformer_forward.5} parent=11 // pred_check_branch
          %576 = sbr.rel (%p574) target = $region64
        $region63: #{diffusion_transformer_forward.5} parent=11 // pred_region
          %s578 = ssub.s32 512, 512
          %579 = vsyncadd [#allocation28], %s578
          %s580 = sshll.u32 [#allocation27], 4
          %s581 = int_to_ptr.vmem [resolvable:$true] %s580
          %586 = dma.hbm_to_vmem [thread:$0]  %s15, 512, %s581, [#allocation28], 64, 64, 4
        $region64: #{diffusion_transformer_forward.5} parent=11 // pred_fallthru
          _
      $region12: #{diffusion_transformer_forward.5} parent=5 // pred_fallthru
        _
      %p587 = scmp.lt.s32.totalorder %s38, 2
      // Predicated region
      $region65: #{diffusion_transformer_forward.5} parent=5 // pred_check
        %p588 = pneg %p587
      $region66: #{diffusion_transformer_forward.5} parent=5 // pred_check_branch
        %590 = sbr.rel (%p588) target = $region68
      $region67: #{diffusion_transformer_forward.5} parent=5 // pred_region
        // Predicated region
        $region69: #{diffusion_transformer_forward.5} parent=67 // pred_check
          %p591 = pneg %p58
        $region70: #{diffusion_transformer_forward.5} parent=67 // pred_check_branch
          %593 = sbr.rel (%p591) target = $region72
        $region71: #{diffusion_transformer_forward.5} parent=67 // pred_region
          %s594 = sand.u32 %s48, 1
          %s595 = scalar_lea.sflag [#allocation4], %s594
          %s596 = sand.u32 %s48, 1
          %s597 = smul.addr %s596, 8
          %s598 = scalar_lea.vmem [#allocation3], %s597
          %s600 = ssub.s32 128, 128
          %601 = vsyncadd %s595, %s600
          %s602 = smul.addr %s38, 128
          %s603 = scalar_lea.hbm %s0, %s602
          %s605 = sshll.u32 %s598, 4
          %s606 = int_to_ptr.vmem [resolvable:$true] %s605
          %608 = dma.hbm_to_vmem [thread:$0]  %s603, 128, %s606, %s595
        $region72: #{diffusion_transformer_forward.5} parent=67 // pred_fallthru
          _
        // Predicated region
        $region73: #{diffusion_transformer_forward.5} parent=67 // pred_check
          %p609 = pneg %p84
        $region74: #{diffusion_transformer_forward.5} parent=67 // pred_check_branch
          %611 = sbr.rel (%p609) target = $region76
        $region75: #{diffusion_transformer_forward.5} parent=67 // pred_region
          %s612 = sand.u32 %s38, 1
          %s613 = scalar_lea.sflag [#allocation7], %s612
          %s614 = sand.u32 %s74, 1
          %s615 = smul.addr %s614, 8
          %s616 = scalar_lea.vmem [#allocation6], %s615
          %s618 = ssub.s32 128, 128
          %619 = vsyncadd %s613, %s618
          %s620 = smul.addr %s38, 128
          %s621 = scalar_lea.hbm %s1, %s620
          %s623 = sshll.u32 %s616, 4
          %s624 = int_to_ptr.vmem [resolvable:$true] %s623
          %626 = dma.hbm_to_vmem [thread:$0]  %s621, 128, %s624, %s613
        $region76: #{diffusion_transformer_forward.5} parent=67 // pred_fallthru
          _
        // Predicated region
        $region77: #{diffusion_transformer_forward.5} parent=67 // pred_check
          %p627 = pneg %p110
        $region78: #{diffusion_transformer_forward.5} parent=67 // pred_check_branch
          %629 = sbr.rel (%p627) target = $region80
        $region79: #{diffusion_transformer_forward.5} parent=67 // pred_region
          %s630 = sand.u32 %s38, 1
          %s631 = scalar_lea.sflag [#allocation7], %s630
          %s632 = sand.u32 %s100, 1
          %s633 = smul.addr %s632, 16
          %s634 = scalar_lea.vmem [#allocation8], %s633
          %s636 = ssub.s32 256, 256
          %637 = vsyncadd %s631, %s636
          %s638 = smul.addr %s38, 4
          %s639 = smul.addr %s638, 64
          %s640 = scalar_lea.hbm %s2, %s639
          %s641 = sshll.u32 %s634, 4
          %s642 = int_to_ptr.vmem [resolvable:$true] %s641
          %647 = dma.hbm_to_vmem [thread:$0]  %s640, 256, %s642, %s631, 64, 64, 4
        $region80: #{diffusion_transformer_forward.5} parent=67 // pred_fallthru
          _
      $region68: #{diffusion_transformer_forward.5} parent=5 // pred_fallthru
        _
      %p648 = scmp.le.s32.totalorder 1, %s38
      %p649 = scmp.lt.s32.totalorder %s38, 3
      %p650 = pnand %p648, %p649
      %p651 = pneg %p650
      // Predicated region
      $region81: #{diffusion_transformer_forward.5} parent=5 // pred_check
        _
      $region82: #{diffusion_transformer_forward.5} parent=5 // pred_check_branch
        %653 = sbr.rel (%p650) target = $region84
      $region83: #{diffusion_transformer_forward.5} parent=5 // pred_region
        %s654 = ssub.s32 %s38, 1
        %s655 = sand.u32 %s51, 1
        %s656 = scalar_lea.sflag [#allocation4], %s655
        %s657 = sand.u32 %s51, 1
        %s658 = smul.addr %s657, 8
        %s659 = scalar_lea.vmem [#allocation3], %s658
        // Predicated region
        $region85: #{diffusion_transformer_forward.5} parent=83 // pred_check
          %p660 = pneg %p64
        $region86: #{diffusion_transformer_forward.5} parent=83 // pred_check_branch
          %662 = sbr.rel (%p660) target = $region88
        $region87: #{diffusion_transformer_forward.5} parent=83 // pred_region
          %663 = dma.done %s656, 128
        $region88: #{diffusion_transformer_forward.5} parent=83 // pred_fallthru
          _
        %s664 = sand.u32 %s43, 1
        %s665 = scalar_lea.sflag [#allocation7], %s664
        %s666 = sand.u32 %s77, 1
        %s667 = smul.addr %s666, 8
        %s668 = scalar_lea.vmem [#allocation6], %s667
        // Predicated region
        $region89: #{diffusion_transformer_forward.5} parent=83 // pred_check
          %p669 = pneg %p90
        $region90: #{diffusion_transformer_forward.5} parent=83 // pred_check_branch
          %671 = sbr.rel (%p669) target = $region92
        $region91: #{diffusion_transformer_forward.5} parent=83 // pred_region
          %672 = dma.done %s665, 128
        $region92: #{diffusion_transformer_forward.5} parent=83 // pred_fallthru
          _
        %s673 = sand.u32 %s43, 1
        %s674 = scalar_lea.sflag [#allocation7], %s673
        %s675 = sand.u32 %s103, 1
        %s676 = smul.addr %s675, 16
        %s677 = scalar_lea.vmem [#allocation8], %s676
        // Predicated region
        $region93: #{diffusion_transformer_forward.5} parent=83 // pred_check
          %p678 = pneg %p116
        $region94: #{diffusion_transformer_forward.5} parent=83 // pred_check_branch
          %680 = sbr.rel (%p678) target = $region96
        $region95: #{diffusion_transformer_forward.5} parent=83 // pred_region
          %681 = dma.done %s674, 256
        $region96: #{diffusion_transformer_forward.5} parent=83 // pred_fallthru
          _
        // Predicated region
        $region97: #{diffusion_transformer_forward.5} parent=83 // pred_check
          %p682 = pneg %p137
        $region98: #{diffusion_transformer_forward.5} parent=83 // pred_check_branch
          %684 = sbr.rel (%p682) target = $region100
        $region99: #{diffusion_transformer_forward.5} parent=83 // pred_region
          %685 = dma.done [#allocation10], 16
        $region100: #{diffusion_transformer_forward.5} parent=83 // pred_fallthru
          _
        // Predicated region
        $region101: #{diffusion_transformer_forward.5} parent=83 // pred_check
          %p686 = pneg %p158
        $region102: #{diffusion_transformer_forward.5} parent=83 // pred_check_branch
          %688 = sbr.rel (%p686) target = $region104
        $region103: #{diffusion_transformer_forward.5} parent=83 // pred_region
          %689 = dma.done [#allocation10], 256
        $region104: #{diffusion_transformer_forward.5} parent=83 // pred_fallthru
          _
        // Predicated region
        $region105: #{diffusion_transformer_forward.5} parent=83 // pred_check
          %p690 = pneg %p179
        $region106: #{diffusion_transformer_forward.5} parent=83 // pred_check_branch
          %692 = sbr.rel (%p690) target = $region108
        $region107: #{diffusion_transformer_forward.5} parent=83 // pred_region
          %693 = dma.done [#allocation13], 16
        $region108: #{diffusion_transformer_forward.5} parent=83 // pred_fallthru
          _
        // Predicated region
        $region109: #{diffusion_transformer_forward.5} parent=83 // pred_check
          %p694 = pneg %p200
        $region110: #{diffusion_transformer_forward.5} parent=83 // pred_check_branch
          %696 = sbr.rel (%p694) target = $region112
        $region111: #{diffusion_transformer_forward.5} parent=83 // pred_region
          %697 = dma.done [#allocation13], 256
        $region112: #{diffusion_transformer_forward.5} parent=83 // pred_fallthru
          _
        // Predicated region
        $region113: #{diffusion_transformer_forward.5} parent=83 // pred_check
          %p698 = pneg %p221
        $region114: #{diffusion_transformer_forward.5} parent=83 // pred_check_branch
          %700 = sbr.rel (%p698) target = $region116
        $region115: #{diffusion_transformer_forward.5} parent=83 // pred_region
          %701 = dma.done [#allocation16], 16
        $region116: #{diffusion_transformer_forward.5} parent=83 // pred_fallthru
          _
        // Predicated region
        $region117: #{diffusion_transformer_forward.5} parent=83 // pred_check
          %p702 = pneg %p242
        $region118: #{diffusion_transformer_forward.5} parent=83 // pred_check_branch
          %704 = sbr.rel (%p702) target = $region120
        $region119: #{diffusion_transformer_forward.5} parent=83 // pred_region
          %705 = dma.done [#allocation16], 256
        $region120: #{diffusion_transformer_forward.5} parent=83 // pred_fallthru
          _
        // Predicated region
        $region121: #{diffusion_transformer_forward.5} parent=83 // pred_check
          %p706 = pneg %p263
        $region122: #{diffusion_transformer_forward.5} parent=83 // pred_check_branch
          %708 = sbr.rel (%p706) target = $region124
        $region123: #{diffusion_transformer_forward.5} parent=83 // pred_region
          %709 = dma.done [#allocation19], 256
        $region124: #{diffusion_transformer_forward.5} parent=83 // pred_fallthru
          _
        // Predicated region
        $region125: #{diffusion_transformer_forward.5} parent=83 // pred_check
          %p710 = pneg %p284
        $region126: #{diffusion_transformer_forward.5} parent=83 // pred_check_branch
          %712 = sbr.rel (%p710) target = $region128
        $region127: #{diffusion_transformer_forward.5} parent=83 // pred_region
          %713 = dma.done [#allocation19], 16
        $region128: #{diffusion_transformer_forward.5} parent=83 // pred_fallthru
          _
        // Predicated region
        $region129: #{diffusion_transformer_forward.5} parent=83 // pred_check
          %p714 = pneg %p305
        $region130: #{diffusion_transformer_forward.5} parent=83 // pred_check_branch
          %716 = sbr.rel (%p714) target = $region132
        $region131: #{diffusion_transformer_forward.5} parent=83 // pred_region
          %717 = dma.done [#allocation22], 16
        $region132: #{diffusion_transformer_forward.5} parent=83 // pred_fallthru
          _
        // Predicated region
        $region133: #{diffusion_transformer_forward.5} parent=83 // pred_check
          %p718 = pneg %p326
        $region134: #{diffusion_transformer_forward.5} parent=83 // pred_check_branch
          %720 = sbr.rel (%p718) target = $region136
        $region135: #{diffusion_transformer_forward.5} parent=83 // pred_region
          %721 = dma.done [#allocation22], 256
        $region136: #{diffusion_transformer_forward.5} parent=83 // pred_fallthru
          _
        // Predicated region
        $region137: #{diffusion_transformer_forward.5} parent=83 // pred_check
          %p722 = pneg %p347
        $region138: #{diffusion_transformer_forward.5} parent=83 // pred_check_branch
          %724 = sbr.rel (%p722) target = $region140
        $region139: #{diffusion_transformer_forward.5} parent=83 // pred_region
          %725 = dma.done [#allocation25], 16
        $region140: #{diffusion_transformer_forward.5} parent=83 // pred_fallthru
          _
        // Predicated region
        $region141: #{diffusion_transformer_forward.5} parent=83 // pred_check
          %p726 = pneg %p368
        $region142: #{diffusion_transformer_forward.5} parent=83 // pred_check_branch
          %728 = sbr.rel (%p726) target = $region144
        $region143: #{diffusion_transformer_forward.5} parent=83 // pred_region
          %729 = dma.done [#allocation25], 512
        $region144: #{diffusion_transformer_forward.5} parent=83 // pred_fallthru
          _
        // Predicated region
        $region145: #{diffusion_transformer_forward.5} parent=83 // pred_check
          %p730 = pneg %p389
        $region146: #{diffusion_transformer_forward.5} parent=83 // pred_check_branch
          %732 = sbr.rel (%p730) target = $region148
        $region147: #{diffusion_transformer_forward.5} parent=83 // pred_region
          %733 = dma.done [#allocation28], 512
        $region148: #{diffusion_transformer_forward.5} parent=83 // pred_fallthru
          _
        %s734 = sand.u32 %s51, 1
        %s735 = scalar_lea.sflag [#allocation4], %s734
        %s736 = sand.u32 %s51, 1
        %s737 = smul.addr %s736, 8
        %s738 = scalar_lea.vmem [#allocation3], %s737
        %p739 = pneg %p64
        %p740 = pneg %p61
        %s741 = sand.u32 %s43, 1
        %s742 = scalar_lea.sflag [#allocation7], %s741
        %s743 = sand.u32 %s77, 1
        %s744 = smul.addr %s743, 8
        %s745 = scalar_lea.vmem [#allocation6], %s744
        %p746 = pneg %p90
        %p747 = pneg %p87
        %s748 = sand.u32 %s43, 1
        %s749 = scalar_lea.sflag [#allocation7], %s748
        %s750 = sand.u32 %s103, 1
        %s751 = smul.addr %s750, 16
        %s752 = scalar_lea.vmem [#allocation8], %s751
        %p753 = pneg %p116
        %p754 = pneg %p113
        %p755 = pneg %p137
        %p756 = pneg %p134
        %p757 = pneg %p158
        %p758 = pneg %p155
        %p759 = pneg %p179
        %p760 = pneg %p176
        %p761 = pneg %p200
        %p762 = pneg %p197
        %p763 = pneg %p221
        %p764 = pneg %p218
        %p765 = pneg %p242
        %p766 = pneg %p239
        %p767 = pneg %p263
        %p768 = pneg %p260
        %p769 = pneg %p284
        %p770 = pneg %p281
        %p771 = pneg %p305
        %p772 = pneg %p302
        %p773 = pneg %p326
        %p774 = pneg %p323
        %p775 = pneg %p347
        %p776 = pneg %p344
        %p777 = pneg %p368
        %p778 = pneg %p365
        %p779 = pneg %p389
        %p780 = pneg %p386
        %p781 = pneg %p415
        %p782 = pneg %p412
        %s783 = sand.u32 %s402, 1
        %s784 = scalar_lea.sflag [#allocation5], %s783
        %s785 = sand.u32 %s402, 1
        %s786 = smul.addr %s785, 8
        %s787 = scalar_lea.vmem [#allocation29], %s786
        %v789 = vld [vmem:[%s659] sm:$0xff]
        %v790 = vld [vmem:[%s668] sm:$0xff]
        %v791 = vpack.c.bf16 %v790, %v790
        %v792 = vld [vmem:[#allocation18] sm:$0xf]
        %v793 = vld [vmem:[#allocation18 + $0x4] sm:$0xf]
        %v794 = vld [vmem:[#allocation18 + $0x8] sm:$0xf]
        %v795 = vld [vmem:[#allocation18 + $0xc] sm:$0xf]
        %v796 = vld [vmem:[#allocation20] sm:$0x1]
        %v798 = vlaneseq
        %v799 = vshrl.u32 %v798, 7
        %v800 = vsub.s32 0, %v799
        %v801 = vrot.slane %v796, %v800
        %v807 = vunpack.c.l.b16 %v792
        %v808 = vunpack.c.l.b16 %v793
        %v809 = vunpack.c.l.b16 %v794
        %v810 = vunpack.c.l.b16 %v795
        %v811 = vpack.c.b16 %v808, %v807
        %v812 = vpack.c.b16 %v810, %v809
        %vm815 = vcmask 261120
        %v817 = vsel %vm815, %v791, 0
        %819 = vmatprep.subr.bf16.mxu0 0
        %820 = vmatpush1.bf16.msra.mxu0 %v811
        %821 = vmatprep.subr.bf16.mxu0 0
        %822 = vmatpush1.bf16.msra.mxu0 %v812
        %823 = vmatprep.subr.bf16.mxu0 0
        %824 = vmatpush1.bf16.msra.mxu0 0
        %825 = vmatprep.subr.bf16.mxu0 0
        %826 = vmatpush1.bf16.msra.mxu0 0
        %827 = vmatprep.subr.bf16.mxu0 0
        %828 = vmatpush1.bf16.msra.mxu0 0
        %829 = vmatprep.subr.bf16.mxu0 0
        %830 = vmatpush1.bf16.msra.mxu0 0
        %831 = vmatprep.subr.bf16.mxu0 0
        %832 = vmatpush1.bf16.msra.mxu0 0
        %833 = vmatprep.subr.bf16.mxu0 0
        %834 = vmatpush1.bf16.msra.mxu0 0
        %835 = vmatprep.subr.bf16.mxu0 0
        %836 = vmatpush1.bf16.msra.mxu0 0
        %837 = vmatprep.subr.bf16.mxu0 0
        %838 = vmatpush1.bf16.msra.mxu0 0
        %839 = vmatprep.subr.bf16.mxu0 0
        %840 = vmatpush1.bf16.msra.mxu0 0
        %841 = vmatprep.subr.bf16.mxu0 0
        %842 = vmatpush1.bf16.msra.mxu0 0
        %843 = vmatprep.subr.bf16.mxu0 0
        %844 = vmatpush1.bf16.msra.mxu0 0
        %845 = vmatprep.subr.bf16.mxu0 0
        %846 = vmatpush1.bf16.msra.mxu0 0
        %847 = vmatprep.subr.bf16.mxu0 0
        %848 = vmatpush1.bf16.msra.mxu0 0
        %849 = vmatprep.subr.bf16.mxu0 0
        %850 = vmatpush1.bf16.msra.mxu0 0
        %851 = vmatprep.mubr.bf16.mxu0 0
        %852 = vmatmul.mubr.bf16.gmra.mrb[0].mxu0 %v817
        %v853 = vpop.f32.mrb[0].mxu0
        %v854 = vadd.f32 %v801, %v853
        %v855 = vpop.f32.mrb[0].mxu0
        %v856 = vpop.f32.mrb[0].mxu0
        %v857 = vpop.f32.mrb[0].mxu0
        %858 = vdwg.mxu0
        %v859 = vxor.u32 %v854, 2147483648
        %v860 = vmul.f32 %v859, 1.442695
        %v861 = vpow.pop %v860
        %v862 = vadd.f32 %v861, 1.0
        %v863 = vrcp.pop %v862
        %v864 = vmul.f32 1.0, %v863
        %v865 = vld [vmem:[#allocation9] sm:$0x1]
        %v866 = vld [vmem:[#allocation11] sm:$0xf]
        %v867 = vld [vmem:[#allocation11 + $0x4] sm:$0xf]
        %v868 = vld [vmem:[#allocation11 + $0x8] sm:$0xf]
        %v869 = vld [vmem:[#allocation11 + $0xc] sm:$0xf]
        %v870 = vld [vmem:[#allocation12] sm:$0x1]
        %v871 = vsel %vm815, %v789, 0.0
        %872 = vadd.xlane.f32.xlu0 %v871
        %v873 = vpop.xlane.xlu0 %872
        %v874 = vrcp.pop 32.0
        %v875 = vmul.f32 %v873, %v874
        %v876 = vsub.f32 %v789, %v875
        %v877 = vmul.f32 %v876, %v876
        %v878 = vsel %vm815, %v877, 0.0
        %879 = vadd.xlane.f32.xlu0 %v878
        %v880 = vpop.xlane.xlu0 %879
        %v881 = vmul.f32 %v880, %v874
        %v882 = vadd.f32 %v881, 1e-05
        %v883 = vrsqrt.pop %v882
        %v884 = vmul.f32 %v876, %v883
        %v885 = vsel %vm815, %v790, 0.0
        %886 = vadd.xlane.f32.xlu0 %v885
        %v887 = vpop.xlane.xlu0 %886
        %v888 = vmul.f32 %v887, %v874
        %v889 = vsub.f32 %v790, %v888
        %v890 = vmul.f32 %v889, %v889
        %v891 = vsel %vm815, %v890, 0.0
        %892 = vadd.xlane.f32.xlu0 %v891
        %v893 = vpop.xlane.xlu0 %892
        %v894 = vmul.f32 %v893, %v874
        %v895 = vadd.f32 %v894, 1e-05
        %v896 = vrsqrt.pop %v895
        %v897 = vmul.f32 %v889, %v896
        %v899 = vlaneseq
        %v900 = vshrl.u32 %v899, 7
        %v901 = vsub.s32 0, %v900
        %v902 = vrot.slane %v865, %v901
        %v904 = vmul.f32 %v897, %v902
        %v905 = vpack.c.bf16 %v904, %v904
        %v910 = vunpack.c.l.b16 %v866
        %v911 = vunpack.c.l.b16 %v867
        %v912 = vunpack.c.l.b16 %v868
        %v913 = vunpack.c.l.b16 %v869
        %v914 = vpack.c.b16 %v911, %v910
        %v915 = vpack.c.b16 %v913, %v912
        %v919 = vsel %vm815, %v905, 0
        %921 = vmatprep.subr.bf16.mxu0 0
        %922 = vmatpush1.bf16.msra.mxu0 %v914
        %923 = vmatprep.subr.bf16.mxu0 0
        %924 = vmatpush1.bf16.msra.mxu0 %v915
        %925 = vmatprep.subr.bf16.mxu0 0
        %926 = vmatpush1.bf16.msra.mxu0 0
        %927 = vmatprep.subr.bf16.mxu0 0
        %928 = vmatpush1.bf16.msra.mxu0 0
        %929 = vmatprep.subr.bf16.mxu0 0
        %930 = vmatpush1.bf16.msra.mxu0 0
        %931 = vmatprep.subr.bf16.mxu0 0
        %932 = vmatpush1.bf16.msra.mxu0 0
        %933 = vmatprep.subr.bf16.mxu0 0
        %934 = vmatpush1.bf16.msra.mxu0 0
        %935 = vmatprep.subr.bf16.mxu0 0
        %936 = vmatpush1.bf16.msra.mxu0 0
        %937 = vmatprep.subr.bf16.mxu0 0
        %938 = vmatpush1.bf16.msra.mxu0 0
        %939 = vmatprep.subr.bf16.mxu0 0
        %940 = vmatpush1.bf16.msra.mxu0 0
        %941 = vmatprep.subr.bf16.mxu0 0
        %942 = vmatpush1.bf16.msra.mxu0 0
        %943 = vmatprep.subr.bf16.mxu0 0
        %944 = vmatpush1.bf16.msra.mxu0 0
        %945 = vmatprep.subr.bf16.mxu0 0
        %946 = vmatpush1.bf16.msra.mxu0 0
        %947 = vmatprep.subr.bf16.mxu0 0
        %948 = vmatpush1.bf16.msra.mxu0 0
        %949 = vmatprep.subr.bf16.mxu0 0
        %950 = vmatpush1.bf16.msra.mxu0 0
        %951 = vmatprep.subr.bf16.mxu0 0
        %952 = vmatpush1.bf16.msra.mxu0 0
        %953 = vmatprep.mubr.bf16.mxu0 0
        %954 = vmatmul.mubr.bf16.gmra.mrb[0].mxu0 %v919
        %v955 = vpop.f32.mrb[0].mxu0
        %v956 = vadd.f32 0.0, %v955
        %v957 = vpop.f32.mrb[0].mxu0
        %v958 = vpop.f32.mrb[0].mxu0
        %v959 = vpop.f32.mrb[0].mxu0
        %960 = vdwg.mxu0
        %v962 = vlaneseq
        %v963 = vshrl.u32 %v962, 7
        %v964 = vsub.s32 0, %v963
        %v965 = vrot.slane %v870, %v964
        %v967 = vadd.f32 %v956, %v965
        %v968 = vxor.u32 %v967, 2147483648
        %v969 = vmul.f32 %v968, 1.442695
        %v970 = vpow.pop %v969
        %v971 = vadd.f32 %v970, 1.0
        %v972 = vrcp.pop %v971
        %v973 = vmul.f32 1.0, %v972
        %v974 = vmul.f32 %v884, %v973
        %976 = vrot.lane.b32.xlu0 %v956, 96
        %v977 = vpop.permute.xlu0 %976
        %v979 = vadd.f32 %v974, %v977
        %v980 = vpack.c.bf16 %v979, %v979
        %v981 = vld [vmem:[#allocation14] sm:$0xf]
        %v982 = vld [vmem:[#allocation14 + $0x4] sm:$0xf]
        %v983 = vld [vmem:[#allocation14 + $0x8] sm:$0xf]
        %v984 = vld [vmem:[#allocation14 + $0xc] sm:$0xf]
        %v989 = vunpack.c.l.b16 %v981
        %v990 = vunpack.c.l.b16 %v982
        %v991 = vunpack.c.l.b16 %v983
        %v992 = vunpack.c.l.b16 %v984
        %v993 = vpack.c.b16 %v990, %v989
        %v994 = vpack.c.b16 %v992, %v991
        %v998 = vsel %vm815, %v980, 0
        %1000 = vmatprep.subr.bf16.mxu0 0
        %1001 = vmatpush1.bf16.msra.mxu0 %v993
        %1002 = vmatprep.subr.bf16.mxu0 0
        %1003 = vmatpush1.bf16.msra.mxu0 %v994
        %1004 = vmatprep.subr.bf16.mxu0 0
        %1005 = vmatpush1.bf16.msra.mxu0 0
        %1006 = vmatprep.subr.bf16.mxu0 0
        %1007 = vmatpush1.bf16.msra.mxu0 0
        %1008 = vmatprep.subr.bf16.mxu0 0
        %1009 = vmatpush1.bf16.msra.mxu0 0
        %1010 = vmatprep.subr.bf16.mxu0 0
        %1011 = vmatpush1.bf16.msra.mxu0 0
        %1012 = vmatprep.subr.bf16.mxu0 0
        %1013 = vmatpush1.bf16.msra.mxu0 0
        %1014 = vmatprep.subr.bf16.mxu0 0
        %1015 = vmatpush1.bf16.msra.mxu0 0
        %1016 = vmatprep.subr.bf16.mxu0 0
        %1017 = vmatpush1.bf16.msra.mxu0 0
        %1018 = vmatprep.subr.bf16.mxu0 0
        %1019 = vmatpush1.bf16.msra.mxu0 0
        %1020 = vmatprep.subr.bf16.mxu0 0
        %1021 = vmatpush1.bf16.msra.mxu0 0
        %1022 = vmatprep.subr.bf16.mxu0 0
        %1023 = vmatpush1.bf16.msra.mxu0 0
        %1024 = vmatprep.subr.bf16.mxu0 0
        %1025 = vmatpush1.bf16.msra.mxu0 0
        %1026 = vmatprep.subr.bf16.mxu0 0
        %1027 = vmatpush1.bf16.msra.mxu0 0
        %1028 = vmatprep.subr.bf16.mxu0 0
        %1029 = vmatpush1.bf16.msra.mxu0 0
        %1030 = vmatprep.subr.bf16.mxu0 0
        %1031 = vmatpush1.bf16.msra.mxu0 0
        %1032 = vmatprep.mubr.bf16.mxu0 0
        %1033 = vmatmul.mubr.bf16.gmra.mrb[0].mxu0 %v998
        %v1034 = vpop.f32.mrb[0].mxu0
        %v1035 = vadd.f32 0.0, %v1034
        %v1036 = vpop.f32.mrb[0].mxu0
        %v1037 = vpop.f32.mrb[0].mxu0
        %v1038 = vpop.f32.mrb[0].mxu0
        %1039 = vdwg.mxu0
        %v1040 = vld [vmem:[#allocation15] sm:$0x1]
        %v1042 = vlaneseq
        %v1043 = vshrl.u32 %v1042, 7
        %v1044 = vsub.s32 0, %v1043
        %v1045 = vrot.slane %v1040, %v1044
        %v1047 = vadd.f32 %v1035, %v1045
        %v1048 = vxor.u32 %v1035, 2147483648
        %v1049 = vmul.f32 %v1048, 1.442695
        %v1050 = vpow.pop %v1049
        %v1051 = vadd.f32 %v1050, 1.0
        %v1052 = vrcp.pop %v1051
        %v1053 = vmul.f32 1.0, %v1052
        %v1054 = vmul.f32 %v1047, 0.35355338
        %v1055 = vpack.c.bf16 %v1054, %v1054
        %v1056 = vpack.c.bf16 %v1035, %v1035
        %v1057 = vld [vmem:[%s677] sm:$0xf]
        %v1058 = vunpack.c.l.bf16 %v1057
        %1060 = vrot.lane.b32.xlu0 %v1056, 96
        %v1061 = vpop.permute.xlu0 %1060
        %vm1062 = vcmask 64512
        %v1064 = vsel %vm1062, %v1055, 0
        %v1067 = vsel %vm1062, %v1061, 0
        %1069 = vmatprep.subr.bf16.mxu0 0
        %1070 = vmatpush1.bf16.xpose.msra.mxu0 %v1067
        %1071 = vmatprep.subr.bf16.mxu0 0
        %1072 = vmatpush1.bf16.xpose.msra.mxu0 0
        %1073 = vmatprep.subr.bf16.mxu0 0
        %1074 = vmatpush1.bf16.xpose.msra.mxu0 0
        %1075 = vmatprep.subr.bf16.mxu0 0
        %1076 = vmatpush1.bf16.xpose.msra.mxu0 0
        %1077 = vmatprep.subr.bf16.mxu0 0
        %1078 = vmatpush1.bf16.xpose.msra.mxu0 0
        %1079 = vmatprep.subr.bf16.mxu0 0
        %1080 = vmatpush1.bf16.xpose.msra.mxu0 0
        %1081 = vmatprep.subr.bf16.mxu0 0
        %1082 = vmatpush1.bf16.xpose.msra.mxu0 0
        %1083 = vmatprep.subr.bf16.mxu0 0
        %1084 = vmatpush1.bf16.xpose.msra.mxu0 0
        %1085 = vmatprep.subr.bf16.mxu0 0
        %1086 = vmatpush1.bf16.xpose.msra.mxu0 0
        %1087 = vmatprep.subr.bf16.mxu0 0
        %1088 = vmatpush1.bf16.xpose.msra.mxu0 0
        %1089 = vmatprep.subr.bf16.mxu0 0
        %1090 = vmatpush1.bf16.xpose.msra.mxu0 0
        %1091 = vmatprep.subr.bf16.mxu0 0
        %1092 = vmatpush1.bf16.xpose.msra.mxu0 0
        %1093 = vmatprep.subr.bf16.mxu0 0
        %1094 = vmatpush1.bf16.xpose.msra.mxu0 0
        %1095 = vmatprep.subr.bf16.mxu0 0
        %1096 = vmatpush1.bf16.xpose.msra.mxu0 0
        %1097 = vmatprep.subr.bf16.mxu0 0
        %1098 = vmatpush1.bf16.xpose.msra.mxu0 0
        %1099 = vmatprep.subr.bf16.mxu0 0
        %1100 = vmatpush1.bf16.xpose.msra.mxu0 0
        %1101 = vmatprep.mubr.bf16.mxu0 0
        %1102 = vmatmul.mubr.bf16.gmra.mrb[0].mxu0 %v1064
        %v1103 = vpop.f32.mrb[0].mxu0
        %v1104 = vadd.f32 %v1058, %v1103
        %v1105 = vpop.f32.mrb[0].mxu0
        %v1106 = vpop.f32.mrb[0].mxu0
        %v1107 = vpop.f32.mrb[0].mxu0
        %1108 = vdwg.mxu0
        %v1109 = vsel %vm1062, %v1104, -inf
        %1110 = vmax.xlane.f32.xlu0 %v1109
        %v1111 = vpop.xlane.xlu0 %1110
        %v1112 = vsub.f32 %v1104, %v1111
        %v1113 = vmul.f32 %v1112, 1.442695
        %v1114 = vpow.pop %v1113
        %v1115 = vsel %vm1062, %v1114, 0.0
        %1116 = vadd.xlane.f32.xlu0 %v1115
        %v1117 = vpop.xlane.xlu0 %1116
        %v1118 = vrcp.pop %v1117
        %v1119 = vmul.f32 %v1114, %v1118
        %v1120 = vpack.c.bf16 %v1119, %v1119
        %1121 = vrot.lane.b32.xlu0 %v1056, 64
        %v1122 = vpop.permute.xlu0 %1121
        %v1124 = vsel %vm1062, %v1120, 0
        %vm1126 = vcmask 1043456
        %v1128 = vsel %vm1126, %v1122, 0
        %1130 = vmatprep.subr.bf16.mxu0 0
        %1131 = vmatpush1.bf16.msra.mxu0 %v1128
        %1132 = vmatprep.subr.bf16.mxu0 0
        %1133 = vmatpush1.bf16.msra.mxu0 0
        %1134 = vmatprep.subr.bf16.mxu0 0
        %1135 = vmatpush1.bf16.msra.mxu0 0
        %1136 = vmatprep.subr.bf16.mxu0 0
        %1137 = vmatpush1.bf16.msra.mxu0 0
        %1138 = vmatprep.subr.bf16.mxu0 0
        %1139 = vmatpush1.bf16.msra.mxu0 0
        %1140 = vmatprep.subr.bf16.mxu0 0
        %1141 = vmatpush1.bf16.msra.mxu0 0
        %1142 = vmatprep.subr.bf16.mxu0 0
        %1143 = vmatpush1.bf16.msra.mxu0 0
        %1144 = vmatprep.subr.bf16.mxu0 0
        %1145 = vmatpush1.bf16.msra.mxu0 0
        %1146 = vmatprep.subr.bf16.mxu0 0
        %1147 = vmatpush1.bf16.msra.mxu0 0
        %1148 = vmatprep.subr.bf16.mxu0 0
        %1149 = vmatpush1.bf16.msra.mxu0 0
        %1150 = vmatprep.subr.bf16.mxu0 0
        %1151 = vmatpush1.bf16.msra.mxu0 0
        %1152 = vmatprep.subr.bf16.mxu0 0
        %1153 = vmatpush1.bf16.msra.mxu0 0
        %1154 = vmatprep.subr.bf16.mxu0 0
        %1155 = vmatpush1.bf16.msra.mxu0 0
        %1156 = vmatprep.subr.bf16.mxu0 0
        %1157 = vmatpush1.bf16.msra.mxu0 0
        %1158 = vmatprep.subr.bf16.mxu0 0
        %1159 = vmatpush1.bf16.msra.mxu0 0
        %1160 = vmatprep.subr.bf16.mxu0 0
        %1161 = vmatpush1.bf16.msra.mxu0 0
        %1162 = vmatprep.mubr.bf16.mxu0 0
        %1163 = vmatmul.mubr.bf16.gmra.mrb[0].mxu0 %v1124
        %v1164 = vpop.f32.mrb[0].mxu0
        %v1165 = vadd.f32 0.0, %v1164
        %v1166 = vpop.f32.mrb[0].mxu0
        %v1167 = vpop.f32.mrb[0].mxu0
        %v1168 = vpop.f32.mrb[0].mxu0
        %1169 = vdwg.mxu0
        %1170 = vst.msk [vmem:[#allocation2] sm:$0xff] %vm1062, %v1165
        %s1171 = scalar_lea.vmem %s677, 4 [#allocation8]
        %v1172 = vld [vmem:[%s1171] sm:$0xf]
        %v1173 = vunpack.c.l.bf16 %v1172
        %1175 = vrot.lane.b32.xlu0 %v1055, 120
        %v1176 = vpop.permute.xlu0 %1175
        %1177 = vrot.lane.b32.xlu0 %v1056, 88
        %v1178 = vpop.permute.xlu0 %1177
        %v1180 = vsel %vm1062, %v1176, 0
        %v1183 = vsel %vm1062, %v1178, 0
        %1185 = vmatprep.subr.bf16.mxu0 0
        %1186 = vmatpush1.bf16.xpose.msra.mxu0 %v1183
        %1187 = vmatprep.subr.bf16.mxu0 0
        %1188 = vmatpush1.bf16.xpose.msra.mxu0 0
        %1189 = vmatprep.subr.bf16.mxu0 0
        %1190 = vmatpush1.bf16.xpose.msra.mxu0 0
        %1191 = vmatprep.subr.bf16.mxu0 0
        %1192 = vmatpush1.bf16.xpose.msra.mxu0 0
        %1193 = vmatprep.subr.bf16.mxu0 0
        %1194 = vmatpush1.bf16.xpose.msra.mxu0 0
        %1195 = vmatprep.subr.bf16.mxu0 0
        %1196 = vmatpush1.bf16.xpose.msra.mxu0 0
        %1197 = vmatprep.subr.bf16.mxu0 0
        %1198 = vmatpush1.bf16.xpose.msra.mxu0 0
        %1199 = vmatprep.subr.bf16.mxu0 0
        %1200 = vmatpush1.bf16.xpose.msra.mxu0 0
        %1201 = vmatprep.subr.bf16.mxu0 0
        %1202 = vmatpush1.bf16.xpose.msra.mxu0 0
        %1203 = vmatprep.subr.bf16.mxu0 0
        %1204 = vmatpush1.bf16.xpose.msra.mxu0 0
        %1205 = vmatprep.subr.bf16.mxu0 0
        %1206 = vmatpush1.bf16.xpose.msra.mxu0 0
        %1207 = vmatprep.subr.bf16.mxu0 0
        %1208 = vmatpush1.bf16.xpose.msra.mxu0 0
        %1209 = vmatprep.subr.bf16.mxu0 0
        %1210 = vmatpush1.bf16.xpose.msra.mxu0 0
        %1211 = vmatprep.subr.bf16.mxu0 0
        %1212 = vmatpush1.bf16.xpose.msra.mxu0 0
        %1213 = vmatprep.subr.bf16.mxu0 0
        %1214 = vmatpush1.bf16.xpose.msra.mxu0 0
        %1215 = vmatprep.subr.bf16.mxu0 0
        %1216 = vmatpush1.bf16.xpose.msra.mxu0 0
        %1217 = vmatprep.mubr.bf16.mxu0 0
        %1218 = vmatmul.mubr.bf16.gmra.mrb[0].mxu0 %v1180
        %v1219 = vpop.f32.mrb[0].mxu0
        %v1220 = vadd.f32 %v1173, %v1219
        %v1221 = vpop.f32.mrb[0].mxu0
        %v1222 = vpop.f32.mrb[0].mxu0
        %v1223 = vpop.f32.mrb[0].mxu0
        %1224 = vdwg.mxu0
        %v1225 = vsel %vm1062, %v1220, -inf
        %1226 = vmax.xlane.f32.xlu0 %v1225
        %v1227 = vpop.xlane.xlu0 %1226
        %v1228 = vsub.f32 %v1220, %v1227
        %v1229 = vmul.f32 %v1228, 1.442695
        %v1230 = vpow.pop %v1229
        %v1231 = vsel %vm1062, %v1230, 0.0
        %1232 = vadd.xlane.f32.xlu0 %v1231
        %v1233 = vpop.xlane.xlu0 %1232
        %v1234 = vrcp.pop %v1233
        %v1235 = vmul.f32 %v1230, %v1234
        %v1236 = vpack.c.bf16 %v1235, %v1235
        %1237 = vrot.lane.b32.xlu0 %v1056, 56
        %v1238 = vpop.permute.xlu0 %1237
        %v1240 = vsel %vm1062, %v1236, 0
        %v1243 = vsel %vm1126, %v1238, 0
        %1245 = vmatprep.subr.bf16.mxu0 0
        %1246 = vmatpush1.bf16.msra.mxu0 %v1243
        %1247 = vmatprep.subr.bf16.mxu0 0
        %1248 = vmatpush1.bf16.msra.mxu0 0
        %1249 = vmatprep.subr.bf16.mxu0 0
        %1250 = vmatpush1.bf16.msra.mxu0 0
        %1251 = vmatprep.subr.bf16.mxu0 0
        %1252 = vmatpush1.bf16.msra.mxu0 0
        %1253 = vmatprep.subr.bf16.mxu0 0
        %1254 = vmatpush1.bf16.msra.mxu0 0
        %1255 = vmatprep.subr.bf16.mxu0 0
        %1256 = vmatpush1.bf16.msra.mxu0 0
        %1257 = vmatprep.subr.bf16.mxu0 0
        %1258 = vmatpush1.bf16.msra.mxu0 0
        %1259 = vmatprep.subr.bf16.mxu0 0
        %1260 = vmatpush1.bf16.msra.mxu0 0
        %1261 = vmatprep.subr.bf16.mxu0 0
        %1262 = vmatpush1.bf16.msra.mxu0 0
        %1263 = vmatprep.subr.bf16.mxu0 0
        %1264 = vmatpush1.bf16.msra.mxu0 0
        %1265 = vmatprep.subr.bf16.mxu0 0
        %1266 = vmatpush1.bf16.msra.mxu0 0
        %1267 = vmatprep.subr.bf16.mxu0 0
        %1268 = vmatpush1.bf16.msra.mxu0 0
        %1269 = vmatprep.subr.bf16.mxu0 0
        %1270 = vmatpush1.bf16.msra.mxu0 0
        %1271 = vmatprep.subr.bf16.mxu0 0
        %1272 = vmatpush1.bf16.msra.mxu0 0
        %1273 = vmatprep.subr.bf16.mxu0 0
        %1274 = vmatpush1.bf16.msra.mxu0 0
        %1275 = vmatprep.subr.bf16.mxu0 0
        %1276 = vmatpush1.bf16.msra.mxu0 0
        %1277 = vmatprep.mubr.bf16.mxu0 0
        %1278 = vmatmul.mubr.bf16.gmra.mrb[0].mxu0 %v1240
        %v1279 = vpop.f32.mrb[0].mxu0
        %v1280 = vadd.f32 0.0, %v1279
        %v1281 = vpop.f32.mrb[0].mxu0
        %v1282 = vpop.f32.mrb[0].mxu0
        %v1283 = vpop.f32.mrb[0].mxu0
        %1284 = vdwg.mxu0
        %1286 = vrot.lane.b32.xlu0 %v1280, 8
        %v1287 = vpop.permute.xlu0 %1286
        %vm1289 = vcmask 130112
        %1290 = vst.msk [vmem:[#allocation2] sm:$0xff] %vm1289, %v1287
        %s1291 = scalar_lea.vmem %s677, 8 [#allocation8]
        %v1292 = vld [vmem:[%s1291] sm:$0xf]
        %v1293 = vunpack.c.l.bf16 %v1292
        %1294 = vrot.lane.b32.xlu0 %v1055, 112
        %v1295 = vpop.permute.xlu0 %1294
        %1296 = vrot.lane.b32.xlu0 %v1056, 80
        %v1297 = vpop.permute.xlu0 %1296
        %v1299 = vsel %vm1062, %v1295, 0
        %v1302 = vsel %vm1062, %v1297, 0
        %1304 = vmatprep.subr.bf16.mxu0 0
        %1305 = vmatpush1.bf16.xpose.msra.mxu0 %v1302
        %1306 = vmatprep.subr.bf16.mxu0 0
        %1307 = vmatpush1.bf16.xpose.msra.mxu0 0
        %1308 = vmatprep.subr.bf16.mxu0 0
        %1309 = vmatpush1.bf16.xpose.msra.mxu0 0
        %1310 = vmatprep.subr.bf16.mxu0 0
        %1311 = vmatpush1.bf16.xpose.msra.mxu0 0
        %1312 = vmatprep.subr.bf16.mxu0 0
        %1313 = vmatpush1.bf16.xpose.msra.mxu0 0
        %1314 = vmatprep.subr.bf16.mxu0 0
        %1315 = vmatpush1.bf16.xpose.msra.mxu0 0
        %1316 = vmatprep.subr.bf16.mxu0 0
        %1317 = vmatpush1.bf16.xpose.msra.mxu0 0
        %1318 = vmatprep.subr.bf16.mxu0 0
        %1319 = vmatpush1.bf16.xpose.msra.mxu0 0
        %1320 = vmatprep.subr.bf16.mxu0 0
        %1321 = vmatpush1.bf16.xpose.msra.mxu0 0
        %1322 = vmatprep.subr.bf16.mxu0 0
        %1323 = vmatpush1.bf16.xpose.msra.mxu0 0
        %1324 = vmatprep.subr.bf16.mxu0 0
        %1325 = vmatpush1.bf16.xpose.msra.mxu0 0
        %1326 = vmatprep.subr.bf16.mxu0 0
        %1327 = vmatpush1.bf16.xpose.msra.mxu0 0
        %1328 = vmatprep.subr.bf16.mxu0 0
        %1329 = vmatpush1.bf16.xpose.msra.mxu0 0
        %1330 = vmatprep.subr.bf16.mxu0 0
        %1331 = vmatpush1.bf16.xpose.msra.mxu0 0
        %1332 = vmatprep.subr.bf16.mxu0 0
        %1333 = vmatpush1.bf16.xpose.msra.mxu0 0
        %1334 = vmatprep.subr.bf16.mxu0 0
        %1335 = vmatpush1.bf16.xpose.msra.mxu0 0
        %1336 = vmatprep.mubr.bf16.mxu0 0
        %1337 = vmatmul.mubr.bf16.gmra.mrb[0].mxu0 %v1299
        %v1338 = vpop.f32.mrb[0].mxu0
        %v1339 = vadd.f32 %v1293, %v1338
        %v1340 = vpop.f32.mrb[0].mxu0
        %v1341 = vpop.f32.mrb[0].mxu0
        %v1342 = vpop.f32.mrb[0].mxu0
        %1343 = vdwg.mxu0
        %v1344 = vsel %vm1062, %v1339, -inf
        %1345 = vmax.xlane.f32.xlu0 %v1344
        %v1346 = vpop.xlane.xlu0 %1345
        %v1347 = vsub.f32 %v1339, %v1346
        %v1348 = vmul.f32 %v1347, 1.442695
        %v1349 = vpow.pop %v1348
        %v1350 = vsel %vm1062, %v1349, 0.0
        %1351 = vadd.xlane.f32.xlu0 %v1350
        %v1352 = vpop.xlane.xlu0 %1351
        %v1353 = vrcp.pop %v1352
        %v1354 = vmul.f32 %v1349, %v1353
        %v1355 = vpack.c.bf16 %v1354, %v1354
        %1356 = vrot.lane.b32.xlu0 %v1056, 48
        %v1357 = vpop.permute.xlu0 %1356
        %v1359 = vsel %vm1062, %v1355, 0
        %v1362 = vsel %vm1126, %v1357, 0
        %1364 = vmatprep.subr.bf16.mxu0 0
        %1365 = vmatpush1.bf16.msra.mxu0 %v1362
        %1366 = vmatprep.subr.bf16.mxu0 0
        %1367 = vmatpush1.bf16.msra.mxu0 0
        %1368 = vmatprep.subr.bf16.mxu0 0
        %1369 = vmatpush1.bf16.msra.mxu0 0
        %1370 = vmatprep.subr.bf16.mxu0 0
        %1371 = vmatpush1.bf16.msra.mxu0 0
        %1372 = vmatprep.subr.bf16.mxu0 0
        %1373 = vmatpush1.bf16.msra.mxu0 0
        %1374 = vmatprep.subr.bf16.mxu0 0
        %1375 = vmatpush1.bf16.msra.mxu0 0
        %1376 = vmatprep.subr.bf16.mxu0 0
        %1377 = vmatpush1.bf16.msra.mxu0 0
        %1378 = vmatprep.subr.bf16.mxu0 0
        %1379 = vmatpush1.bf16.msra.mxu0 0
        %1380 = vmatprep.subr.bf16.mxu0 0
        %1381 = vmatpush1.bf16.msra.mxu0 0
        %1382 = vmatprep.subr.bf16.mxu0 0
        %1383 = vmatpush1.bf16.msra.mxu0 0
        %1384 = vmatprep.subr.bf16.mxu0 0
        %1385 = vmatpush1.bf16.msra.mxu0 0
        %1386 = vmatprep.subr.bf16.mxu0 0
        %1387 = vmatpush1.bf16.msra.mxu0 0
        %1388 = vmatprep.subr.bf16.mxu0 0
        %1389 = vmatpush1.bf16.msra.mxu0 0
        %1390 = vmatprep.subr.bf16.mxu0 0
        %1391 = vmatpush1.bf16.msra.mxu0 0
        %1392 = vmatprep.subr.bf16.mxu0 0
        %1393 = vmatpush1.bf16.msra.mxu0 0
        %1394 = vmatprep.subr.bf16.mxu0 0
        %1395 = vmatpush1.bf16.msra.mxu0 0
        %1396 = vmatprep.mubr.bf16.mxu0 0
        %1397 = vmatmul.mubr.bf16.gmra.mrb[0].mxu0 %v1359
        %v1398 = vpop.f32.mrb[0].mxu0
        %v1399 = vadd.f32 0.0, %v1398
        %v1400 = vpop.f32.mrb[0].mxu0
        %v1401 = vpop.f32.mrb[0].mxu0
        %v1402 = vpop.f32.mrb[0].mxu0
        %1403 = vdwg.mxu0
        %1405 = vrot.lane.b32.xlu0 %v1399, 16
        %v1406 = vpop.permute.xlu0 %1405
        %vm1408 = vcmask 195712
        %1409 = vst.msk [vmem:[#allocation2] sm:$0xff] %vm1408, %v1406
        %s1410 = scalar_lea.vmem %s677, 12 [#allocation8]
        %v1411 = vld [vmem:[%s1410] sm:$0xf]
        %v1412 = vunpack.c.l.bf16 %v1411
        %1413 = vrot.lane.b32.xlu0 %v1055, 104
        %v1414 = vpop.permute.xlu0 %1413
        %1415 = vrot.lane.b32.xlu0 %v1056, 72
        %v1416 = vpop.permute.xlu0 %1415
        %v1418 = vsel %vm1062, %v1414, 0
        %v1421 = vsel %vm1062, %v1416, 0
        %1423 = vmatprep.subr.bf16.mxu0 0
        %1424 = vmatpush1.bf16.xpose.msra.mxu0 %v1421
        %1425 = vmatprep.subr.bf16.mxu0 0
        %1426 = vmatpush1.bf16.xpose.msra.mxu0 0
        %1427 = vmatprep.subr.bf16.mxu0 0
        %1428 = vmatpush1.bf16.xpose.msra.mxu0 0
        %1429 = vmatprep.subr.bf16.mxu0 0
        %1430 = vmatpush1.bf16.xpose.msra.mxu0 0
        %1431 = vmatprep.subr.bf16.mxu0 0
        %1432 = vmatpush1.bf16.xpose.msra.mxu0 0
        %1433 = vmatprep.subr.bf16.mxu0 0
        %1434 = vmatpush1.bf16.xpose.msra.mxu0 0
        %1435 = vmatprep.subr.bf16.mxu0 0
        %1436 = vmatpush1.bf16.xpose.msra.mxu0 0
        %1437 = vmatprep.subr.bf16.mxu0 0
        %1438 = vmatpush1.bf16.xpose.msra.mxu0 0
        %1439 = vmatprep.subr.bf16.mxu0 0
        %1440 = vmatpush1.bf16.xpose.msra.mxu0 0
        %1441 = vmatprep.subr.bf16.mxu0 0
        %1442 = vmatpush1.bf16.xpose.msra.mxu0 0
        %1443 = vmatprep.subr.bf16.mxu0 0
        %1444 = vmatpush1.bf16.xpose.msra.mxu0 0
        %1445 = vmatprep.subr.bf16.mxu0 0
        %1446 = vmatpush1.bf16.xpose.msra.mxu0 0
        %1447 = vmatprep.subr.bf16.mxu0 0
        %1448 = vmatpush1.bf16.xpose.msra.mxu0 0
        %1449 = vmatprep.subr.bf16.mxu0 0
        %1450 = vmatpush1.bf16.xpose.msra.mxu0 0
        %1451 = vmatprep.subr.bf16.mxu0 0
        %1452 = vmatpush1.bf16.xpose.msra.mxu0 0
        %1453 = vmatprep.subr.bf16.mxu0 0
        %1454 = vmatpush1.bf16.xpose.msra.mxu0 0
        %1455 = vmatprep.mubr.bf16.mxu0 0
        %1456 = vmatmul.mubr.bf16.gmra.mrb[0].mxu0 %v1418
        %v1457 = vpop.f32.mrb[0].mxu0
        %v1458 = vadd.f32 %v1412, %v1457
        %v1459 = vpop.f32.mrb[0].mxu0
        %v1460 = vpop.f32.mrb[0].mxu0
        %v1461 = vpop.f32.mrb[0].mxu0
        %1462 = vdwg.mxu0
        %v1463 = vsel %vm1062, %v1458, -inf
        %1464 = vmax.xlane.f32.xlu0 %v1463
        %v1465 = vpop.xlane.xlu0 %1464
        %v1466 = vsub.f32 %v1458, %v1465
        %v1467 = vmul.f32 %v1466, 1.442695
        %v1468 = vpow.pop %v1467
        %v1469 = vsel %vm1062, %v1468, 0.0
        %1470 = vadd.xlane.f32.xlu0 %v1469
        %v1471 = vpop.xlane.xlu0 %1470
        %v1472 = vrcp.pop %v1471
        %v1473 = vmul.f32 %v1468, %v1472
        %v1474 = vpack.c.bf16 %v1473, %v1473
        %1475 = vrot.lane.b32.xlu0 %v1056, 40
        %v1476 = vpop.permute.xlu0 %1475
        %v1478 = vsel %vm1062, %v1474, 0
        %v1481 = vsel %vm1126, %v1476, 0
        %1483 = vmatprep.subr.bf16.mxu0 0
        %1484 = vmatpush1.bf16.msra.mxu0 %v1481
        %1485 = vmatprep.subr.bf16.mxu0 0
        %1486 = vmatpush1.bf16.msra.mxu0 0
        %1487 = vmatprep.subr.bf16.mxu0 0
        %1488 = vmatpush1.bf16.msra.mxu0 0
        %1489 = vmatprep.subr.bf16.mxu0 0
        %1490 = vmatpush1.bf16.msra.mxu0 0
        %1491 = vmatprep.subr.bf16.mxu0 0
        %1492 = vmatpush1.bf16.msra.mxu0 0
        %1493 = vmatprep.subr.bf16.mxu0 0
        %1494 = vmatpush1.bf16.msra.mxu0 0
        %1495 = vmatprep.subr.bf16.mxu0 0
        %1496 = vmatpush1.bf16.msra.mxu0 0
        %1497 = vmatprep.subr.bf16.mxu0 0
        %1498 = vmatpush1.bf16.msra.mxu0 0
        %1499 = vmatprep.subr.bf16.mxu0 0
        %1500 = vmatpush1.bf16.msra.mxu0 0
        %1501 = vmatprep.subr.bf16.mxu0 0
        %1502 = vmatpush1.bf16.msra.mxu0 0
        %1503 = vmatprep.subr.bf16.mxu0 0
        %1504 = vmatpush1.bf16.msra.mxu0 0
        %1505 = vmatprep.subr.bf16.mxu0 0
        %1506 = vmatpush1.bf16.msra.mxu0 0
        %1507 = vmatprep.subr.bf16.mxu0 0
        %1508 = vmatpush1.bf16.msra.mxu0 0
        %1509 = vmatprep.subr.bf16.mxu0 0
        %1510 = vmatpush1.bf16.msra.mxu0 0
        %1511 = vmatprep.subr.bf16.mxu0 0
        %1512 = vmatpush1.bf16.msra.mxu0 0
        %1513 = vmatprep.subr.bf16.mxu0 0
        %1514 = vmatpush1.bf16.msra.mxu0 0
        %1515 = vmatprep.mubr.bf16.mxu0 0
        %1516 = vmatmul.mubr.bf16.gmra.mrb[0].mxu0 %v1478
        %v1517 = vpop.f32.mrb[0].mxu0
        %v1518 = vadd.f32 0.0, %v1517
        %v1519 = vpop.f32.mrb[0].mxu0
        %v1520 = vpop.f32.mrb[0].mxu0
        %v1521 = vpop.f32.mrb[0].mxu0
        %1522 = vdwg.mxu0
        %1524 = vrot.lane.b32.xlu0 %v1518, 24
        %v1525 = vpop.permute.xlu0 %1524
        %vm1527 = vcmask 261312
        %1528 = vst.msk [vmem:[#allocation2] sm:$0xff] %vm1527, %v1525
        %v1529 = vld [vmem:[#allocation2] sm:$0xff]
        %1531 = vrot.lane.b32.xlu0 %v1053, 32
        %v1532 = vpop.permute.xlu0 %1531
        %v1534 = vmul.f32 %v1529, %v1532
        %v1535 = vpack.c.bf16 %v1534, %v1534
        %v1536 = vld [vmem:[#allocation17] sm:$0xf]
        %v1537 = vld [vmem:[#allocation17 + $0x4] sm:$0xf]
        %v1538 = vld [vmem:[#allocation17 + $0x8] sm:$0xf]
        %v1539 = vld [vmem:[#allocation17 + $0xc] sm:$0xf]
        %v1544 = vunpack.c.l.b16 %v1536
        %v1545 = vunpack.c.l.b16 %v1537
        %v1546 = vunpack.c.l.b16 %v1538
        %v1547 = vunpack.c.l.b16 %v1539
        %v1548 = vpack.c.b16 %v1545, %v1544
        %v1549 = vpack.c.b16 %v1547, %v1546
        %v1553 = vsel %vm815, %v1535, 0
        %1555 = vmatprep.subr.bf16.mxu0 0
        %1556 = vmatpush1.bf16.msra.mxu0 %v1548
        %1557 = vmatprep.subr.bf16.mxu0 0
        %1558 = vmatpush1.bf16.msra.mxu0 %v1549
        %1559 = vmatprep.subr.bf16.mxu0 0
        %1560 = vmatpush1.bf16.msra.mxu0 0
        %1561 = vmatprep.subr.bf16.mxu0 0
        %1562 = vmatpush1.bf16.msra.mxu0 0
        %1563 = vmatprep.subr.bf16.mxu0 0
        %1564 = vmatpush1.bf16.msra.mxu0 0
        %1565 = vmatprep.subr.bf16.mxu0 0
        %1566 = vmatpush1.bf16.msra.mxu0 0
        %1567 = vmatprep.subr.bf16.mxu0 0
        %1568 = vmatpush1.bf16.msra.mxu0 0
        %1569 = vmatprep.subr.bf16.mxu0 0
        %1570 = vmatpush1.bf16.msra.mxu0 0
        %1571 = vmatprep.subr.bf16.mxu0 0
        %1572 = vmatpush1.bf16.msra.mxu0 0
        %1573 = vmatprep.subr.bf16.mxu0 0
        %1574 = vmatpush1.bf16.msra.mxu0 0
        %1575 = vmatprep.subr.bf16.mxu0 0
        %1576 = vmatpush1.bf16.msra.mxu0 0
        %1577 = vmatprep.subr.bf16.mxu0 0
        %1578 = vmatpush1.bf16.msra.mxu0 0
        %1579 = vmatprep.subr.bf16.mxu0 0
        %1580 = vmatpush1.bf16.msra.mxu0 0
        %1581 = vmatprep.subr.bf16.mxu0 0
        %1582 = vmatpush1.bf16.msra.mxu0 0
        %1583 = vmatprep.subr.bf16.mxu0 0
        %1584 = vmatpush1.bf16.msra.mxu0 0
        %1585 = vmatprep.subr.bf16.mxu0 0
        %1586 = vmatpush1.bf16.msra.mxu0 0
        %1587 = vmatprep.mubr.bf16.mxu0 0
        %1588 = vmatmul.mubr.bf16.gmra.mrb[0].mxu0 %v1553
        %v1589 = vpop.f32.mrb[0].mxu0
        %v1590 = vadd.f32 0.0, %v1589
        %v1591 = vpop.f32.mrb[0].mxu0
        %v1592 = vpop.f32.mrb[0].mxu0
        %v1593 = vpop.f32.mrb[0].mxu0
        %1594 = vdwg.mxu0
        %v1595 = vmul.f32 %v864, %v1590
        %v1596 = vadd.f32 %v789, %v1595
        %v1597 = vld [vmem:[#allocation21] sm:$0x1]
        %v1598 = vld [vmem:[#allocation23] sm:$0xf]
        %v1599 = vld [vmem:[#allocation23 + $0x4] sm:$0xf]
        %v1600 = vld [vmem:[#allocation23 + $0x8] sm:$0xf]
        %v1601 = vld [vmem:[#allocation23 + $0xc] sm:$0xf]
        %v1602 = vld [vmem:[#allocation24] sm:$0x1]
        %v1603 = vsel %vm815, %v1596, 0.0
        %1604 = vadd.xlane.f32.xlu0 %v1603
        %v1605 = vpop.xlane.xlu0 %1604
        %v1606 = vmul.f32 %v1605, %v874
        %v1607 = vsub.f32 %v1596, %v1606
        %v1608 = vmul.f32 %v1607, %v1607
        %v1609 = vsel %vm815, %v1608, 0.0
        %1610 = vadd.xlane.f32.xlu0 %v1609
        %v1611 = vpop.xlane.xlu0 %1610
        %v1612 = vmul.f32 %v1611, %v874
        %v1613 = vadd.f32 %v1612, 1e-05
        %v1614 = vrsqrt.pop %v1613
        %v1615 = vmul.f32 %v1607, %v1614
        %v1617 = vlaneseq
        %v1618 = vshrl.u32 %v1617, 7
        %v1619 = vsub.s32 0, %v1618
        %v1620 = vrot.slane %v1597, %v1619
        %v1622 = vmul.f32 %v897, %v1620
        %v1623 = vpack.c.bf16 %v1622, %v1622
        %v1628 = vunpack.c.l.b16 %v1598
        %v1629 = vunpack.c.l.b16 %v1599
        %v1630 = vunpack.c.l.b16 %v1600
        %v1631 = vunpack.c.l.b16 %v1601
        %v1632 = vpack.c.b16 %v1629, %v1628
        %v1633 = vpack.c.b16 %v1631, %v1630
        %v1637 = vsel %vm815, %v1623, 0
        %1639 = vmatprep.subr.bf16.mxu0 0
        %1640 = vmatpush1.bf16.msra.mxu0 %v1632
        %1641 = vmatprep.subr.bf16.mxu0 0
        %1642 = vmatpush1.bf16.msra.mxu0 %v1633
        %1643 = vmatprep.subr.bf16.mxu0 0
        %1644 = vmatpush1.bf16.msra.mxu0 0
        %1645 = vmatprep.subr.bf16.mxu0 0
        %1646 = vmatpush1.bf16.msra.mxu0 0
        %1647 = vmatprep.subr.bf16.mxu0 0
        %1648 = vmatpush1.bf16.msra.mxu0 0
        %1649 = vmatprep.subr.bf16.mxu0 0
        %1650 = vmatpush1.bf16.msra.mxu0 0
        %1651 = vmatprep.subr.bf16.mxu0 0
        %1652 = vmatpush1.bf16.msra.mxu0 0
        %1653 = vmatprep.subr.bf16.mxu0 0
        %1654 = vmatpush1.bf16.msra.mxu0 0
        %1655 = vmatprep.subr.bf16.mxu0 0
        %1656 = vmatpush1.bf16.msra.mxu0 0
        %1657 = vmatprep.subr.bf16.mxu0 0
        %1658 = vmatpush1.bf16.msra.mxu0 0
        %1659 = vmatprep.subr.bf16.mxu0 0
        %1660 = vmatpush1.bf16.msra.mxu0 0
        %1661 = vmatprep.subr.bf16.mxu0 0
        %1662 = vmatpush1.bf16.msra.mxu0 0
        %1663 = vmatprep.subr.bf16.mxu0 0
        %1664 = vmatpush1.bf16.msra.mxu0 0
        %1665 = vmatprep.subr.bf16.mxu0 0
        %1666 = vmatpush1.bf16.msra.mxu0 0
        %1667 = vmatprep.subr.bf16.mxu0 0
        %1668 = vmatpush1.bf16.msra.mxu0 0
        %1669 = vmatprep.subr.bf16.mxu0 0
        %1670 = vmatpush1.bf16.msra.mxu0 0
        %1671 = vmatprep.mubr.bf16.mxu0 0
        %1672 = vmatmul.mubr.bf16.gmra.mrb[0].mxu0 %v1637
        %v1673 = vpop.f32.mrb[0].mxu0
        %v1674 = vadd.f32 0.0, %v1673
        %v1675 = vpop.f32.mrb[0].mxu0
        %v1676 = vpop.f32.mrb[0].mxu0
        %v1677 = vpop.f32.mrb[0].mxu0
        %1678 = vdwg.mxu0
        %v1680 = vlaneseq
        %v1681 = vshrl.u32 %v1680, 7
        %v1682 = vsub.s32 0, %v1681
        %v1683 = vrot.slane %v1602, %v1682
        %v1685 = vadd.f32 %v1674, %v1683
        %v1686 = vxor.u32 %v1685, 2147483648
        %v1687 = vmul.f32 %v1686, 1.442695
        %v1688 = vpow.pop %v1687
        %v1689 = vadd.f32 %v1688, 1.0
        %v1690 = vrcp.pop %v1689
        %v1691 = vmul.f32 1.0, %v1690
        %v1692 = vmul.f32 %v1615, %v1691
        %1694 = vrot.lane.b32.xlu0 %v1674, 96
        %v1695 = vpop.permute.xlu0 %1694
        %v1697 = vadd.f32 %v1692, %v1695
        %v1698 = vpack.c.bf16 %v1697, %v1697
        %v1699 = vld [vmem:[#allocation26] sm:$0xff]
        %v1700 = vld [vmem:[#allocation26 + $0x8] sm:$0xff]
        %v1701 = vld [vmem:[#allocation26 + $0x10] sm:$0xff]
        %v1702 = vld [vmem:[#allocation26 + $0x18] sm:$0xff]
        %v1707 = vunpack.c.l.b16 %v1699
        %v1708 = vunpack.c.h.b16 %v1699
        %v1709 = vunpack.c.l.b16 %v1700
        %v1710 = vunpack.c.h.b16 %v1700
        %v1711 = vunpack.c.l.b16 %v1701
        %v1712 = vunpack.c.h.b16 %v1701
        %v1713 = vunpack.c.l.b16 %v1702
        %v1714 = vunpack.c.h.b16 %v1702
        %v1715 = vpack.c.b16 %v1709, %v1707
        %v1716 = vpack.c.b16 %v1710, %v1708
        %v1717 = vpack.c.b16 %v1713, %v1711
        %v1718 = vpack.c.b16 %v1714, %v1712
        %v1724 = vsel %vm815, %v1698, 0
        %1726 = vmatprep.subr.bf16.mxu0 %v1716
        %1727 = vmatpush1.bf16.msra.mxu0 %v1715
        %1728 = vmatprep.subr.bf16.mxu0 %v1718
        %1729 = vmatpush1.bf16.msra.mxu0 %v1717
        %1730 = vmatprep.subr.bf16.mxu0 0
        %1731 = vmatpush1.bf16.msra.mxu0 0
        %1732 = vmatprep.subr.bf16.mxu0 0
        %1733 = vmatpush1.bf16.msra.mxu0 0
        %1734 = vmatprep.subr.bf16.mxu0 0
        %1735 = vmatpush1.bf16.msra.mxu0 0
        %1736 = vmatprep.subr.bf16.mxu0 0
        %1737 = vmatpush1.bf16.msra.mxu0 0
        %1738 = vmatprep.subr.bf16.mxu0 0
        %1739 = vmatpush1.bf16.msra.mxu0 0
        %1740 = vmatprep.subr.bf16.mxu0 0
        %1741 = vmatpush1.bf16.msra.mxu0 0
        %1742 = vmatprep.subr.bf16.mxu0 0
        %1743 = vmatpush1.bf16.msra.mxu0 0
        %1744 = vmatprep.subr.bf16.mxu0 0
        %1745 = vmatpush1.bf16.msra.mxu0 0
        %1746 = vmatprep.subr.bf16.mxu0 0
        %1747 = vmatpush1.bf16.msra.mxu0 0
        %1748 = vmatprep.subr.bf16.mxu0 0
        %1749 = vmatpush1.bf16.msra.mxu0 0
        %1750 = vmatprep.subr.bf16.mxu0 0
        %1751 = vmatpush1.bf16.msra.mxu0 0
        %1752 = vmatprep.subr.bf16.mxu0 0
        %1753 = vmatpush1.bf16.msra.mxu0 0
        %1754 = vmatprep.subr.bf16.mxu0 0
        %1755 = vmatpush1.bf16.msra.mxu0 0
        %1756 = vmatprep.subr.bf16.mxu0 0
        %1757 = vmatpush1.bf16.msra.mxu0 0
        %1758 = vmatprep.mubr.bf16.mxu0 0
        %1759 = vmatmul.mubr.bf16.gmra.mrb[0].mxu0 %v1724
        %v1760 = vpop.f32.mrb[0].mxu0
        %v1761 = vadd.f32 0.0, %v1760
        %v1762 = vpop.f32.mrb[0].mxu0
        %v1763 = vadd.f32 0.0, %v1762
        %v1764 = vpop.f32.mrb[0].mxu0
        %v1765 = vpop.f32.mrb[0].mxu0
        %1766 = vdwg.mxu0
        %v1767 = vxor.u32 %v1761, 2147483648
        %v1768 = vmul.f32 %v1767, 1.442695
        %v1769 = vpow.pop %v1768
        %v1770 = vadd.f32 %v1769, 1.0
        %v1771 = vrcp.pop %v1770
        %v1772 = vmul.f32 1.0, %v1771
        %v1773 = vmul.f32 %v1761, %v1772
        %1775 = vrot.lane.b32.xlu0 %v1761, 64
        %v1776 = vpop.permute.xlu0 %1775
        %v1778 = vmul.f32 %v1773, %v1776
        %1780 = vrot.lane.b32.xlu0 %v1763, 64
        %v1781 = vpop.permute.xlu0 %1780
        %v1783 = vmul.f32 %v1778, %v1781
        %v1784 = vpack.c.bf16 %v1783, %v1783
        %v1785 = vld [vmem:[#allocation27] sm:$0xf]
        %v1786 = vld [vmem:[#allocation27 + $0x4] sm:$0xf]
        %v1787 = vld [vmem:[#allocation27 + $0x8] sm:$0xf]
        %v1788 = vld [vmem:[#allocation27 + $0xc] sm:$0xf]
        %v1789 = vld [vmem:[#allocation27 + $0x10] sm:$0xf]
        %v1790 = vld [vmem:[#allocation27 + $0x14] sm:$0xf]
        %v1791 = vld [vmem:[#allocation27 + $0x18] sm:$0xf]
        %v1792 = vld [vmem:[#allocation27 + $0x1c] sm:$0xf]
        %1794 = vrot.lane.b32.xlu0 %v1784, 64
        %v1795 = vpop.permute.xlu0 %1794
        %v1804 = vunpack.c.l.b16 %v1785
        %v1805 = vunpack.c.l.b16 %v1786
        %v1806 = vunpack.c.l.b16 %v1787
        %v1807 = vunpack.c.l.b16 %v1788
        %v1808 = vunpack.c.l.b16 %v1789
        %v1809 = vunpack.c.l.b16 %v1790
        %v1810 = vunpack.c.l.b16 %v1791
        %v1811 = vunpack.c.l.b16 %v1792
        %v1812 = vpack.c.b16 %v1805, %v1804
        %v1813 = vpack.c.b16 %v1807, %v1806
        %v1814 = vpack.c.b16 %v1809, %v1808
        %v1815 = vpack.c.b16 %v1811, %v1810
        %vm1820 = vcmask 523264
        %v1822 = vsel %vm1820, %v1795, 0
        %1824 = vmatprep.subr.bf16.mxu0 0
        %1825 = vmatpush1.bf16.msra.mxu0 %v1812
        %1826 = vmatprep.subr.bf16.mxu0 0
        %1827 = vmatpush1.bf16.msra.mxu0 %v1813
        %1828 = vmatprep.subr.bf16.mxu0 0
        %1829 = vmatpush1.bf16.msra.mxu0 %v1814
        %1830 = vmatprep.subr.bf16.mxu0 0
        %1831 = vmatpush1.bf16.msra.mxu0 %v1815
        %1832 = vmatprep.subr.bf16.mxu0 0
        %1833 = vmatpush1.bf16.msra.mxu0 0
        %1834 = vmatprep.subr.bf16.mxu0 0
        %1835 = vmatpush1.bf16.msra.mxu0 0
        %1836 = vmatprep.subr.bf16.mxu0 0
        %1837 = vmatpush1.bf16.msra.mxu0 0
        %1838 = vmatprep.subr.bf16.mxu0 0
        %1839 = vmatpush1.bf16.msra.mxu0 0
        %1840 = vmatprep.subr.bf16.mxu0 0
        %1841 = vmatpush1.bf16.msra.mxu0 0
        %1842 = vmatprep.subr.bf16.mxu0 0
        %1843 = vmatpush1.bf16.msra.mxu0 0
        %1844 = vmatprep.subr.bf16.mxu0 0
        %1845 = vmatpush1.bf16.msra.mxu0 0
        %1846 = vmatprep.subr.bf16.mxu0 0
        %1847 = vmatpush1.bf16.msra.mxu0 0
        %1848 = vmatprep.subr.bf16.mxu0 0
        %1849 = vmatpush1.bf16.msra.mxu0 0
        %1850 = vmatprep.subr.bf16.mxu0 0
        %1851 = vmatpush1.bf16.msra.mxu0 0
        %1852 = vmatprep.subr.bf16.mxu0 0
        %1853 = vmatpush1.bf16.msra.mxu0 0
        %1854 = vmatprep.subr.bf16.mxu0 0
        %1855 = vmatpush1.bf16.msra.mxu0 0
        %1856 = vmatprep.mubr.bf16.mxu0 0
        %1857 = vmatmul.mubr.bf16.gmra.mrb[0].mxu0 %v1822
        %v1858 = vpop.f32.mrb[0].mxu0
        %v1859 = vadd.f32 0.0, %v1858
        %v1860 = vpop.f32.mrb[0].mxu0
        %v1861 = vpop.f32.mrb[0].mxu0
        %v1862 = vpop.f32.mrb[0].mxu0
        %1863 = vdwg.mxu0
        %1865 = vrot.lane.b32.xlu0 %v1859, 32
        %v1866 = vpop.permute.xlu0 %1865
        %v1868 = vmul.f32 %v864, %v1866
        %1870 = vrot.lane.b32.xlu0 %v1868, 96
        %v1871 = vpop.permute.xlu0 %1870
        %v1873 = vadd.f32 %v1596, %v1871
        %1874 = vst.msk [vmem:[%s787] sm:$0xff] %vm815, %v1873
        %s1875 = sand.u32 %s402, 1
        %s1876 = scalar_lea.sflag [#allocation5], %s1875
        %s1877 = sand.u32 %s402, 1
        %s1878 = smul.addr %s1877, 8
        %s1879 = scalar_lea.vmem [#allocation29], %s1878
        // Predicated region
        $region149: #{diffusion_transformer_forward.5} parent=83 // pred_check
          %p1880 = pneg %p412
        $region150: #{diffusion_transformer_forward.5} parent=83 // pred_check_branch
          %1882 = sbr.rel (%p1880) target = $region152
        $region151: #{diffusion_transformer_forward.5} parent=83 // pred_region
          %s1884 = ssub.s32 128, 128
          %1885 = vsyncadd %s1876, %s1884
          %s1886 = smul.addr %s43, 128
          %s1887 = scalar_lea.hbm %s16, %s1886
          %s1889 = sshll.u32 %s1879, 4
          %s1890 = int_to_ptr.vmem [resolvable:$true] %s1889
          %1892 = dma.vmem_to_hbm [thread:$0]  %s1890, 128, %s1887, %s1876
        $region152: #{diffusion_transformer_forward.5} parent=83 // pred_fallthru
          _
      $region84: #{diffusion_transformer_forward.5} parent=5 // pred_fallthru
        _
      %p1893 = scmp.le.s32.totalorder 2, %s38
      // Predicated region
      $region153: #{diffusion_transformer_forward.5} parent=5 // pred_check
        %p1894 = pneg %p1893
      $region154: #{diffusion_transformer_forward.5} parent=5 // pred_check_branch
        %1896 = sbr.rel (%p1894) target = $region156
      $region155: #{diffusion_transformer_forward.5} parent=5 // pred_region
        %s1897 = ssub.s32 %s38, 2
        // Predicated region
        $region157: #{diffusion_transformer_forward.5} parent=155 // pred_check
          %p1898 = pneg %p418
        $region158: #{diffusion_transformer_forward.5} parent=155 // pred_check_branch
          %1900 = sbr.rel (%p1898) target = $region160
        $region159: #{diffusion_transformer_forward.5} parent=155 // pred_region
          %s1901 = sand.u32 %s403, 1
          %s1902 = scalar_lea.sflag [#allocation5], %s1901
          %s1903 = sand.u32 %s403, 1
          %s1904 = smul.addr %s1903, 8
          %s1905 = scalar_lea.vmem [#allocation29], %s1904
          %1906 = dma.done %s1902, 128
        $region160: #{diffusion_transformer_forward.5} parent=155 // pred_fallthru
          _
      $region156: #{diffusion_transformer_forward.5} parent=5 // pred_fallthru
        _
    $region6: #{diffusion_transformer_forward.5} parent=1 // loop_footer
      %s42 = sadd.s32 1, %s38
    $region7: #{diffusion_transformer_forward.5} parent=1 // loop_footer_branch
      %37 = sbr.rel target = $region3
    $region8: #{diffusion_transformer_forward.5} parent=1 // loop_exit
      _
    %1907 = vsyncpa [#allocation4], 1
    %s1908 = scalar_lea.sflag [#allocation4], 1
    %1909 = vsyncpa %s1908, 1
    %1910 = vsyncpa [#allocation7], 1
    %s1911 = scalar_lea.sflag [#allocation7], 1
    %1912 = vsyncpa %s1911, 1
    %1913 = vsyncpa [#allocation10], 1
    %1914 = vsyncpa [#allocation13], 1
    %1915 = vsyncpa [#allocation16], 1
    %1916 = vsyncpa [#allocation19], 1
    %1917 = vsyncpa [#allocation22], 1
    %1918 = vsyncpa [#allocation25], 1
    %1919 = vsyncpa [#allocation28], 1
    %1920 = vsyncpa [#allocation5], 1
    %s1921 = scalar_lea.sflag [#allocation5], 1
    %1922 = vsyncpa %s1921, 1

</llo_original>
